<compile_context>
chip_gen: v7x
topology: tpu7x:2x2x1
jax: 0.10.0
libtpu: 0.0.40
codegen_flags: <defaults>
</compile_context>

<pallas_src>
import math

import jax
import jax.numpy as jnp
from jax.experimental import pallas as pl
from jax.experimental.pallas import tpu as pltpu


# ----------------------------------------------------------------------------
# Fused encoder forward
# ----------------------------------------------------------------------------
def encoder_forward(x, params):
    """x: (B, T, input_size) batch_first float32.

    Returns (out, hidden): out (B, T, 2H), hidden (1, B, 2H) — same semantics
    as the PyTorch Encoder.forward."""
    B, T, D_in = x.shape
    H = params["l0_fwd"][1].shape[0]          # whh: (H, 3H)
    H2, H3 = 2 * H, 3 * H

    def encoder_kernel(x_ref,
                       wih00, whh00, bgi00, bhn00,    # layer 0, forward
                       wih01, whh01, bgi01, bhn01,    # layer 0, backward
                       wih10, whh10, bgi10, bhn10,    # layer 1, forward
                       wih11, whh11, bgi11, bhn11,    # layer 1, backward
                       fcw_ref, fcb_ref,
                       out_ref, hid_ref,
                       gi_scr, y0f, y0b, y1f, y1b):
        # All sequence data is time-major flattened: row index = t * B + b.

        def fill_gi(x_flat, wih_ref, bgi_ref):
            # Hoisted input projection for the WHOLE sequence: one big
            # gate-stacked matmul, off the sequential critical path.
            gi_scr[...] = (jnp.dot(x_flat, wih_ref[...],
                                   preferred_element_type=jnp.float32)
                           + bgi_ref[...])

        def run_recurrence(whh_ref, bhn_ref, y_scr, reverse):
            whh = whh_ref[...]                 # (H, 3H), hoisted load
            bhn = bhn_ref[...]                 # (1, H)

            def step(i, h):
                t = (T - 1 - i) if reverse else i
                row = t * B
                g = gi_scr[pl.ds(row, B), :]                       # (B, 3H)
                gh = jnp.dot(h, whh, preferred_element_type=jnp.float32)
                rz = jax.nn.sigmoid(g[:, :H2] + gh[:, :H2])
                r = rz[:, :H]
                z = rz[:, H:]
                n = jnp.tanh(g[:, H2:] + r * (gh[:, H2:] + bhn))
                h_new = (1.0 - z) * n + z * h
                y_scr[pl.ds(row, B), :] = h_new                    # time-aligned
                return h_new

            # Short, static trip count -> fully unrolled sequential loop.
            return jax.lax.fori_loop(0, T, step,
                                     jnp.zeros((B, H), jnp.float32),
                                     unroll=True)

        # ---- layer 0 (bidirectional) ----
        x_flat = x_ref[...]                                        # (T*B, D_in)
        fill_gi(x_flat, wih00, bgi00)
        h0f = run_recurrence(whh00, bhn00, y0f, reverse=False)
        fill_gi(x_flat, wih01, bgi01)
        h0b = run_recurrence(whh01, bhn01, y0b, reverse=True)

        # ---- layer 1 (bidirectional); input concat stays in VMEM ----
        x1_flat = jnp.concatenate([y0f[...], y0b[...]], axis=-1)   # (T*B, 2H)
        fill_gi(x1_flat, wih10, bgi10)
        h1f = run_recurrence(whh10, bhn10, y1f, reverse=False)
        fill_gi(x1_flat, wih11, bgi11)
        h1b = run_recurrence(whh11, bhn11, y1b, reverse=True)

        # ---- sequence output (time-major flat; wrapper restores batch-first) ----
        out_ref[...] = jnp.concatenate([y1f[...], y1b[...]],
                                       axis=-1).astype(out_ref.dtype)

        # ---- FC + tanh head: single (2B, 2H) x (2H, H) matmul on the four
        #      final hidden states, which are still resident in vregs/VMEM ----
        head_in = jnp.concatenate(
            [jnp.concatenate([h0f, h0b], axis=1),      # layer-0 fwd|bwd
             jnp.concatenate([h1f, h1b], axis=1)],     # layer-1 fwd|bwd
            axis=0)                                    # (2B, 2H)
        head = jnp.tanh(jnp.dot(head_in, fcw_ref[...],
                                preferred_element_type=jnp.float32)
                        + fcb_ref[...])                # (2B, H)
        # hidden = cat(tanh(fc(cat(h0f,h0b))), tanh(fc(cat(h1f,h1b))), dim=1)
        hid_ref[...] = jnp.concatenate([head[:B, :], head[B:, :]],
                                       axis=1).astype(hid_ref.dtype)

    # Boundary layout change (batch-first -> time-major flat) done once in XLA.
    x_tm = jnp.transpose(x, (1, 0, 2)).reshape(T * B, D_in)

    args = [x_tm]
    for name in ("l0_fwd", "l0_bwd", "l1_fwd", "l1_bwd"):
        args.extend(params[name])
    args.extend(params["fc"])

    out_flat, hidden = pl.pallas_call(
        encoder_kernel,
        out_shape=(jax.ShapeDtypeStruct((T * B, H2), jnp.float32),
                   jax.ShapeDtypeStruct((B, H2), jnp.float32)),
        in_specs=[pl.BlockSpec(memory_space=pltpu.MemorySpace.VMEM)] * len(args),
        out_specs=(pl.BlockSpec(memory_space=pltpu.MemorySpace.VMEM),
                   pl.BlockSpec(memory_space=pltpu.MemorySpace.VMEM)),
        scratch_shapes=[
            pltpu.VMEM((T * B, H3), jnp.float32),   # hoisted input projections
            pltpu.VMEM((T * B, H), jnp.float32),    # layer-0 fwd outputs
            pltpu.VMEM((T * B, H), jnp.float32),    # layer-0 bwd outputs
            pltpu.VMEM((T * B, H), jnp.float32),    # layer-1 fwd outputs
            pltpu.VMEM((T * B, H), jnp.float32),    # layer-1 bwd outputs
        ],
    )(*args)

    out = jnp.transpose(out_flat.reshape(T, B, H2), (1, 0, 2))      # (B, T, 2H)
    return out, hidden[None, :, :]                                  # (1, B, 2H)


# ----------------------------------------------------------------------------
# Parameters: gate-stacked, pre-transposed, biases pre-folded.
# Per (layer, direction):
#   wih (D_in, 3H) = [W_ir | W_iz | W_in]^T
#   whh (H,    3H) = [W_hr | W_hz | W_hn]^T   (W_hn chunk orthogonal, per init_gru)
#   bgi (1,   3H)  = [b_ir+b_hr | b_iz+b_hz | b_in]  (folded into hoisted proj.)
#   bhn (1,    H)  = b_hn                              (stays inside recurrence)
# All biases are zero under init_gru; kept general anyway.
# ----------------------------------------------------------------------------
def make_params(key, input_size, hidden_size):
    H = hidden_size
    in_dims = (input_size, 2 * H)
    keys = iter(jax.random.split(key, 16))
    params = {}
    for layer in range(2):
        D_in = in_dims[layer]
        for direction in ("fwd", "bwd"):
            b_ih = math.sqrt(3.0 / D_in)
            b_hh = math.sqrt(3.0 / H)
            wih = jax.random.uniform(next(keys), (D_in, 3 * H), jnp.float32,
                                     -b_ih, b_ih)
            whh_rz = jax.random.uniform(next(keys), (H, 2 * H), jnp.float32,
                                        -b_hh, b_hh)
            whh_n = jax.nn.initializers.orthogonal()(next(keys), (H, H),
                                                     jnp.float32)
            whh = jnp.concatenate([whh_rz, whh_n], axis=1)
            bgi = jnp.zeros((1, 3 * H), jnp.float32)
            bhn = jnp.zeros((1, H), jnp.float32)
            params[f"l{layer}_{direction}"] = (wih, whh, bgi, bhn)
    bound = math.sqrt(6.0 / (3 * H))                 # xavier_uniform on (H, 2H)
    fc_w = jax.random.uniform(next(keys), (2 * H, H), jnp.float32, -bound, bound)
    fc_b = jnp.zeros((1, H), jnp.float32)
    params["fc"] = (fc_w, fc_b)
    return params


# ----------------------------------------------------------------------------
# Pure-JAX reference (identical math) for validation.
# ----------------------------------------------------------------------------
def encoder_reference(x, params):
    B, T, _ = x.shape
    H = params["l0_fwd"][1].shape[0]
    P = jax.lax.Precision.HIGHEST

    def gru_dir(x_tm, p, reverse):
        wih, whh, bgi, bhn = p
        gi = jnp.einsum("tbd,dg->tbg", x_tm, wih, precision=P) + bgi
        gi_seq = gi[::-1] if reverse else gi

        def step(h, g):
            gh = jnp.dot(h, whh, precision=P)
            r = jax.nn.sigmoid(g[:, :H] + gh[:, :H])
            z = jax.nn.sigmoid(g[:, H:2 * H] + gh[:, H:2 * H])
            n = jnp.tanh(g[:, 2 * H:] + r * (gh[:, 2 * H:] + bhn))
            h_new = (1.0 - z) * n + z * h
            return h_new, h_new

        h_last, ys = jax.lax.scan(step, jnp.zeros((B, H), jnp.float32), gi_seq)
        if reverse:
            ys = ys[::-1]
        return ys, h_last

    x_tm = jnp.transpose(x, (1, 0, 2))
    y0f, h0f = gru_dir(x_tm, params["l0_fwd"], False)
    y0b, h0b = gru_dir(x_tm, params["l0_bwd"], True)
    x1 = jnp.concatenate([y0f, y0b], axis=-1)
    y1f, h1f = gru_dir(x1, params["l1_fwd"], False)
    y1b, h1b = gru_dir(x1, params["l1_bwd"], True)
    out = jnp.transpose(jnp.concatenate([y1f, y1b], axis=-1), (1, 0, 2))

    fc_w, fc_b = params["fc"]
    hid1 = jnp.tanh(jnp.dot(jnp.concatenate([h0f, h0b], axis=1), fc_w,
                            precision=P) + fc_b)
    hid2 = jnp.tanh(jnp.dot(jnp.concatenate([h1f, h1b], axis=1), fc_w,
                            precision=P) + fc_b)
    hidden = jnp.concatenate([hid1, hid2], axis=1)[None, :, :]
    return out, hidden


if __name__ == "__main__":
    input_size = 32
    hidden_size = 32
    B, T = 2, 8

    key = jax.random.PRNGKey(0)
    pkey, xkey = jax.random.split(key)
    params = make_params(pkey, input_size, hidden_size)
    x = jax.random.normal(xkey, (B, T, input_size), jnp.float32)

    out, hidden = jax.block_until_ready(jax.jit(encoder_forward)(x, params))

    assert out.shape == (B, T, 2 * hidden_size), out.shape
    assert hidden.shape == (1, B, 2 * hidden_size), hidden.shape
    assert bool(jnp.all(jnp.isfinite(out))) and bool(jnp.all(jnp.isfinite(hidden)))

    out_ref, hidden_ref = encoder_reference(x, params)
    # Loose tolerance absorbs MXU f32 multi-pass vs XLA HIGHEST-precision deltas;
    # structural bugs (gate order / reversal / concat) would show as O(0.1-1).
    assert jnp.allclose(out, out_ref, atol=2e-2, rtol=2e-2), \
        float(jnp.max(jnp.abs(out - out_ref)))
    assert jnp.allclose(hidden, hidden_ref, atol=2e-2, rtol=2e-2), \
        float(jnp.max(jnp.abs(hidden - hidden_ref)))

    print("KERNEL_OK")
</pallas_src>

<mosaic_0001>
module attributes {stable_mosaic.version = 11 : i64} {
  func.func @encoder_kernel(%arg0: memref<16x32xf32, #tpu.memory_space<vmem>>, %arg1: memref<32x96xf32, #tpu.memory_space<vmem>>, %arg2: memref<32x96xf32, #tpu.memory_space<vmem>>, %arg3: memref<1x96xf32, #tpu.memory_space<vmem>>, %arg4: memref<1x32xf32, #tpu.memory_space<vmem>>, %arg5: memref<32x96xf32, #tpu.memory_space<vmem>>, %arg6: memref<32x96xf32, #tpu.memory_space<vmem>>, %arg7: memref<1x96xf32, #tpu.memory_space<vmem>>, %arg8: memref<1x32xf32, #tpu.memory_space<vmem>>, %arg9: memref<64x96xf32, #tpu.memory_space<vmem>>, %arg10: memref<32x96xf32, #tpu.memory_space<vmem>>, %arg11: memref<1x96xf32, #tpu.memory_space<vmem>>, %arg12: memref<1x32xf32, #tpu.memory_space<vmem>>, %arg13: memref<64x96xf32, #tpu.memory_space<vmem>>, %arg14: memref<32x96xf32, #tpu.memory_space<vmem>>, %arg15: memref<1x96xf32, #tpu.memory_space<vmem>>, %arg16: memref<1x32xf32, #tpu.memory_space<vmem>>, %arg17: memref<64x32xf32, #tpu.memory_space<vmem>>, %arg18: memref<1x32xf32, #tpu.memory_space<vmem>>, %arg19: memref<16x64xf32, #tpu.memory_space<vmem>>, %arg20: memref<2x64xf32, #tpu.memory_space<vmem>>, %arg21: memref<16x96xf32, #tpu.memory_space<vmem>>, %arg22: memref<16x32xf32, #tpu.memory_space<vmem>>, %arg23: memref<16x32xf32, #tpu.memory_space<vmem>>, %arg24: memref<16x32xf32, #tpu.memory_space<vmem>>, %arg25: memref<16x32xf32, #tpu.memory_space<vmem>>) attributes {dimension_semantics = [], scalar_prefetch = 0 : i64, scratch_operands = 5 : i64, tpu.core_type = #tpu.core_type<tc>} {
    %c0 = arith.constant 0 : index
    %c0_0 = arith.constant 0 : index
    %0 = vector.load %arg0[%c0, %c0_0] : memref<16x32xf32, #tpu.memory_space<vmem>>, vector<16x32xf32>
    %c0_1 = arith.constant 0 : index
    %c0_2 = arith.constant 0 : index
    %1 = vector.load %arg1[%c0_1, %c0_2] : memref<32x96xf32, #tpu.memory_space<vmem>>, vector<32x96xf32>
    %cst = arith.constant dense<0.000000e+00> : vector<16x96xf32>
    %2 = tpu.matmul %0, %1, %cst {dimension_numbers = #tpu.dot_dimension_numbers<[1], [0], [0], [1], [0, 0, 1, 1], [], []>} : vector<16x32xf32>, vector<32x96xf32>, vector<16x96xf32> -> vector<16x96xf32>
    %c0_3 = arith.constant 0 : index
    %c0_4 = arith.constant 0 : index
    %3 = vector.load %arg3[%c0_3, %c0_4] : memref<1x96xf32, #tpu.memory_space<vmem>>, vector<1x96xf32>
    %4 = vector.broadcast %3 : vector<1x96xf32> to vector<16x96xf32>
    %5 = arith.addf %2, %4 : vector<16x96xf32>
    %c0_5 = arith.constant 0 : index
    %c0_6 = arith.constant 0 : index
    %6 = vector.load %arg21[%c0_5, %c0_6] : memref<16x96xf32, #tpu.memory_space<vmem>>, vector<16x96xf32>
    tpu.vector_store %arg21[%c0_5, %c0_6], %5 {strides = array<i32>} : memref<16x96xf32, #tpu.memory_space<vmem>>, vector<16x96xf32>,
    %c0_7 = arith.constant 0 : index
    %c0_8 = arith.constant 0 : index
    %7 = vector.load %arg2[%c0_7, %c0_8] : memref<32x96xf32, #tpu.memory_space<vmem>>, vector<32x96xf32>
    %c0_9 = arith.constant 0 : index
    %c0_10 = arith.constant 0 : index
    %8 = vector.load %arg4[%c0_9, %c0_10] : memref<1x32xf32, #tpu.memory_space<vmem>>, vector<1x32xf32>
    %cst_11 = arith.constant 0.000000e+00 : f32
    %9 = vector.broadcast %cst_11 : f32 to vector<2x32xf32>
    %c0_i32 = arith.constant 0 : i32
    %c2_i32 = arith.constant 2 : i32
    %10 = arith.muli %c0_i32, %c2_i32 : i32
    %11 = arith.index_cast %10 : i32 to index
    %c0_12 = arith.constant 0 : index
    %12 = vector.load %arg21[%11, %c0_12] : memref<16x96xf32, #tpu.memory_space<vmem>>, vector<2x96xf32>
    %cst_13 = arith.constant dense<0.000000e+00> : vector<2x96xf32>
    %13 = tpu.matmul %9, %7, %cst_13 {dimension_numbers = #tpu.dot_dimension_numbers<[1], [0], [0], [1], [0, 0, 1, 1], [], []>} : vector<2x32xf32>, vector<32x96xf32>, vector<2x96xf32> -> vector<2x96xf32>
    %14 = vector.extract_strided_slice %12 {offsets = [0, 0], sizes = [2, 64], strides = [1, 1]} : vector<2x96xf32> to vector<2x64xf32>
    %15 = vector.extract_strided_slice %13 {offsets = [0, 0], sizes = [2, 64], strides = [1, 1]} : vector<2x96xf32> to vector<2x64xf32>
    %16 = arith.addf %14, %15 : vector<2x64xf32>
    %17 = arith.negf %16 : vector<2x64xf32>
    %18 = math.exp %17 : vector<2x64xf32>
    %cst_14 = arith.constant 1.000000e+00 : f32
    %19 = vector.broadcast %cst_14 : f32 to vector<2x64xf32>
    %20 = arith.addf %19, %18 : vector<2x64xf32>
    %21 = arith.divf %19, %20 : vector<2x64xf32>
    %22 = vector.extract_strided_slice %21 {offsets = [0, 0], sizes = [2, 32], strides = [1, 1]} : vector<2x64xf32> to vector<2x32xf32>
    %23 = vector.extract_strided_slice %21 {offsets = [0, 32], sizes = [2, 32], strides = [1, 1]} : vector<2x64xf32> to vector<2x32xf32>
    %24 = vector.extract_strided_slice %12 {offsets = [0, 64], sizes = [2, 32], strides = [1, 1]} : vector<2x96xf32> to vector<2x32xf32>
    %25 = vector.extract_strided_slice %13 {offsets = [0, 64], sizes = [2, 32], strides = [1, 1]} : vector<2x96xf32> to vector<2x32xf32>
    %26 = vector.broadcast %8 : vector<1x32xf32> to vector<2x32xf32>
    %27 = arith.addf %25, %26 : vector<2x32xf32>
    %28 = arith.mulf %22, %27 : vector<2x32xf32>
    %29 = arith.addf %24, %28 : vector<2x32xf32>
    %30 = math.tanh %29 : vector<2x32xf32>
    %cst_15 = arith.constant 1.000000e+00 : f32
    %31 = vector.broadcast %cst_15 : f32 to vector<2x32xf32>
    %32 = arith.subf %31, %23 : vector<2x32xf32>
    %33 = arith.mulf %32, %30 : vector<2x32xf32>
    %34 = arith.mulf %23, %9 : vector<2x32xf32>
    %35 = arith.addf %33, %34 : vector<2x32xf32>
    %36 = arith.index_cast %10 : i32 to index
    %c0_16 = arith.constant 0 : index
    %37 = vector.load %arg22[%36, %c0_16] : memref<16x32xf32, #tpu.memory_space<vmem>>, vector<2x32xf32>
    tpu.vector_store %arg22[%36, %c0_16], %35 {strides = array<i32>} : memref<16x32xf32, #tpu.memory_space<vmem>>, vector<2x32xf32>,
    %c1_i32 = arith.constant 1 : i32
    %c2_i32_17 = arith.constant 2 : i32
    %38 = arith.muli %c1_i32, %c2_i32_17 : i32
    %39 = arith.index_cast %38 : i32 to index
    %c0_18 = arith.constant 0 : index
    %40 = vector.load %arg21[%39, %c0_18] : memref<16x96xf32, #tpu.memory_space<vmem>>, vector<2x96xf32>
    %cst_19 = arith.constant dense<0.000000e+00> : vector<2x96xf32>
    %41 = tpu.matmul %35, %7, %cst_19 {dimension_numbers = #tpu.dot_dimension_numbers<[1], [0], [0], [1], [0, 0, 1, 1], [], []>} : vector<2x32xf32>, vector<32x96xf32>, vector<2x96xf32> -> vector<2x96xf32>
    %42 = vector.extract_strided_slice %40 {offsets = [0, 0], sizes = [2, 64], strides = [1, 1]} : vector<2x96xf32> to vector<2x64xf32>
    %43 = vector.extract_strided_slice %41 {offsets = [0, 0], sizes = [2, 64], strides = [1, 1]} : vector<2x96xf32> to vector<2x64xf32>
    %44 = arith.addf %42, %43 : vector<2x64xf32>
    %45 = arith.negf %44 : vector<2x64xf32>
    %46 = math.exp %45 : vector<2x64xf32>
    %cst_20 = arith.constant 1.000000e+00 : f32
    %47 = vector.broadcast %cst_20 : f32 to vector<2x64xf32>
    %48 = arith.addf %47, %46 : vector<2x64xf32>
    %49 = arith.divf %47, %48 : vector<2x64xf32>
    %50 = vector.extract_strided_slice %49 {offsets = [0, 0], sizes = [2, 32], strides = [1, 1]} : vector<2x64xf32> to vector<2x32xf32>
    %51 = vector.extract_strided_slice %49 {offsets = [0, 32], sizes = [2, 32], strides = [1, 1]} : vector<2x64xf32> to vector<2x32xf32>
    %52 = vector.extract_strided_slice %40 {offsets = [0, 64], sizes = [2, 32], strides = [1, 1]} : vector<2x96xf32> to vector<2x32xf32>
    %53 = vector.extract_strided_slice %41 {offsets = [0, 64], sizes = [2, 32], strides = [1, 1]} : vector<2x96xf32> to vector<2x32xf32>
    %54 = vector.broadcast %8 : vector<1x32xf32> to vector<2x32xf32>
    %55 = arith.addf %53, %54 : vector<2x32xf32>
    %56 = arith.mulf %50, %55 : vector<2x32xf32>
    %57 = arith.addf %52, %56 : vector<2x32xf32>
    %58 = math.tanh %57 : vector<2x32xf32>
    %cst_21 = arith.constant 1.000000e+00 : f32
    %59 = vector.broadcast %cst_21 : f32 to vector<2x32xf32>
    %60 = arith.subf %59, %51 : vector<2x32xf32>
    %61 = arith.mulf %60, %58 : vector<2x32xf32>
    %62 = arith.mulf %51, %35 : vector<2x32xf32>
    %63 = arith.addf %61, %62 : vector<2x32xf32>
    %64 = arith.index_cast %38 : i32 to index
    %c0_22 = arith.constant 0 : index
    %65 = vector.load %arg22[%64, %c0_22] : memref<16x32xf32, #tpu.memory_space<vmem>>, vector<2x32xf32>
    tpu.vector_store %arg22[%64, %c0_22], %63 {strides = array<i32>} : memref<16x32xf32, #tpu.memory_space<vmem>>, vector<2x32xf32>,
    %c2_i32_23 = arith.constant 2 : i32
    %c2_i32_24 = arith.constant 2 : i32
    %66 = arith.muli %c2_i32_23, %c2_i32_24 : i32
    %67 = arith.index_cast %66 : i32 to index
    %c0_25 = arith.constant 0 : index
    %68 = vector.load %arg21[%67, %c0_25] : memref<16x96xf32, #tpu.memory_space<vmem>>, vector<2x96xf32>
    %cst_26 = arith.constant dense<0.000000e+00> : vector<2x96xf32>
    %69 = tpu.matmul %63, %7, %cst_26 {dimension_numbers = #tpu.dot_dimension_numbers<[1], [0], [0], [1], [0, 0, 1, 1], [], []>} : vector<2x32xf32>, vector<32x96xf32>, vector<2x96xf32> -> vector<2x96xf32>
    %70 = vector.extract_strided_slice %68 {offsets = [0, 0], sizes = [2, 64], strides = [1, 1]} : vector<2x96xf32> to vector<2x64xf32>
    %71 = vector.extract_strided_slice %69 {offsets = [0, 0], sizes = [2, 64], strides = [1, 1]} : vector<2x96xf32> to vector<2x64xf32>
    %72 = arith.addf %70, %71 : vector<2x64xf32>
    %73 = arith.negf %72 : vector<2x64xf32>
    %74 = math.exp %73 : vector<2x64xf32>
    %cst_27 = arith.constant 1.000000e+00 : f32
    %75 = vector.broadcast %cst_27 : f32 to vector<2x64xf32>
    %76 = arith.addf %75, %74 : vector<2x64xf32>
    %77 = arith.divf %75, %76 : vector<2x64xf32>
    %78 = vector.extract_strided_slice %77 {offsets = [0, 0], sizes = [2, 32], strides = [1, 1]} : vector<2x64xf32> to vector<2x32xf32>
    %79 = vector.extract_strided_slice %77 {offsets = [0, 32], sizes = [2, 32], strides = [1, 1]} : vector<2x64xf32> to vector<2x32xf32>
    %80 = vector.extract_strided_slice %68 {offsets = [0, 64], sizes = [2, 32], strides = [1, 1]} : vector<2x96xf32> to vector<2x32xf32>
    %81 = vector.extract_strided_slice %69 {offsets = [0, 64], sizes = [2, 32], strides = [1, 1]} : vector<2x96xf32> to vector<2x32xf32>
    %82 = vector.broadcast %8 : vector<1x32xf32> to vector<2x32xf32>
    %83 = arith.addf %81, %82 : vector<2x32xf32>
    %84 = arith.mulf %78, %83 : vector<2x32xf32>
    %85 = arith.addf %80, %84 : vector<2x32xf32>
    %86 = math.tanh %85 : vector<2x32xf32>
    %cst_28 = arith.constant 1.000000e+00 : f32
    %87 = vector.broadcast %cst_28 : f32 to vector<2x32xf32>
    %88 = arith.subf %87, %79 : vector<2x32xf32>
    %89 = arith.mulf %88, %86 : vector<2x32xf32>
    %90 = arith.mulf %79, %63 : vector<2x32xf32>
    %91 = arith.addf %89, %90 : vector<2x32xf32>
    %92 = arith.index_cast %66 : i32 to index
    %c0_29 = arith.constant 0 : index
    %93 = vector.load %arg22[%92, %c0_29] : memref<16x32xf32, #tpu.memory_space<vmem>>, vector<2x32xf32>
    tpu.vector_store %arg22[%92, %c0_29], %91 {strides = array<i32>} : memref<16x32xf32, #tpu.memory_space<vmem>>, vector<2x32xf32>,
    %c3_i32 = arith.constant 3 : i32
    %c2_i32_30 = arith.constant 2 : i32
    %94 = arith.muli %c3_i32, %c2_i32_30 : i32
    %95 = arith.index_cast %94 : i32 to index
    %c0_31 = arith.constant 0 : index
    %96 = vector.load %arg21[%95, %c0_31] : memref<16x96xf32, #tpu.memory_space<vmem>>, vector<2x96xf32>
    %cst_32 = arith.constant dense<0.000000e+00> : vector<2x96xf32>
    %97 = tpu.matmul %91, %7, %cst_32 {dimension_numbers = #tpu.dot_dimension_numbers<[1], [0], [0], [1], [0, 0, 1, 1], [], []>} : vector<2x32xf32>, vector<32x96xf32>, vector<2x96xf32> -> vector<2x96xf32>
    %98 = vector.extract_strided_slice %96 {offsets = [0, 0], sizes = [2, 64], strides = [1, 1]} : vector<2x96xf32> to vector<2x64xf32>
    %99 = vector.extract_strided_slice %97 {offsets = [0, 0], sizes = [2, 64], strides = [1, 1]} : vector<2x96xf32> to vector<2x64xf32>
    %100 = arith.addf %98, %99 : vector<2x64xf32>
    %101 = arith.negf %100 : vector<2x64xf32>
    %102 = math.exp %101 : vector<2x64xf32>
    %cst_33 = arith.constant 1.000000e+00 : f32
    %103 = vector.broadcast %cst_33 : f32 to vector<2x64xf32>
    %104 = arith.addf %103, %102 : vector<2x64xf32>
    %105 = arith.divf %103, %104 : vector<2x64xf32>
    %106 = vector.extract_strided_slice %105 {offsets = [0, 0], sizes = [2, 32], strides = [1, 1]} : vector<2x64xf32> to vector<2x32xf32>
    %107 = vector.extract_strided_slice %105 {offsets = [0, 32], sizes = [2, 32], strides = [1, 1]} : vector<2x64xf32> to vector<2x32xf32>
    %108 = vector.extract_strided_slice %96 {offsets = [0, 64], sizes = [2, 32], strides = [1, 1]} : vector<2x96xf32> to vector<2x32xf32>
    %109 = vector.extract_strided_slice %97 {offsets = [0, 64], sizes = [2, 32], strides = [1, 1]} : vector<2x96xf32> to vector<2x32xf32>
    %110 = vector.broadcast %8 : vector<1x32xf32> to vector<2x32xf32>
    %111 = arith.addf %109, %110 : vector<2x32xf32>
    %112 = arith.mulf %106, %111 : vector<2x32xf32>
    %113 = arith.addf %108, %112 : vector<2x32xf32>
    %114 = math.tanh %113 : vector<2x32xf32>
    %cst_34 = arith.constant 1.000000e+00 : f32
    %115 = vector.broadcast %cst_34 : f32 to vector<2x32xf32>
    %116 = arith.subf %115, %107 : vector<2x32xf32>
    %117 = arith.mulf %116, %114 : vector<2x32xf32>
    %118 = arith.mulf %107, %91 : vector<2x32xf32>
    %119 = arith.addf %117, %118 : vector<2x32xf32>
    %120 = arith.index_cast %94 : i32 to index
    %c0_35 = arith.constant 0 : index
    %121 = vector.load %arg22[%120, %c0_35] : memref<16x32xf32, #tpu.memory_space<vmem>>, vector<2x32xf32>
    tpu.vector_store %arg22[%120, %c0_35], %119 {strides = array<i32>} : memref<16x32xf32, #tpu.memory_space<vmem>>, vector<2x32xf32>,
    %c4_i32 = arith.constant 4 : i32
    %c2_i32_36 = arith.constant 2 : i32
    %122 = arith.muli %c4_i32, %c2_i32_36 : i32
    %123 = arith.index_cast %122 : i32 to index
    %c0_37 = arith.constant 0 : index
    %124 = vector.load %arg21[%123, %c0_37] : memref<16x96xf32, #tpu.memory_space<vmem>>, vector<2x96xf32>
    %cst_38 = arith.constant dense<0.000000e+00> : vector<2x96xf32>
    %125 = tpu.matmul %119, %7, %cst_38 {dimension_numbers = #tpu.dot_dimension_numbers<[1], [0], [0], [1], [0, 0, 1, 1], [], []>} : vector<2x32xf32>, vector<32x96xf32>, vector<2x96xf32> -> vector<2x96xf32>
    %126 = vector.extract_strided_slice %124 {offsets = [0, 0], sizes = [2, 64], strides = [1, 1]} : vector<2x96xf32> to vector<2x64xf32>
    %127 = vector.extract_strided_slice %125 {offsets = [0, 0], sizes = [2, 64], strides = [1, 1]} : vector<2x96xf32> to vector<2x64xf32>
    %128 = arith.addf %126, %127 : vector<2x64xf32>
    %129 = arith.negf %128 : vector<2x64xf32>
    %130 = math.exp %129 : vector<2x64xf32>
    %cst_39 = arith.constant 1.000000e+00 : f32
    %131 = vector.broadcast %cst_39 : f32 to vector<2x64xf32>
    %132 = arith.addf %131, %130 : vector<2x64xf32>
    %133 = arith.divf %131, %132 : vector<2x64xf32>
    %134 = vector.extract_strided_slice %133 {offsets = [0, 0], sizes = [2, 32], strides = [1, 1]} : vector<2x64xf32> to vector<2x32xf32>
    %135 = vector.extract_strided_slice %133 {offsets = [0, 32], sizes = [2, 32], strides = [1, 1]} : vector<2x64xf32> to vector<2x32xf32>
    %136 = vector.extract_strided_slice %124 {offsets = [0, 64], sizes = [2, 32], strides = [1, 1]} : vector<2x96xf32> to vector<2x32xf32>
    %137 = vector.extract_strided_slice %125 {offsets = [0, 64], sizes = [2, 32], strides = [1, 1]} : vector<2x96xf32> to vector<2x32xf32>
    %138 = vector.broadcast %8 : vector<1x32xf32> to vector<2x32xf32>
    %139 = arith.addf %137, %138 : vector<2x32xf32>
    %140 = arith.mulf %134, %139 : vector<2x32xf32>
    %141 = arith.addf %136, %140 : vector<2x32xf32>
    %142 = math.tanh %141 : vector<2x32xf32>
    %cst_40 = arith.constant 1.000000e+00 : f32
    %143 = vector.broadcast %cst_40 : f32 to vector<2x32xf32>
    %144 = arith.subf %143, %135 : vector<2x32xf32>
    %145 = arith.mulf %144, %142 : vector<2x32xf32>
    %146 = arith.mulf %135, %119 : vector<2x32xf32>
    %147 = arith.addf %145, %146 : vector<2x32xf32>
    %148 = arith.index_cast %122 : i32 to index
    %c0_41 = arith.constant 0 : index
    %149 = vector.load %arg22[%148, %c0_41] : memref<16x32xf32, #tpu.memory_space<vmem>>, vector<2x32xf32>
    tpu.vector_store %arg22[%148, %c0_41], %147 {strides = array<i32>} : memref<16x32xf32, #tpu.memory_space<vmem>>, vector<2x32xf32>,
    %c5_i32 = arith.constant 5 : i32
    %c2_i32_42 = arith.constant 2 : i32
    %150 = arith.muli %c5_i32, %c2_i32_42 : i32
    %151 = arith.index_cast %150 : i32 to index
    %c0_43 = arith.constant 0 : index
    %152 = vector.load %arg21[%151, %c0_43] : memref<16x96xf32, #tpu.memory_space<vmem>>, vector<2x96xf32>
    %cst_44 = arith.constant dense<0.000000e+00> : vector<2x96xf32>
    %153 = tpu.matmul %147, %7, %cst_44 {dimension_numbers = #tpu.dot_dimension_numbers<[1], [0], [0], [1], [0, 0, 1, 1], [], []>} : vector<2x32xf32>, vector<32x96xf32>, vector<2x96xf32> -> vector<2x96xf32>
    %154 = vector.extract_strided_slice %152 {offsets = [0, 0], sizes = [2, 64], strides = [1, 1]} : vector<2x96xf32> to vector<2x64xf32>
    %155 = vector.extract_strided_slice %153 {offsets = [0, 0], sizes = [2, 64], strides = [1, 1]} : vector<2x96xf32> to vector<2x64xf32>
    %156 = arith.addf %154, %155 : vector<2x64xf32>
    %157 = arith.negf %156 : vector<2x64xf32>
    %158 = math.exp %157 : vector<2x64xf32>
    %cst_45 = arith.constant 1.000000e+00 : f32
    %159 = vector.broadcast %cst_45 : f32 to vector<2x64xf32>
    %160 = arith.addf %159, %158 : vector<2x64xf32>
    %161 = arith.divf %159, %160 : vector<2x64xf32>
    %162 = vector.extract_strided_slice %161 {offsets = [0, 0], sizes = [2, 32], strides = [1, 1]} : vector<2x64xf32> to vector<2x32xf32>
    %163 = vector.extract_strided_slice %161 {offsets = [0, 32], sizes = [2, 32], strides = [1, 1]} : vector<2x64xf32> to vector<2x32xf32>
    %164 = vector.extract_strided_slice %152 {offsets = [0, 64], sizes = [2, 32], strides = [1, 1]} : vector<2x96xf32> to vector<2x32xf32>
    %165 = vector.extract_strided_slice %153 {offsets = [0, 64], sizes = [2, 32], strides = [1, 1]} : vector<2x96xf32> to vector<2x32xf32>
    %166 = vector.broadcast %8 : vector<1x32xf32> to vector<2x32xf32>
    %167 = arith.addf %165, %166 : vector<2x32xf32>
    %168 = arith.mulf %162, %167 : vector<2x32xf32>
    %169 = arith.addf %164, %168 : vector<2x32xf32>
    %170 = math.tanh %169 : vector<2x32xf32>
    %cst_46 = arith.constant 1.000000e+00 : f32
    %171 = vector.broadcast %cst_46 : f32 to vector<2x32xf32>
    %172 = arith.subf %171, %163 : vector<2x32xf32>
    %173 = arith.mulf %172, %170 : vector<2x32xf32>
    %174 = arith.mulf %163, %147 : vector<2x32xf32>
    %175 = arith.addf %173, %174 : vector<2x32xf32>
    %176 = arith.index_cast %150 : i32 to index
    %c0_47 = arith.constant 0 : index
    %177 = vector.load %arg22[%176, %c0_47] : memref<16x32xf32, #tpu.memory_space<vmem>>, vector<2x32xf32>
    tpu.vector_store %arg22[%176, %c0_47], %175 {strides = array<i32>} : memref<16x32xf32, #tpu.memory_space<vmem>>, vector<2x32xf32>,
    %c6_i32 = arith.constant 6 : i32
    %c2_i32_48 = arith.constant 2 : i32
    %178 = arith.muli %c6_i32, %c2_i32_48 : i32
    %179 = arith.index_cast %178 : i32 to index
    %c0_49 = arith.constant 0 : index
    %180 = vector.load %arg21[%179, %c0_49] : memref<16x96xf32, #tpu.memory_space<vmem>>, vector<2x96xf32>
    %cst_50 = arith.constant dense<0.000000e+00> : vector<2x96xf32>
    %181 = tpu.matmul %175, %7, %cst_50 {dimension_numbers = #tpu.dot_dimension_numbers<[1], [0], [0], [1], [0, 0, 1, 1], [], []>} : vector<2x32xf32>, vector<32x96xf32>, vector<2x96xf32> -> vector<2x96xf32>
    %182 = vector.extract_strided_slice %180 {offsets = [0, 0], sizes = [2, 64], strides = [1, 1]} : vector<2x96xf32> to vector<2x64xf32>
    %183 = vector.extract_strided_slice %181 {offsets = [0, 0], sizes = [2, 64], strides = [1, 1]} : vector<2x96xf32> to vector<2x64xf32>
    %184 = arith.addf %182, %183 : vector<2x64xf32>
    %185 = arith.negf %184 : vector<2x64xf32>
    %186 = math.exp %185 : vector<2x64xf32>
    %cst_51 = arith.constant 1.000000e+00 : f32
    %187 = vector.broadcast %cst_51 : f32 to vector<2x64xf32>
    %188 = arith.addf %187, %186 : vector<2x64xf32>
    %189 = arith.divf %187, %188 : vector<2x64xf32>
    %190 = vector.extract_strided_slice %189 {offsets = [0, 0], sizes = [2, 32], strides = [1, 1]} : vector<2x64xf32> to vector<2x32xf32>
    %191 = vector.extract_strided_slice %189 {offsets = [0, 32], sizes = [2, 32], strides = [1, 1]} : vector<2x64xf32> to vector<2x32xf32>
    %192 = vector.extract_strided_slice %180 {offsets = [0, 64], sizes = [2, 32], strides = [1, 1]} : vector<2x96xf32> to vector<2x32xf32>
    %193 = vector.extract_strided_slice %181 {offsets = [0, 64], sizes = [2, 32], strides = [1, 1]} : vector<2x96xf32> to vector<2x32xf32>
    %194 = vector.broadcast %8 : vector<1x32xf32> to vector<2x32xf32>
    %195 = arith.addf %193, %194 : vector<2x32xf32>
    %196 = arith.mulf %190, %195 : vector<2x32xf32>
    %197 = arith.addf %192, %196 : vector<2x32xf32>
    %198 = math.tanh %197 : vector<2x32xf32>
    %cst_52 = arith.constant 1.000000e+00 : f32
    %199 = vector.broadcast %cst_52 : f32 to vector<2x32xf32>
    %200 = arith.subf %199, %191 : vector<2x32xf32>
    %201 = arith.mulf %200, %198 : vector<2x32xf32>
    %202 = arith.mulf %191, %175 : vector<2x32xf32>
    %203 = arith.addf %201, %202 : vector<2x32xf32>
    %204 = arith.index_cast %178 : i32 to index
    %c0_53 = arith.constant 0 : index
    %205 = vector.load %arg22[%204, %c0_53] : memref<16x32xf32, #tpu.memory_space<vmem>>, vector<2x32xf32>
    tpu.vector_store %arg22[%204, %c0_53], %203 {strides = array<i32>} : memref<16x32xf32, #tpu.memory_space<vmem>>, vector<2x32xf32>,
    %c7_i32 = arith.constant 7 : i32
    %c2_i32_54 = arith.constant 2 : i32
    %206 = arith.muli %c7_i32, %c2_i32_54 : i32
    %207 = arith.index_cast %206 : i32 to index
    %c0_55 = arith.constant 0 : index
    %208 = vector.load %arg21[%207, %c0_55] : memref<16x96xf32, #tpu.memory_space<vmem>>, vector<2x96xf32>
    %cst_56 = arith.constant dense<0.000000e+00> : vector<2x96xf32>
    %209 = tpu.matmul %203, %7, %cst_56 {dimension_numbers = #tpu.dot_dimension_numbers<[1], [0], [0], [1], [0, 0, 1, 1], [], []>} : vector<2x32xf32>, vector<32x96xf32>, vector<2x96xf32> -> vector<2x96xf32>
    %210 = vector.extract_strided_slice %208 {offsets = [0, 0], sizes = [2, 64], strides = [1, 1]} : vector<2x96xf32> to vector<2x64xf32>
    %211 = vector.extract_strided_slice %209 {offsets = [0, 0], sizes = [2, 64], strides = [1, 1]} : vector<2x96xf32> to vector<2x64xf32>
    %212 = arith.addf %210, %211 : vector<2x64xf32>
    %213 = arith.negf %212 : vector<2x64xf32>
    %214 = math.exp %213 : vector<2x64xf32>
    %cst_57 = arith.constant 1.000000e+00 : f32
    %215 = vector.broadcast %cst_57 : f32 to vector<2x64xf32>
    %216 = arith.addf %215, %214 : vector<2x64xf32>
    %217 = arith.divf %215, %216 : vector<2x64xf32>
    %218 = vector.extract_strided_slice %217 {offsets = [0, 0], sizes = [2, 32], strides = [1, 1]} : vector<2x64xf32> to vector<2x32xf32>
    %219 = vector.extract_strided_slice %217 {offsets = [0, 32], sizes = [2, 32], strides = [1, 1]} : vector<2x64xf32> to vector<2x32xf32>
    %220 = vector.extract_strided_slice %208 {offsets = [0, 64], sizes = [2, 32], strides = [1, 1]} : vector<2x96xf32> to vector<2x32xf32>
    %221 = vector.extract_strided_slice %209 {offsets = [0, 64], sizes = [2, 32], strides = [1, 1]} : vector<2x96xf32> to vector<2x32xf32>
    %222 = vector.broadcast %8 : vector<1x32xf32> to vector<2x32xf32>
    %223 = arith.addf %221, %222 : vector<2x32xf32>
    %224 = arith.mulf %218, %223 : vector<2x32xf32>
    %225 = arith.addf %220, %224 : vector<2x32xf32>
    %226 = math.tanh %225 : vector<2x32xf32>
    %cst_58 = arith.constant 1.000000e+00 : f32
    %227 = vector.broadcast %cst_58 : f32 to vector<2x32xf32>
    %228 = arith.subf %227, %219 : vector<2x32xf32>
    %229 = arith.mulf %228, %226 : vector<2x32xf32>
    %230 = arith.mulf %219, %203 : vector<2x32xf32>
    %231 = arith.addf %229, %230 : vector<2x32xf32>
    %232 = arith.index_cast %206 : i32 to index
    %c0_59 = arith.constant 0 : index
    %233 = vector.load %arg22[%232, %c0_59] : memref<16x32xf32, #tpu.memory_space<vmem>>, vector<2x32xf32>
    tpu.vector_store %arg22[%232, %c0_59], %231 {strides = array<i32>} : memref<16x32xf32, #tpu.memory_space<vmem>>, vector<2x32xf32>,
    %c8_i32 = arith.constant 8 : i32
    %c0_60 = arith.constant 0 : index
    %c0_61 = arith.constant 0 : index
    %234 = vector.load %arg5[%c0_60, %c0_61] : memref<32x96xf32, #tpu.memory_space<vmem>>, vector<32x96xf32>
    %cst_62 = arith.constant dense<0.000000e+00> : vector<16x96xf32>
    %235 = tpu.matmul %0, %234, %cst_62 {dimension_numbers = #tpu.dot_dimension_numbers<[1], [0], [0], [1], [0, 0, 1, 1], [], []>} : vector<16x32xf32>, vector<32x96xf32>, vector<16x96xf32> -> vector<16x96xf32>
    %c0_63 = arith.constant 0 : index
    %c0_64 = arith.constant 0 : index
    %236 = vector.load %arg7[%c0_63, %c0_64] : memref<1x96xf32, #tpu.memory_space<vmem>>, vector<1x96xf32>
    %237 = vector.broadcast %236 : vector<1x96xf32> to vector<16x96xf32>
    %238 = arith.addf %235, %237 : vector<16x96xf32>
    %c0_65 = arith.constant 0 : index
    %c0_66 = arith.constant 0 : index
    %239 = vector.load %arg21[%c0_65, %c0_66] : memref<16x96xf32, #tpu.memory_space<vmem>>, vector<16x96xf32>
    tpu.vector_store %arg21[%c0_65, %c0_66], %238 {strides = array<i32>} : memref<16x96xf32, #tpu.memory_space<vmem>>, vector<16x96xf32>,
    %c0_67 = arith.constant 0 : index
    %c0_68 = arith.constant 0 : index
    %240 = vector.load %arg6[%c0_67, %c0_68] : memref<32x96xf32, #tpu.memory_space<vmem>>, vector<32x96xf32>
    %c0_69 = arith.constant 0 : index
    %c0_70 = arith.constant 0 : index
    %241 = vector.load %arg8[%c0_69, %c0_70] : memref<1x32xf32, #tpu.memory_space<vmem>>, vector<1x32xf32>
    %cst_71 = arith.constant 0.000000e+00 : f32
    %242 = vector.broadcast %cst_71 : f32 to vector<2x32xf32>
    %c0_i32_72 = arith.constant 0 : i32
    %c7_i32_73 = arith.constant 7 : i32
    %243 = arith.subi %c7_i32_73, %c0_i32_72 : i32
    %c2_i32_74 = arith.constant 2 : i32
    %244 = arith.muli %243, %c2_i32_74 : i32
    %245 = arith.index_cast %244 : i32 to index
    %c0_75 = arith.constant 0 : index
    %246 = vector.load %arg21[%245, %c0_75] : memref<16x96xf32, #tpu.memory_space<vmem>>, vector<2x96xf32>
    %cst_76 = arith.constant dense<0.000000e+00> : vector<2x96xf32>
    %247 = tpu.matmul %242, %240, %cst_76 {dimension_numbers = #tpu.dot_dimension_numbers<[1], [0], [0], [1], [0, 0, 1, 1], [], []>} : vector<2x32xf32>, vector<32x96xf32>, vector<2x96xf32> -> vector<2x96xf32>
    %248 = vector.extract_strided_slice %246 {offsets = [0, 0], sizes = [2, 64], strides = [1, 1]} : vector<2x96xf32> to vector<2x64xf32>
    %249 = vector.extract_strided_slice %247 {offsets = [0, 0], sizes = [2, 64], strides = [1, 1]} : vector<2x96xf32> to vector<2x64xf32>
    %250 = arith.addf %248, %249 : vector<2x64xf32>
    %251 = arith.negf %250 : vector<2x64xf32>
    %252 = math.exp %251 : vector<2x64xf32>
    %cst_77 = arith.constant 1.000000e+00 : f32
    %253 = vector.broadcast %cst_77 : f32 to vector<2x64xf32>
    %254 = arith.addf %253, %252 : vector<2x64xf32>
    %255 = arith.divf %253, %254 : vector<2x64xf32>
    %256 = vector.extract_strided_slice %255 {offsets = [0, 0], sizes = [2, 32], strides = [1, 1]} : vector<2x64xf32> to vector<2x32xf32>
    %257 = vector.extract_strided_slice %255 {offsets = [0, 32], sizes = [2, 32], strides = [1, 1]} : vector<2x64xf32> to vector<2x32xf32>
    %258 = vector.extract_strided_slice %246 {offsets = [0, 64], sizes = [2, 32], strides = [1, 1]} : vector<2x96xf32> to vector<2x32xf32>
    %259 = vector.extract_strided_slice %247 {offsets = [0, 64], sizes = [2, 32], strides = [1, 1]} : vector<2x96xf32> to vector<2x32xf32>
    %260 = vector.broadcast %241 : vector<1x32xf32> to vector<2x32xf32>
    %261 = arith.addf %259, %260 : vector<2x32xf32>
    %262 = arith.mulf %256, %261 : vector<2x32xf32>
    %263 = arith.addf %258, %262 : vector<2x32xf32>
    %264 = math.tanh %263 : vector<2x32xf32>
    %cst_78 = arith.constant 1.000000e+00 : f32
    %265 = vector.broadcast %cst_78 : f32 to vector<2x32xf32>
    %266 = arith.subf %265, %257 : vector<2x32xf32>
    %267 = arith.mulf %266, %264 : vector<2x32xf32>
    %268 = arith.mulf %257, %242 : vector<2x32xf32>
    %269 = arith.addf %267, %268 : vector<2x32xf32>
    %270 = arith.index_cast %244 : i32 to index
    %c0_79 = arith.constant 0 : index
    %271 = vector.load %arg23[%270, %c0_79] : memref<16x32xf32, #tpu.memory_space<vmem>>, vector<2x32xf32>
    tpu.vector_store %arg23[%270, %c0_79], %269 {strides = array<i32>} : memref<16x32xf32, #tpu.memory_space<vmem>>, vector<2x32xf32>,
    %c1_i32_80 = arith.constant 1 : i32
    %c7_i32_81 = arith.constant 7 : i32
    %272 = arith.subi %c7_i32_81, %c1_i32_80 : i32
    %c2_i32_82 = arith.constant 2 : i32
    %273 = arith.muli %272, %c2_i32_82 : i32
    %274 = arith.index_cast %273 : i32 to index
    %c0_83 = arith.constant 0 : index
    %275 = vector.load %arg21[%274, %c0_83] : memref<16x96xf32, #tpu.memory_space<vmem>>, vector<2x96xf32>
    %cst_84 = arith.constant dense<0.000000e+00> : vector<2x96xf32>
    %276 = tpu.matmul %269, %240, %cst_84 {dimension_numbers = #tpu.dot_dimension_numbers<[1], [0], [0], [1], [0, 0, 1, 1], [], []>} : vector<2x32xf32>, vector<32x96xf32>, vector<2x96xf32> -> vector<2x96xf32>
    %277 = vector.extract_strided_slice %275 {offsets = [0, 0], sizes = [2, 64], strides = [1, 1]} : vector<2x96xf32> to vector<2x64xf32>
    %278 = vector.extract_strided_slice %276 {offsets = [0, 0], sizes = [2, 64], strides = [1, 1]} : vector<2x96xf32> to vector<2x64xf32>
    %279 = arith.addf %277, %278 : vector<2x64xf32>
    %280 = arith.negf %279 : vector<2x64xf32>
    %281 = math.exp %280 : vector<2x64xf32>
    %cst_85 = arith.constant 1.000000e+00 : f32
    %282 = vector.broadcast %cst_85 : f32 to vector<2x64xf32>
    %283 = arith.addf %282, %281 : vector<2x64xf32>
    %284 = arith.divf %282, %283 : vector<2x64xf32>
    %285 = vector.extract_strided_slice %284 {offsets = [0, 0], sizes = [2, 32], strides = [1, 1]} : vector<2x64xf32> to vector<2x32xf32>
    %286 = vector.extract_strided_slice %284 {offsets = [0, 32], sizes = [2, 32], strides = [1, 1]} : vector<2x64xf32> to vector<2x32xf32>
    %287 = vector.extract_strided_slice %275 {offsets = [0, 64], sizes = [2, 32], strides = [1, 1]} : vector<2x96xf32> to vector<2x32xf32>
    %288 = vector.extract_strided_slice %276 {offsets = [0, 64], sizes = [2, 32], strides = [1, 1]} : vector<2x96xf32> to vector<2x32xf32>
    %289 = vector.broadcast %241 : vector<1x32xf32> to vector<2x32xf32>
    %290 = arith.addf %288, %289 : vector<2x32xf32>
    %291 = arith.mulf %285, %290 : vector<2x32xf32>
    %292 = arith.addf %287, %291 : vector<2x32xf32>
    %293 = math.tanh %292 : vector<2x32xf32>
    %cst_86 = arith.constant 1.000000e+00 : f32
    %294 = vector.broadcast %cst_86 : f32 to vector<2x32xf32>
    %295 = arith.subf %294, %286 : vector<2x32xf32>
    %296 = arith.mulf %295, %293 : vector<2x32xf32>
    %297 = arith.mulf %286, %269 : vector<2x32xf32>
    %298 = arith.addf %296, %297 : vector<2x32xf32>
    %299 = arith.index_cast %273 : i32 to index
    %c0_87 = arith.constant 0 : index
    %300 = vector.load %arg23[%299, %c0_87] : memref<16x32xf32, #tpu.memory_space<vmem>>, vector<2x32xf32>
    tpu.vector_store %arg23[%299, %c0_87], %298 {strides = array<i32>} : memref<16x32xf32, #tpu.memory_space<vmem>>, vector<2x32xf32>,
    %c2_i32_88 = arith.constant 2 : i32
    %c7_i32_89 = arith.constant 7 : i32
    %301 = arith.subi %c7_i32_89, %c2_i32_88 : i32
    %c2_i32_90 = arith.constant 2 : i32
    %302 = arith.muli %301, %c2_i32_90 : i32
    %303 = arith.index_cast %302 : i32 to index
    %c0_91 = arith.constant 0 : index
    %304 = vector.load %arg21[%303, %c0_91] : memref<16x96xf32, #tpu.memory_space<vmem>>, vector<2x96xf32>
    %cst_92 = arith.constant dense<0.000000e+00> : vector<2x96xf32>
    %305 = tpu.matmul %298, %240, %cst_92 {dimension_numbers = #tpu.dot_dimension_numbers<[1], [0], [0], [1], [0, 0, 1, 1], [], []>} : vector<2x32xf32>, vector<32x96xf32>, vector<2x96xf32> -> vector<2x96xf32>
    %306 = vector.extract_strided_slice %304 {offsets = [0, 0], sizes = [2, 64], strides = [1, 1]} : vector<2x96xf32> to vector<2x64xf32>
    %307 = vector.extract_strided_slice %305 {offsets = [0, 0], sizes = [2, 64], strides = [1, 1]} : vector<2x96xf32> to vector<2x64xf32>
    %308 = arith.addf %306, %307 : vector<2x64xf32>
    %309 = arith.negf %308 : vector<2x64xf32>
    %310 = math.exp %309 : vector<2x64xf32>
    %cst_93 = arith.constant 1.000000e+00 : f32
    %311 = vector.broadcast %cst_93 : f32 to vector<2x64xf32>
    %312 = arith.addf %311, %310 : vector<2x64xf32>
    %313 = arith.divf %311, %312 : vector<2x64xf32>
    %314 = vector.extract_strided_slice %313 {offsets = [0, 0], sizes = [2, 32], strides = [1, 1]} : vector<2x64xf32> to vector<2x32xf32>
    %315 = vector.extract_strided_slice %313 {offsets = [0, 32], sizes = [2, 32], strides = [1, 1]} : vector<2x64xf32> to vector<2x32xf32>
    %316 = vector.extract_strided_slice %304 {offsets = [0, 64], sizes = [2, 32], strides = [1, 1]} : vector<2x96xf32> to vector<2x32xf32>
    %317 = vector.extract_strided_slice %305 {offsets = [0, 64], sizes = [2, 32], strides = [1, 1]} : vector<2x96xf32> to vector<2x32xf32>
    %318 = vector.broadcast %241 : vector<1x32xf32> to vector<2x32xf32>
    %319 = arith.addf %317, %318 : vector<2x32xf32>
    %320 = arith.mulf %314, %319 : vector<2x32xf32>
    %321 = arith.addf %316, %320 : vector<2x32xf32>
    %322 = math.tanh %321 : vector<2x32xf32>
    %cst_94 = arith.constant 1.000000e+00 : f32
    %323 = vector.broadcast %cst_94 : f32 to vector<2x32xf32>
    %324 = arith.subf %323, %315 : vector<2x32xf32>
    %325 = arith.mulf %324, %322 : vector<2x32xf32>
    %326 = arith.mulf %315, %298 : vector<2x32xf32>
    %327 = arith.addf %325, %326 : vector<2x32xf32>
    %328 = arith.index_cast %302 : i32 to index
    %c0_95 = arith.constant 0 : index
    %329 = vector.load %arg23[%328, %c0_95] : memref<16x32xf32, #tpu.memory_space<vmem>>, vector<2x32xf32>
    tpu.vector_store %arg23[%328, %c0_95], %327 {strides = array<i32>} : memref<16x32xf32, #tpu.memory_space<vmem>>, vector<2x32xf32>,
    %c3_i32_96 = arith.constant 3 : i32
    %c7_i32_97 = arith.constant 7 : i32
    %330 = arith.subi %c7_i32_97, %c3_i32_96 : i32
    %c2_i32_98 = arith.constant 2 : i32
    %331 = arith.muli %330, %c2_i32_98 : i32
    %332 = arith.index_cast %331 : i32 to index
    %c0_99 = arith.constant 0 : index
    %333 = vector.load %arg21[%332, %c0_99] : memref<16x96xf32, #tpu.memory_space<vmem>>, vector<2x96xf32>
    %cst_100 = arith.constant dense<0.000000e+00> : vector<2x96xf32>
    %334 = tpu.matmul %327, %240, %cst_100 {dimension_numbers = #tpu.dot_dimension_numbers<[1], [0], [0], [1], [0, 0, 1, 1], [], []>} : vector<2x32xf32>, vector<32x96xf32>, vector<2x96xf32> -> vector<2x96xf32>
    %335 = vector.extract_strided_slice %333 {offsets = [0, 0], sizes = [2, 64], strides = [1, 1]} : vector<2x96xf32> to vector<2x64xf32>
    %336 = vector.extract_strided_slice %334 {offsets = [0, 0], sizes = [2, 64], strides = [1, 1]} : vector<2x96xf32> to vector<2x64xf32>
    %337 = arith.addf %335, %336 : vector<2x64xf32>
    %338 = arith.negf %337 : vector<2x64xf32>
    %339 = math.exp %338 : vector<2x64xf32>
    %cst_101 = arith.constant 1.000000e+00 : f32
    %340 = vector.broadcast %cst_101 : f32 to vector<2x64xf32>
    %341 = arith.addf %340, %339 : vector<2x64xf32>
    %342 = arith.divf %340, %341 : vector<2x64xf32>
    %343 = vector.extract_strided_slice %342 {offsets = [0, 0], sizes = [2, 32], strides = [1, 1]} : vector<2x64xf32> to vector<2x32xf32>
    %344 = vector.extract_strided_slice %342 {offsets = [0, 32], sizes = [2, 32], strides = [1, 1]} : vector<2x64xf32> to vector<2x32xf32>
    %345 = vector.extract_strided_slice %333 {offsets = [0, 64], sizes = [2, 32], strides = [1, 1]} : vector<2x96xf32> to vector<2x32xf32>
    %346 = vector.extract_strided_slice %334 {offsets = [0, 64], sizes = [2, 32], strides = [1, 1]} : vector<2x96xf32> to vector<2x32xf32>
    %347 = vector.broadcast %241 : vector<1x32xf32> to vector<2x32xf32>
    %348 = arith.addf %346, %347 : vector<2x32xf32>
    %349 = arith.mulf %343, %348 : vector<2x32xf32>
    %350 = arith.addf %345, %349 : vector<2x32xf32>
    %351 = math.tanh %350 : vector<2x32xf32>
    %cst_102 = arith.constant 1.000000e+00 : f32
    %352 = vector.broadcast %cst_102 : f32 to vector<2x32xf32>
    %353 = arith.subf %352, %344 : vector<2x32xf32>
    %354 = arith.mulf %353, %351 : vector<2x32xf32>
    %355 = arith.mulf %344, %327 : vector<2x32xf32>
    %356 = arith.addf %354, %355 : vector<2x32xf32>
    %357 = arith.index_cast %331 : i32 to index
    %c0_103 = arith.constant 0 : index
    %358 = vector.load %arg23[%357, %c0_103] : memref<16x32xf32, #tpu.memory_space<vmem>>, vector<2x32xf32>
    tpu.vector_store %arg23[%357, %c0_103], %356 {strides = array<i32>} : memref<16x32xf32, #tpu.memory_space<vmem>>, vector<2x32xf32>,
    %c4_i32_104 = arith.constant 4 : i32
    %c7_i32_105 = arith.constant 7 : i32
    %359 = arith.subi %c7_i32_105, %c4_i32_104 : i32
    %c2_i32_106 = arith.constant 2 : i32
    %360 = arith.muli %359, %c2_i32_106 : i32
    %361 = arith.index_cast %360 : i32 to index
    %c0_107 = arith.constant 0 : index
    %362 = vector.load %arg21[%361, %c0_107] : memref<16x96xf32, #tpu.memory_space<vmem>>, vector<2x96xf32>
    %cst_108 = arith.constant dense<0.000000e+00> : vector<2x96xf32>
    %363 = tpu.matmul %356, %240, %cst_108 {dimension_numbers = #tpu.dot_dimension_numbers<[1], [0], [0], [1], [0, 0, 1, 1], [], []>} : vector<2x32xf32>, vector<32x96xf32>, vector<2x96xf32> -> vector<2x96xf32>
    %364 = vector.extract_strided_slice %362 {offsets = [0, 0], sizes = [2, 64], strides = [1, 1]} : vector<2x96xf32> to vector<2x64xf32>
    %365 = vector.extract_strided_slice %363 {offsets = [0, 0], sizes = [2, 64], strides = [1, 1]} : vector<2x96xf32> to vector<2x64xf32>
    %366 = arith.addf %364, %365 : vector<2x64xf32>
    %367 = arith.negf %366 : vector<2x64xf32>
    %368 = math.exp %367 : vector<2x64xf32>
    %cst_109 = arith.constant 1.000000e+00 : f32
    %369 = vector.broadcast %cst_109 : f32 to vector<2x64xf32>
    %370 = arith.addf %369, %368 : vector<2x64xf32>
    %371 = arith.divf %369, %370 : vector<2x64xf32>
    %372 = vector.extract_strided_slice %371 {offsets = [0, 0], sizes = [2, 32], strides = [1, 1]} : vector<2x64xf32> to vector<2x32xf32>
    %373 = vector.extract_strided_slice %371 {offsets = [0, 32], sizes = [2, 32], strides = [1, 1]} : vector<2x64xf32> to vector<2x32xf32>
    %374 = vector.extract_strided_slice %362 {offsets = [0, 64], sizes = [2, 32], strides = [1, 1]} : vector<2x96xf32> to vector<2x32xf32>
    %375 = vector.extract_strided_slice %363 {offsets = [0, 64], sizes = [2, 32], strides = [1, 1]} : vector<2x96xf32> to vector<2x32xf32>
    %376 = vector.broadcast %241 : vector<1x32xf32> to vector<2x32xf32>
    %377 = arith.addf %375, %376 : vector<2x32xf32>
    %378 = arith.mulf %372, %377 : vector<2x32xf32>
    %379 = arith.addf %374, %378 : vector<2x32xf32>
    %380 = math.tanh %379 : vector<2x32xf32>
    %cst_110 = arith.constant 1.000000e+00 : f32
    %381 = vector.broadcast %cst_110 : f32 to vector<2x32xf32>
    %382 = arith.subf %381, %373 : vector<2x32xf32>
    %383 = arith.mulf %382, %380 : vector<2x32xf32>
    %384 = arith.mulf %373, %356 : vector<2x32xf32>
    %385 = arith.addf %383, %384 : vector<2x32xf32>
    %386 = arith.index_cast %360 : i32 to index
    %c0_111 = arith.constant 0 : index
    %387 = vector.load %arg23[%386, %c0_111] : memref<16x32xf32, #tpu.memory_space<vmem>>, vector<2x32xf32>
    tpu.vector_store %arg23[%386, %c0_111], %385 {strides = array<i32>} : memref<16x32xf32, #tpu.memory_space<vmem>>, vector<2x32xf32>,
    %c5_i32_112 = arith.constant 5 : i32
    %c7_i32_113 = arith.constant 7 : i32
    %388 = arith.subi %c7_i32_113, %c5_i32_112 : i32
    %c2_i32_114 = arith.constant 2 : i32
    %389 = arith.muli %388, %c2_i32_114 : i32
    %390 = arith.index_cast %389 : i32 to index
    %c0_115 = arith.constant 0 : index
    %391 = vector.load %arg21[%390, %c0_115] : memref<16x96xf32, #tpu.memory_space<vmem>>, vector<2x96xf32>
    %cst_116 = arith.constant dense<0.000000e+00> : vector<2x96xf32>
    %392 = tpu.matmul %385, %240, %cst_116 {dimension_numbers = #tpu.dot_dimension_numbers<[1], [0], [0], [1], [0, 0, 1, 1], [], []>} : vector<2x32xf32>, vector<32x96xf32>, vector<2x96xf32> -> vector<2x96xf32>
    %393 = vector.extract_strided_slice %391 {offsets = [0, 0], sizes = [2, 64], strides = [1, 1]} : vector<2x96xf32> to vector<2x64xf32>
    %394 = vector.extract_strided_slice %392 {offsets = [0, 0], sizes = [2, 64], strides = [1, 1]} : vector<2x96xf32> to vector<2x64xf32>
    %395 = arith.addf %393, %394 : vector<2x64xf32>
    %396 = arith.negf %395 : vector<2x64xf32>
    %397 = math.exp %396 : vector<2x64xf32>
    %cst_117 = arith.constant 1.000000e+00 : f32
    %398 = vector.broadcast %cst_117 : f32 to vector<2x64xf32>
    %399 = arith.addf %398, %397 : vector<2x64xf32>
    %400 = arith.divf %398, %399 : vector<2x64xf32>
    %401 = vector.extract_strided_slice %400 {offsets = [0, 0], sizes = [2, 32], strides = [1, 1]} : vector<2x64xf32> to vector<2x32xf32>
    %402 = vector.extract_strided_slice %400 {offsets = [0, 32], sizes = [2, 32], strides = [1, 1]} : vector<2x64xf32> to vector<2x32xf32>
    %403 = vector.extract_strided_slice %391 {offsets = [0, 64], sizes = [2, 32], strides = [1, 1]} : vector<2x96xf32> to vector<2x32xf32>
    %404 = vector.extract_strided_slice %392 {offsets = [0, 64], sizes = [2, 32], strides = [1, 1]} : vector<2x96xf32> to vector<2x32xf32>
    %405 = vector.broadcast %241 : vector<1x32xf32> to vector<2x32xf32>
    %406 = arith.addf %404, %405 : vector<2x32xf32>
    %407 = arith.mulf %401, %406 : vector<2x32xf32>
    %408 = arith.addf %403, %407 : vector<2x32xf32>
    %409 = math.tanh %408 : vector<2x32xf32>
    %cst_118 = arith.constant 1.000000e+00 : f32
    %410 = vector.broadcast %cst_118 : f32 to vector<2x32xf32>
    %411 = arith.subf %410, %402 : vector<2x32xf32>
    %412 = arith.mulf %411, %409 : vector<2x32xf32>
    %413 = arith.mulf %402, %385 : vector<2x32xf32>
    %414 = arith.addf %412, %413 : vector<2x32xf32>
    %415 = arith.index_cast %389 : i32 to index
    %c0_119 = arith.constant 0 : index
    %416 = vector.load %arg23[%415, %c0_119] : memref<16x32xf32, #tpu.memory_space<vmem>>, vector<2x32xf32>
    tpu.vector_store %arg23[%415, %c0_119], %414 {strides = array<i32>} : memref<16x32xf32, #tpu.memory_space<vmem>>, vector<2x32xf32>,
    %c6_i32_120 = arith.constant 6 : i32
    %c7_i32_121 = arith.constant 7 : i32
    %417 = arith.subi %c7_i32_121, %c6_i32_120 : i32
    %c2_i32_122 = arith.constant 2 : i32
    %418 = arith.muli %417, %c2_i32_122 : i32
    %419 = arith.index_cast %418 : i32 to index
    %c0_123 = arith.constant 0 : index
    %420 = vector.load %arg21[%419, %c0_123] : memref<16x96xf32, #tpu.memory_space<vmem>>, vector<2x96xf32>
    %cst_124 = arith.constant dense<0.000000e+00> : vector<2x96xf32>
    %421 = tpu.matmul %414, %240, %cst_124 {dimension_numbers = #tpu.dot_dimension_numbers<[1], [0], [0], [1], [0, 0, 1, 1], [], []>} : vector<2x32xf32>, vector<32x96xf32>, vector<2x96xf32> -> vector<2x96xf32>
    %422 = vector.extract_strided_slice %420 {offsets = [0, 0], sizes = [2, 64], strides = [1, 1]} : vector<2x96xf32> to vector<2x64xf32>
    %423 = vector.extract_strided_slice %421 {offsets = [0, 0], sizes = [2, 64], strides = [1, 1]} : vector<2x96xf32> to vector<2x64xf32>
    %424 = arith.addf %422, %423 : vector<2x64xf32>
    %425 = arith.negf %424 : vector<2x64xf32>
    %426 = math.exp %425 : vector<2x64xf32>
    %cst_125 = arith.constant 1.000000e+00 : f32
    %427 = vector.broadcast %cst_125 : f32 to vector<2x64xf32>
    %428 = arith.addf %427, %426 : vector<2x64xf32>
    %429 = arith.divf %427, %428 : vector<2x64xf32>
    %430 = vector.extract_strided_slice %429 {offsets = [0, 0], sizes = [2, 32], strides = [1, 1]} : vector<2x64xf32> to vector<2x32xf32>
    %431 = vector.extract_strided_slice %429 {offsets = [0, 32], sizes = [2, 32], strides = [1, 1]} : vector<2x64xf32> to vector<2x32xf32>
    %432 = vector.extract_strided_slice %420 {offsets = [0, 64], sizes = [2, 32], strides = [1, 1]} : vector<2x96xf32> to vector<2x32xf32>
    %433 = vector.extract_strided_slice %421 {offsets = [0, 64], sizes = [2, 32], strides = [1, 1]} : vector<2x96xf32> to vector<2x32xf32>
    %434 = vector.broadcast %241 : vector<1x32xf32> to vector<2x32xf32>
    %435 = arith.addf %433, %434 : vector<2x32xf32>
    %436 = arith.mulf %430, %435 : vector<2x32xf32>
    %437 = arith.addf %432, %436 : vector<2x32xf32>
    %438 = math.tanh %437 : vector<2x32xf32>
    %cst_126 = arith.constant 1.000000e+00 : f32
    %439 = vector.broadcast %cst_126 : f32 to vector<2x32xf32>
    %440 = arith.subf %439, %431 : vector<2x32xf32>
    %441 = arith.mulf %440, %438 : vector<2x32xf32>
    %442 = arith.mulf %431, %414 : vector<2x32xf32>
    %443 = arith.addf %441, %442 : vector<2x32xf32>
    %444 = arith.index_cast %418 : i32 to index
    %c0_127 = arith.constant 0 : index
    %445 = vector.load %arg23[%444, %c0_127] : memref<16x32xf32, #tpu.memory_space<vmem>>, vector<2x32xf32>
    tpu.vector_store %arg23[%444, %c0_127], %443 {strides = array<i32>} : memref<16x32xf32, #tpu.memory_space<vmem>>, vector<2x32xf32>,
    %c7_i32_128 = arith.constant 7 : i32
    %c7_i32_129 = arith.constant 7 : i32
    %446 = arith.subi %c7_i32_129, %c7_i32_128 : i32
    %c2_i32_130 = arith.constant 2 : i32
    %447 = arith.muli %446, %c2_i32_130 : i32
    %448 = arith.index_cast %447 : i32 to index
    %c0_131 = arith.constant 0 : index
    %449 = vector.load %arg21[%448, %c0_131] : memref<16x96xf32, #tpu.memory_space<vmem>>, vector<2x96xf32>
    %cst_132 = arith.constant dense<0.000000e+00> : vector<2x96xf32>
    %450 = tpu.matmul %443, %240, %cst_132 {dimension_numbers = #tpu.dot_dimension_numbers<[1], [0], [0], [1], [0, 0, 1, 1], [], []>} : vector<2x32xf32>, vector<32x96xf32>, vector<2x96xf32> -> vector<2x96xf32>
    %451 = vector.extract_strided_slice %449 {offsets = [0, 0], sizes = [2, 64], strides = [1, 1]} : vector<2x96xf32> to vector<2x64xf32>
    %452 = vector.extract_strided_slice %450 {offsets = [0, 0], sizes = [2, 64], strides = [1, 1]} : vector<2x96xf32> to vector<2x64xf32>
    %453 = arith.addf %451, %452 : vector<2x64xf32>
    %454 = arith.negf %453 : vector<2x64xf32>
    %455 = math.exp %454 : vector<2x64xf32>
    %cst_133 = arith.constant 1.000000e+00 : f32
    %456 = vector.broadcast %cst_133 : f32 to vector<2x64xf32>
    %457 = arith.addf %456, %455 : vector<2x64xf32>
    %458 = arith.divf %456, %457 : vector<2x64xf32>
    %459 = vector.extract_strided_slice %458 {offsets = [0, 0], sizes = [2, 32], strides = [1, 1]} : vector<2x64xf32> to vector<2x32xf32>
    %460 = vector.extract_strided_slice %458 {offsets = [0, 32], sizes = [2, 32], strides = [1, 1]} : vector<2x64xf32> to vector<2x32xf32>
    %461 = vector.extract_strided_slice %449 {offsets = [0, 64], sizes = [2, 32], strides = [1, 1]} : vector<2x96xf32> to vector<2x32xf32>
    %462 = vector.extract_strided_slice %450 {offsets = [0, 64], sizes = [2, 32], strides = [1, 1]} : vector<2x96xf32> to vector<2x32xf32>
    %463 = vector.broadcast %241 : vector<1x32xf32> to vector<2x32xf32>
    %464 = arith.addf %462, %463 : vector<2x32xf32>
    %465 = arith.mulf %459, %464 : vector<2x32xf32>
    %466 = arith.addf %461, %465 : vector<2x32xf32>
    %467 = math.tanh %466 : vector<2x32xf32>
    %cst_134 = arith.constant 1.000000e+00 : f32
    %468 = vector.broadcast %cst_134 : f32 to vector<2x32xf32>
    %469 = arith.subf %468, %460 : vector<2x32xf32>
    %470 = arith.mulf %469, %467 : vector<2x32xf32>
    %471 = arith.mulf %460, %443 : vector<2x32xf32>
    %472 = arith.addf %470, %471 : vector<2x32xf32>
    %473 = arith.index_cast %447 : i32 to index
    %c0_135 = arith.constant 0 : index
    %474 = vector.load %arg23[%473, %c0_135] : memref<16x32xf32, #tpu.memory_space<vmem>>, vector<2x32xf32>
    tpu.vector_store %arg23[%473, %c0_135], %472 {strides = array<i32>} : memref<16x32xf32, #tpu.memory_space<vmem>>, vector<2x32xf32>,
    %c8_i32_136 = arith.constant 8 : i32
    %c0_137 = arith.constant 0 : index
    %c0_138 = arith.constant 0 : index
    %475 = vector.load %arg22[%c0_137, %c0_138] : memref<16x32xf32, #tpu.memory_space<vmem>>, vector<16x32xf32>
    %c0_139 = arith.constant 0 : index
    %c0_140 = arith.constant 0 : index
    %476 = vector.load %arg23[%c0_139, %c0_140] : memref<16x32xf32, #tpu.memory_space<vmem>>, vector<16x32xf32>
    %477 = tpu.concatenate %475, %476 in 1 : vector<16x32xf32>, vector<16x32xf32> -> vector<16x64xf32>
    %c0_141 = arith.constant 0 : index
    %c0_142 = arith.constant 0 : index
    %478 = vector.load %arg9[%c0_141, %c0_142] : memref<64x96xf32, #tpu.memory_space<vmem>>, vector<64x96xf32>
    %cst_143 = arith.constant dense<0.000000e+00> : vector<16x96xf32>
    %479 = tpu.matmul %477, %478, %cst_143 {dimension_numbers = #tpu.dot_dimension_numbers<[1], [0], [0], [1], [0, 0, 1, 1], [], []>} : vector<16x64xf32>, vector<64x96xf32>, vector<16x96xf32> -> vector<16x96xf32>
    %c0_144 = arith.constant 0 : index
    %c0_145 = arith.constant 0 : index
    %480 = vector.load %arg11[%c0_144, %c0_145] : memref<1x96xf32, #tpu.memory_space<vmem>>, vector<1x96xf32>
    %481 = vector.broadcast %480 : vector<1x96xf32> to vector<16x96xf32>
    %482 = arith.addf %479, %481 : vector<16x96xf32>
    %c0_146 = arith.constant 0 : index
    %c0_147 = arith.constant 0 : index
    %483 = vector.load %arg21[%c0_146, %c0_147] : memref<16x96xf32, #tpu.memory_space<vmem>>, vector<16x96xf32>
    tpu.vector_store %arg21[%c0_146, %c0_147], %482 {strides = array<i32>} : memref<16x96xf32, #tpu.memory_space<vmem>>, vector<16x96xf32>,
    %c0_148 = arith.constant 0 : index
    %c0_149 = arith.constant 0 : index
    %484 = vector.load %arg10[%c0_148, %c0_149] : memref<32x96xf32, #tpu.memory_space<vmem>>, vector<32x96xf32>
    %c0_150 = arith.constant 0 : index
    %c0_151 = arith.constant 0 : index
    %485 = vector.load %arg12[%c0_150, %c0_151] : memref<1x32xf32, #tpu.memory_space<vmem>>, vector<1x32xf32>
    %cst_152 = arith.constant 0.000000e+00 : f32
    %486 = vector.broadcast %cst_152 : f32 to vector<2x32xf32>
    %c0_i32_153 = arith.constant 0 : i32
    %c2_i32_154 = arith.constant 2 : i32
    %487 = arith.muli %c0_i32_153, %c2_i32_154 : i32
    %488 = arith.index_cast %487 : i32 to index
    %c0_155 = arith.constant 0 : index
    %489 = vector.load %arg21[%488, %c0_155] : memref<16x96xf32, #tpu.memory_space<vmem>>, vector<2x96xf32>
    %cst_156 = arith.constant dense<0.000000e+00> : vector<2x96xf32>
    %490 = tpu.matmul %486, %484, %cst_156 {dimension_numbers = #tpu.dot_dimension_numbers<[1], [0], [0], [1], [0, 0, 1, 1], [], []>} : vector<2x32xf32>, vector<32x96xf32>, vector<2x96xf32> -> vector<2x96xf32>
    %491 = vector.extract_strided_slice %489 {offsets = [0, 0], sizes = [2, 64], strides = [1, 1]} : vector<2x96xf32> to vector<2x64xf32>
    %492 = vector.extract_strided_slice %490 {offsets = [0, 0], sizes = [2, 64], strides = [1, 1]} : vector<2x96xf32> to vector<2x64xf32>
    %493 = arith.addf %491, %492 : vector<2x64xf32>
    %494 = arith.negf %493 : vector<2x64xf32>
    %495 = math.exp %494 : vector<2x64xf32>
    %cst_157 = arith.constant 1.000000e+00 : f32
    %496 = vector.broadcast %cst_157 : f32 to vector<2x64xf32>
    %497 = arith.addf %496, %495 : vector<2x64xf32>
    %498 = arith.divf %496, %497 : vector<2x64xf32>
    %499 = vector.extract_strided_slice %498 {offsets = [0, 0], sizes = [2, 32], strides = [1, 1]} : vector<2x64xf32> to vector<2x32xf32>
    %500 = vector.extract_strided_slice %498 {offsets = [0, 32], sizes = [2, 32], strides = [1, 1]} : vector<2x64xf32> to vector<2x32xf32>
    %501 = vector.extract_strided_slice %489 {offsets = [0, 64], sizes = [2, 32], strides = [1, 1]} : vector<2x96xf32> to vector<2x32xf32>
    %502 = vector.extract_strided_slice %490 {offsets = [0, 64], sizes = [2, 32], strides = [1, 1]} : vector<2x96xf32> to vector<2x32xf32>
    %503 = vector.broadcast %485 : vector<1x32xf32> to vector<2x32xf32>
    %504 = arith.addf %502, %503 : vector<2x32xf32>
    %505 = arith.mulf %499, %504 : vector<2x32xf32>
    %506 = arith.addf %501, %505 : vector<2x32xf32>
    %507 = math.tanh %506 : vector<2x32xf32>
    %cst_158 = arith.constant 1.000000e+00 : f32
    %508 = vector.broadcast %cst_158 : f32 to vector<2x32xf32>
    %509 = arith.subf %508, %500 : vector<2x32xf32>
    %510 = arith.mulf %509, %507 : vector<2x32xf32>
    %511 = arith.mulf %500, %486 : vector<2x32xf32>
    %512 = arith.addf %510, %511 : vector<2x32xf32>
    %513 = arith.index_cast %487 : i32 to index
    %c0_159 = arith.constant 0 : index
    %514 = vector.load %arg24[%513, %c0_159] : memref<16x32xf32, #tpu.memory_space<vmem>>, vector<2x32xf32>
    tpu.vector_store %arg24[%513, %c0_159], %512 {strides = array<i32>} : memref<16x32xf32, #tpu.memory_space<vmem>>, vector<2x32xf32>,
    %c1_i32_160 = arith.constant 1 : i32
    %c2_i32_161 = arith.constant 2 : i32
    %515 = arith.muli %c1_i32_160, %c2_i32_161 : i32
    %516 = arith.index_cast %515 : i32 to index
    %c0_162 = arith.constant 0 : index
    %517 = vector.load %arg21[%516, %c0_162] : memref<16x96xf32, #tpu.memory_space<vmem>>, vector<2x96xf32>
    %cst_163 = arith.constant dense<0.000000e+00> : vector<2x96xf32>
    %518 = tpu.matmul %512, %484, %cst_163 {dimension_numbers = #tpu.dot_dimension_numbers<[1], [0], [0], [1], [0, 0, 1, 1], [], []>} : vector<2x32xf32>, vector<32x96xf32>, vector<2x96xf32> -> vector<2x96xf32>
    %519 = vector.extract_strided_slice %517 {offsets = [0, 0], sizes = [2, 64], strides = [1, 1]} : vector<2x96xf32> to vector<2x64xf32>
    %520 = vector.extract_strided_slice %518 {offsets = [0, 0], sizes = [2, 64], strides = [1, 1]} : vector<2x96xf32> to vector<2x64xf32>
    %521 = arith.addf %519, %520 : vector<2x64xf32>
    %522 = arith.negf %521 : vector<2x64xf32>
    %523 = math.exp %522 : vector<2x64xf32>
    %cst_164 = arith.constant 1.000000e+00 : f32
    %524 = vector.broadcast %cst_164 : f32 to vector<2x64xf32>
    %525 = arith.addf %524, %523 : vector<2x64xf32>
    %526 = arith.divf %524, %525 : vector<2x64xf32>
    %527 = vector.extract_strided_slice %526 {offsets = [0, 0], sizes = [2, 32], strides = [1, 1]} : vector<2x64xf32> to vector<2x32xf32>
    %528 = vector.extract_strided_slice %526 {offsets = [0, 32], sizes = [2, 32], strides = [1, 1]} : vector<2x64xf32> to vector<2x32xf32>
    %529 = vector.extract_strided_slice %517 {offsets = [0, 64], sizes = [2, 32], strides = [1, 1]} : vector<2x96xf32> to vector<2x32xf32>
    %530 = vector.extract_strided_slice %518 {offsets = [0, 64], sizes = [2, 32], strides = [1, 1]} : vector<2x96xf32> to vector<2x32xf32>
    %531 = vector.broadcast %485 : vector<1x32xf32> to vector<2x32xf32>
    %532 = arith.addf %530, %531 : vector<2x32xf32>
    %533 = arith.mulf %527, %532 : vector<2x32xf32>
    %534 = arith.addf %529, %533 : vector<2x32xf32>
    %535 = math.tanh %534 : vector<2x32xf32>
    %cst_165 = arith.constant 1.000000e+00 : f32
    %536 = vector.broadcast %cst_165 : f32 to vector<2x32xf32>
    %537 = arith.subf %536, %528 : vector<2x32xf32>
    %538 = arith.mulf %537, %535 : vector<2x32xf32>
    %539 = arith.mulf %528, %512 : vector<2x32xf32>
    %540 = arith.addf %538, %539 : vector<2x32xf32>
    %541 = arith.index_cast %515 : i32 to index
    %c0_166 = arith.constant 0 : index
    %542 = vector.load %arg24[%541, %c0_166] : memref<16x32xf32, #tpu.memory_space<vmem>>, vector<2x32xf32>
    tpu.vector_store %arg24[%541, %c0_166], %540 {strides = array<i32>} : memref<16x32xf32, #tpu.memory_space<vmem>>, vector<2x32xf32>,
    %c2_i32_167 = arith.constant 2 : i32
    %c2_i32_168 = arith.constant 2 : i32
    %543 = arith.muli %c2_i32_167, %c2_i32_168 : i32
    %544 = arith.index_cast %543 : i32 to index
    %c0_169 = arith.constant 0 : index
    %545 = vector.load %arg21[%544, %c0_169] : memref<16x96xf32, #tpu.memory_space<vmem>>, vector<2x96xf32>
    %cst_170 = arith.constant dense<0.000000e+00> : vector<2x96xf32>
    %546 = tpu.matmul %540, %484, %cst_170 {dimension_numbers = #tpu.dot_dimension_numbers<[1], [0], [0], [1], [0, 0, 1, 1], [], []>} : vector<2x32xf32>, vector<32x96xf32>, vector<2x96xf32> -> vector<2x96xf32>
    %547 = vector.extract_strided_slice %545 {offsets = [0, 0], sizes = [2, 64], strides = [1, 1]} : vector<2x96xf32> to vector<2x64xf32>
    %548 = vector.extract_strided_slice %546 {offsets = [0, 0], sizes = [2, 64], strides = [1, 1]} : vector<2x96xf32> to vector<2x64xf32>
    %549 = arith.addf %547, %548 : vector<2x64xf32>
    %550 = arith.negf %549 : vector<2x64xf32>
    %551 = math.exp %550 : vector<2x64xf32>
    %cst_171 = arith.constant 1.000000e+00 : f32
    %552 = vector.broadcast %cst_171 : f32 to vector<2x64xf32>
    %553 = arith.addf %552, %551 : vector<2x64xf32>
    %554 = arith.divf %552, %553 : vector<2x64xf32>
    %555 = vector.extract_strided_slice %554 {offsets = [0, 0], sizes = [2, 32], strides = [1, 1]} : vector<2x64xf32> to vector<2x32xf32>
    %556 = vector.extract_strided_slice %554 {offsets = [0, 32], sizes = [2, 32], strides = [1, 1]} : vector<2x64xf32> to vector<2x32xf32>
    %557 = vector.extract_strided_slice %545 {offsets = [0, 64], sizes = [2, 32], strides = [1, 1]} : vector<2x96xf32> to vector<2x32xf32>
    %558 = vector.extract_strided_slice %546 {offsets = [0, 64], sizes = [2, 32], strides = [1, 1]} : vector<2x96xf32> to vector<2x32xf32>
    %559 = vector.broadcast %485 : vector<1x32xf32> to vector<2x32xf32>
    %560 = arith.addf %558, %559 : vector<2x32xf32>
    %561 = arith.mulf %555, %560 : vector<2x32xf32>
    %562 = arith.addf %557, %561 : vector<2x32xf32>
    %563 = math.tanh %562 : vector<2x32xf32>
    %cst_172 = arith.constant 1.000000e+00 : f32
    %564 = vector.broadcast %cst_172 : f32 to vector<2x32xf32>
    %565 = arith.subf %564, %556 : vector<2x32xf32>
    %566 = arith.mulf %565, %563 : vector<2x32xf32>
    %567 = arith.mulf %556, %540 : vector<2x32xf32>
    %568 = arith.addf %566, %567 : vector<2x32xf32>
    %569 = arith.index_cast %543 : i32 to index
    %c0_173 = arith.constant 0 : index
    %570 = vector.load %arg24[%569, %c0_173] : memref<16x32xf32, #tpu.memory_space<vmem>>, vector<2x32xf32>
    tpu.vector_store %arg24[%569, %c0_173], %568 {strides = array<i32>} : memref<16x32xf32, #tpu.memory_space<vmem>>, vector<2x32xf32>,
    %c3_i32_174 = arith.constant 3 : i32
    %c2_i32_175 = arith.constant 2 : i32
    %571 = arith.muli %c3_i32_174, %c2_i32_175 : i32
    %572 = arith.index_cast %571 : i32 to index
    %c0_176 = arith.constant 0 : index
    %573 = vector.load %arg21[%572, %c0_176] : memref<16x96xf32, #tpu.memory_space<vmem>>, vector<2x96xf32>
    %cst_177 = arith.constant dense<0.000000e+00> : vector<2x96xf32>
    %574 = tpu.matmul %568, %484, %cst_177 {dimension_numbers = #tpu.dot_dimension_numbers<[1], [0], [0], [1], [0, 0, 1, 1], [], []>} : vector<2x32xf32>, vector<32x96xf32>, vector<2x96xf32> -> vector<2x96xf32>
    %575 = vector.extract_strided_slice %573 {offsets = [0, 0], sizes = [2, 64], strides = [1, 1]} : vector<2x96xf32> to vector<2x64xf32>
    %576 = vector.extract_strided_slice %574 {offsets = [0, 0], sizes = [2, 64], strides = [1, 1]} : vector<2x96xf32> to vector<2x64xf32>
    %577 = arith.addf %575, %576 : vector<2x64xf32>
    %578 = arith.negf %577 : vector<2x64xf32>
    %579 = math.exp %578 : vector<2x64xf32>
    %cst_178 = arith.constant 1.000000e+00 : f32
    %580 = vector.broadcast %cst_178 : f32 to vector<2x64xf32>
    %581 = arith.addf %580, %579 : vector<2x64xf32>
    %582 = arith.divf %580, %581 : vector<2x64xf32>
    %583 = vector.extract_strided_slice %582 {offsets = [0, 0], sizes = [2, 32], strides = [1, 1]} : vector<2x64xf32> to vector<2x32xf32>
    %584 = vector.extract_strided_slice %582 {offsets = [0, 32], sizes = [2, 32], strides = [1, 1]} : vector<2x64xf32> to vector<2x32xf32>
    %585 = vector.extract_strided_slice %573 {offsets = [0, 64], sizes = [2, 32], strides = [1, 1]} : vector<2x96xf32> to vector<2x32xf32>
    %586 = vector.extract_strided_slice %574 {offsets = [0, 64], sizes = [2, 32], strides = [1, 1]} : vector<2x96xf32> to vector<2x32xf32>
    %587 = vector.broadcast %485 : vector<1x32xf32> to vector<2x32xf32>
    %588 = arith.addf %586, %587 : vector<2x32xf32>
    %589 = arith.mulf %583, %588 : vector<2x32xf32>
    %590 = arith.addf %585, %589 : vector<2x32xf32>
    %591 = math.tanh %590 : vector<2x32xf32>
    %cst_179 = arith.constant 1.000000e+00 : f32
    %592 = vector.broadcast %cst_179 : f32 to vector<2x32xf32>
    %593 = arith.subf %592, %584 : vector<2x32xf32>
    %594 = arith.mulf %593, %591 : vector<2x32xf32>
    %595 = arith.mulf %584, %568 : vector<2x32xf32>
    %596 = arith.addf %594, %595 : vector<2x32xf32>
    %597 = arith.index_cast %571 : i32 to index
    %c0_180 = arith.constant 0 : index
    %598 = vector.load %arg24[%597, %c0_180] : memref<16x32xf32, #tpu.memory_space<vmem>>, vector<2x32xf32>
    tpu.vector_store %arg24[%597, %c0_180], %596 {strides = array<i32>} : memref<16x32xf32, #tpu.memory_space<vmem>>, vector<2x32xf32>,
    %c4_i32_181 = arith.constant 4 : i32
    %c2_i32_182 = arith.constant 2 : i32
    %599 = arith.muli %c4_i32_181, %c2_i32_182 : i32
    %600 = arith.index_cast %599 : i32 to index
    %c0_183 = arith.constant 0 : index
    %601 = vector.load %arg21[%600, %c0_183] : memref<16x96xf32, #tpu.memory_space<vmem>>, vector<2x96xf32>
    %cst_184 = arith.constant dense<0.000000e+00> : vector<2x96xf32>
    %602 = tpu.matmul %596, %484, %cst_184 {dimension_numbers = #tpu.dot_dimension_numbers<[1], [0], [0], [1], [0, 0, 1, 1], [], []>} : vector<2x32xf32>, vector<32x96xf32>, vector<2x96xf32> -> vector<2x96xf32>
    %603 = vector.extract_strided_slice %601 {offsets = [0, 0], sizes = [2, 64], strides = [1, 1]} : vector<2x96xf32> to vector<2x64xf32>
    %604 = vector.extract_strided_slice %602 {offsets = [0, 0], sizes = [2, 64], strides = [1, 1]} : vector<2x96xf32> to vector<2x64xf32>
    %605 = arith.addf %603, %604 : vector<2x64xf32>
    %606 = arith.negf %605 : vector<2x64xf32>
    %607 = math.exp %606 : vector<2x64xf32>
    %cst_185 = arith.constant 1.000000e+00 : f32
    %608 = vector.broadcast %cst_185 : f32 to vector<2x64xf32>
    %609 = arith.addf %608, %607 : vector<2x64xf32>
    %610 = arith.divf %608, %609 : vector<2x64xf32>
    %611 = vector.extract_strided_slice %610 {offsets = [0, 0], sizes = [2, 32], strides = [1, 1]} : vector<2x64xf32> to vector<2x32xf32>
    %612 = vector.extract_strided_slice %610 {offsets = [0, 32], sizes = [2, 32], strides = [1, 1]} : vector<2x64xf32> to vector<2x32xf32>
    %613 = vector.extract_strided_slice %601 {offsets = [0, 64], sizes = [2, 32], strides = [1, 1]} : vector<2x96xf32> to vector<2x32xf32>
    %614 = vector.extract_strided_slice %602 {offsets = [0, 64], sizes = [2, 32], strides = [1, 1]} : vector<2x96xf32> to vector<2x32xf32>
    %615 = vector.broadcast %485 : vector<1x32xf32> to vector<2x32xf32>
    %616 = arith.addf %614, %615 : vector<2x32xf32>
    %617 = arith.mulf %611, %616 : vector<2x32xf32>
    %618 = arith.addf %613, %617 : vector<2x32xf32>
    %619 = math.tanh %618 : vector<2x32xf32>
    %cst_186 = arith.constant 1.000000e+00 : f32
    %620 = vector.broadcast %cst_186 : f32 to vector<2x32xf32>
    %621 = arith.subf %620, %612 : vector<2x32xf32>
    %622 = arith.mulf %621, %619 : vector<2x32xf32>
    %623 = arith.mulf %612, %596 : vector<2x32xf32>
    %624 = arith.addf %622, %623 : vector<2x32xf32>
    %625 = arith.index_cast %599 : i32 to index
    %c0_187 = arith.constant 0 : index
    %626 = vector.load %arg24[%625, %c0_187] : memref<16x32xf32, #tpu.memory_space<vmem>>, vector<2x32xf32>
    tpu.vector_store %arg24[%625, %c0_187], %624 {strides = array<i32>} : memref<16x32xf32, #tpu.memory_space<vmem>>, vector<2x32xf32>,
    %c5_i32_188 = arith.constant 5 : i32
    %c2_i32_189 = arith.constant 2 : i32
    %627 = arith.muli %c5_i32_188, %c2_i32_189 : i32
    %628 = arith.index_cast %627 : i32 to index
    %c0_190 = arith.constant 0 : index
    %629 = vector.load %arg21[%628, %c0_190] : memref<16x96xf32, #tpu.memory_space<vmem>>, vector<2x96xf32>
    %cst_191 = arith.constant dense<0.000000e+00> : vector<2x96xf32>
    %630 = tpu.matmul %624, %484, %cst_191 {dimension_numbers = #tpu.dot_dimension_numbers<[1], [0], [0], [1], [0, 0, 1, 1], [], []>} : vector<2x32xf32>, vector<32x96xf32>, vector<2x96xf32> -> vector<2x96xf32>
    %631 = vector.extract_strided_slice %629 {offsets = [0, 0], sizes = [2, 64], strides = [1, 1]} : vector<2x96xf32> to vector<2x64xf32>
    %632 = vector.extract_strided_slice %630 {offsets = [0, 0], sizes = [2, 64], strides = [1, 1]} : vector<2x96xf32> to vector<2x64xf32>
    %633 = arith.addf %631, %632 : vector<2x64xf32>
    %634 = arith.negf %633 : vector<2x64xf32>
    %635 = math.exp %634 : vector<2x64xf32>
    %cst_192 = arith.constant 1.000000e+00 : f32
    %636 = vector.broadcast %cst_192 : f32 to vector<2x64xf32>
    %637 = arith.addf %636, %635 : vector<2x64xf32>
    %638 = arith.divf %636, %637 : vector<2x64xf32>
    %639 = vector.extract_strided_slice %638 {offsets = [0, 0], sizes = [2, 32], strides = [1, 1]} : vector<2x64xf32> to vector<2x32xf32>
    %640 = vector.extract_strided_slice %638 {offsets = [0, 32], sizes = [2, 32], strides = [1, 1]} : vector<2x64xf32> to vector<2x32xf32>
    %641 = vector.extract_strided_slice %629 {offsets = [0, 64], sizes = [2, 32], strides = [1, 1]} : vector<2x96xf32> to vector<2x32xf32>
    %642 = vector.extract_strided_slice %630 {offsets = [0, 64], sizes = [2, 32], strides = [1, 1]} : vector<2x96xf32> to vector<2x32xf32>
    %643 = vector.broadcast %485 : vector<1x32xf32> to vector<2x32xf32>
    %644 = arith.addf %642, %643 : vector<2x32xf32>
    %645 = arith.mulf %639, %644 : vector<2x32xf32>
    %646 = arith.addf %641, %645 : vector<2x32xf32>
    %647 = math.tanh %646 : vector<2x32xf32>
    %cst_193 = arith.constant 1.000000e+00 : f32
    %648 = vector.broadcast %cst_193 : f32 to vector<2x32xf32>
    %649 = arith.subf %648, %640 : vector<2x32xf32>
    %650 = arith.mulf %649, %647 : vector<2x32xf32>
    %651 = arith.mulf %640, %624 : vector<2x32xf32>
    %652 = arith.addf %650, %651 : vector<2x32xf32>
    %653 = arith.index_cast %627 : i32 to index
    %c0_194 = arith.constant 0 : index
    %654 = vector.load %arg24[%653, %c0_194] : memref<16x32xf32, #tpu.memory_space<vmem>>, vector<2x32xf32>
    tpu.vector_store %arg24[%653, %c0_194], %652 {strides = array<i32>} : memref<16x32xf32, #tpu.memory_space<vmem>>, vector<2x32xf32>,
    %c6_i32_195 = arith.constant 6 : i32
    %c2_i32_196 = arith.constant 2 : i32
    %655 = arith.muli %c6_i32_195, %c2_i32_196 : i32
    %656 = arith.index_cast %655 : i32 to index
    %c0_197 = arith.constant 0 : index
    %657 = vector.load %arg21[%656, %c0_197] : memref<16x96xf32, #tpu.memory_space<vmem>>, vector<2x96xf32>
    %cst_198 = arith.constant dense<0.000000e+00> : vector<2x96xf32>
    %658 = tpu.matmul %652, %484, %cst_198 {dimension_numbers = #tpu.dot_dimension_numbers<[1], [0], [0], [1], [0, 0, 1, 1], [], []>} : vector<2x32xf32>, vector<32x96xf32>, vector<2x96xf32> -> vector<2x96xf32>
    %659 = vector.extract_strided_slice %657 {offsets = [0, 0], sizes = [2, 64], strides = [1, 1]} : vector<2x96xf32> to vector<2x64xf32>
    %660 = vector.extract_strided_slice %658 {offsets = [0, 0], sizes = [2, 64], strides = [1, 1]} : vector<2x96xf32> to vector<2x64xf32>
    %661 = arith.addf %659, %660 : vector<2x64xf32>
    %662 = arith.negf %661 : vector<2x64xf32>
    %663 = math.exp %662 : vector<2x64xf32>
    %cst_199 = arith.constant 1.000000e+00 : f32
    %664 = vector.broadcast %cst_199 : f32 to vector<2x64xf32>
    %665 = arith.addf %664, %663 : vector<2x64xf32>
    %666 = arith.divf %664, %665 : vector<2x64xf32>
    %667 = vector.extract_strided_slice %666 {offsets = [0, 0], sizes = [2, 32], strides = [1, 1]} : vector<2x64xf32> to vector<2x32xf32>
    %668 = vector.extract_strided_slice %666 {offsets = [0, 32], sizes = [2, 32], strides = [1, 1]} : vector<2x64xf32> to vector<2x32xf32>
    %669 = vector.extract_strided_slice %657 {offsets = [0, 64], sizes = [2, 32], strides = [1, 1]} : vector<2x96xf32> to vector<2x32xf32>
    %670 = vector.extract_strided_slice %658 {offsets = [0, 64], sizes = [2, 32], strides = [1, 1]} : vector<2x96xf32> to vector<2x32xf32>
    %671 = vector.broadcast %485 : vector<1x32xf32> to vector<2x32xf32>
    %672 = arith.addf %670, %671 : vector<2x32xf32>
    %673 = arith.mulf %667, %672 : vector<2x32xf32>
    %674 = arith.addf %669, %673 : vector<2x32xf32>
    %675 = math.tanh %674 : vector<2x32xf32>
    %cst_200 = arith.constant 1.000000e+00 : f32
    %676 = vector.broadcast %cst_200 : f32 to vector<2x32xf32>
    %677 = arith.subf %676, %668 : vector<2x32xf32>
    %678 = arith.mulf %677, %675 : vector<2x32xf32>
    %679 = arith.mulf %668, %652 : vector<2x32xf32>
    %680 = arith.addf %678, %679 : vector<2x32xf32>
    %681 = arith.index_cast %655 : i32 to index
    %c0_201 = arith.constant 0 : index
    %682 = vector.load %arg24[%681, %c0_201] : memref<16x32xf32, #tpu.memory_space<vmem>>, vector<2x32xf32>
    tpu.vector_store %arg24[%681, %c0_201], %680 {strides = array<i32>} : memref<16x32xf32, #tpu.memory_space<vmem>>, vector<2x32xf32>,
    %c7_i32_202 = arith.constant 7 : i32
    %c2_i32_203 = arith.constant 2 : i32
    %683 = arith.muli %c7_i32_202, %c2_i32_203 : i32
    %684 = arith.index_cast %683 : i32 to index
    %c0_204 = arith.constant 0 : index
    %685 = vector.load %arg21[%684, %c0_204] : memref<16x96xf32, #tpu.memory_space<vmem>>, vector<2x96xf32>
    %cst_205 = arith.constant dense<0.000000e+00> : vector<2x96xf32>
    %686 = tpu.matmul %680, %484, %cst_205 {dimension_numbers = #tpu.dot_dimension_numbers<[1], [0], [0], [1], [0, 0, 1, 1], [], []>} : vector<2x32xf32>, vector<32x96xf32>, vector<2x96xf32> -> vector<2x96xf32>
    %687 = vector.extract_strided_slice %685 {offsets = [0, 0], sizes = [2, 64], strides = [1, 1]} : vector<2x96xf32> to vector<2x64xf32>
    %688 = vector.extract_strided_slice %686 {offsets = [0, 0], sizes = [2, 64], strides = [1, 1]} : vector<2x96xf32> to vector<2x64xf32>
    %689 = arith.addf %687, %688 : vector<2x64xf32>
    %690 = arith.negf %689 : vector<2x64xf32>
    %691 = math.exp %690 : vector<2x64xf32>
    %cst_206 = arith.constant 1.000000e+00 : f32
    %692 = vector.broadcast %cst_206 : f32 to vector<2x64xf32>
    %693 = arith.addf %692, %691 : vector<2x64xf32>
    %694 = arith.divf %692, %693 : vector<2x64xf32>
    %695 = vector.extract_strided_slice %694 {offsets = [0, 0], sizes = [2, 32], strides = [1, 1]} : vector<2x64xf32> to vector<2x32xf32>
    %696 = vector.extract_strided_slice %694 {offsets = [0, 32], sizes = [2, 32], strides = [1, 1]} : vector<2x64xf32> to vector<2x32xf32>
    %697 = vector.extract_strided_slice %685 {offsets = [0, 64], sizes = [2, 32], strides = [1, 1]} : vector<2x96xf32> to vector<2x32xf32>
    %698 = vector.extract_strided_slice %686 {offsets = [0, 64], sizes = [2, 32], strides = [1, 1]} : vector<2x96xf32> to vector<2x32xf32>
    %699 = vector.broadcast %485 : vector<1x32xf32> to vector<2x32xf32>
    %700 = arith.addf %698, %699 : vector<2x32xf32>
    %701 = arith.mulf %695, %700 : vector<2x32xf32>
    %702 = arith.addf %697, %701 : vector<2x32xf32>
    %703 = math.tanh %702 : vector<2x32xf32>
    %cst_207 = arith.constant 1.000000e+00 : f32
    %704 = vector.broadcast %cst_207 : f32 to vector<2x32xf32>
    %705 = arith.subf %704, %696 : vector<2x32xf32>
    %706 = arith.mulf %705, %703 : vector<2x32xf32>
    %707 = arith.mulf %696, %680 : vector<2x32xf32>
    %708 = arith.addf %706, %707 : vector<2x32xf32>
    %709 = arith.index_cast %683 : i32 to index
    %c0_208 = arith.constant 0 : index
    %710 = vector.load %arg24[%709, %c0_208] : memref<16x32xf32, #tpu.memory_space<vmem>>, vector<2x32xf32>
    tpu.vector_store %arg24[%709, %c0_208], %708 {strides = array<i32>} : memref<16x32xf32, #tpu.memory_space<vmem>>, vector<2x32xf32>,
    %c8_i32_209 = arith.constant 8 : i32
    %c0_210 = arith.constant 0 : index
    %c0_211 = arith.constant 0 : index
    %711 = vector.load %arg13[%c0_210, %c0_211] : memref<64x96xf32, #tpu.memory_space<vmem>>, vector<64x96xf32>
    %cst_212 = arith.constant dense<0.000000e+00> : vector<16x96xf32>
    %712 = tpu.matmul %477, %711, %cst_212 {dimension_numbers = #tpu.dot_dimension_numbers<[1], [0], [0], [1], [0, 0, 1, 1], [], []>} : vector<16x64xf32>, vector<64x96xf32>, vector<16x96xf32> -> vector<16x96xf32>
    %c0_213 = arith.constant 0 : index
    %c0_214 = arith.constant 0 : index
    %713 = vector.load %arg15[%c0_213, %c0_214] : memref<1x96xf32, #tpu.memory_space<vmem>>, vector<1x96xf32>
    %714 = vector.broadcast %713 : vector<1x96xf32> to vector<16x96xf32>
    %715 = arith.addf %712, %714 : vector<16x96xf32>
    %c0_215 = arith.constant 0 : index
    %c0_216 = arith.constant 0 : index
    %716 = vector.load %arg21[%c0_215, %c0_216] : memref<16x96xf32, #tpu.memory_space<vmem>>, vector<16x96xf32>
    tpu.vector_store %arg21[%c0_215, %c0_216], %715 {strides = array<i32>} : memref<16x96xf32, #tpu.memory_space<vmem>>, vector<16x96xf32>,
    %c0_217 = arith.constant 0 : index
    %c0_218 = arith.constant 0 : index
    %717 = vector.load %arg14[%c0_217, %c0_218] : memref<32x96xf32, #tpu.memory_space<vmem>>, vector<32x96xf32>
    %c0_219 = arith.constant 0 : index
    %c0_220 = arith.constant 0 : index
    %718 = vector.load %arg16[%c0_219, %c0_220] : memref<1x32xf32, #tpu.memory_space<vmem>>, vector<1x32xf32>
    %cst_221 = arith.constant 0.000000e+00 : f32
    %719 = vector.broadcast %cst_221 : f32 to vector<2x32xf32>
    %c0_i32_222 = arith.constant 0 : i32
    %c7_i32_223 = arith.constant 7 : i32
    %720 = arith.subi %c7_i32_223, %c0_i32_222 : i32
    %c2_i32_224 = arith.constant 2 : i32
    %721 = arith.muli %720, %c2_i32_224 : i32
    %722 = arith.index_cast %721 : i32 to index
    %c0_225 = arith.constant 0 : index
    %723 = vector.load %arg21[%722, %c0_225] : memref<16x96xf32, #tpu.memory_space<vmem>>, vector<2x96xf32>
    %cst_226 = arith.constant dense<0.000000e+00> : vector<2x96xf32>
    %724 = tpu.matmul %719, %717, %cst_226 {dimension_numbers = #tpu.dot_dimension_numbers<[1], [0], [0], [1], [0, 0, 1, 1], [], []>} : vector<2x32xf32>, vector<32x96xf32>, vector<2x96xf32> -> vector<2x96xf32>
    %725 = vector.extract_strided_slice %723 {offsets = [0, 0], sizes = [2, 64], strides = [1, 1]} : vector<2x96xf32> to vector<2x64xf32>
    %726 = vector.extract_strided_slice %724 {offsets = [0, 0], sizes = [2, 64], strides = [1, 1]} : vector<2x96xf32> to vector<2x64xf32>
    %727 = arith.addf %725, %726 : vector<2x64xf32>
    %728 = arith.negf %727 : vector<2x64xf32>
    %729 = math.exp %728 : vector<2x64xf32>
    %cst_227 = arith.constant 1.000000e+00 : f32
    %730 = vector.broadcast %cst_227 : f32 to vector<2x64xf32>
    %731 = arith.addf %730, %729 : vector<2x64xf32>
    %732 = arith.divf %730, %731 : vector<2x64xf32>
    %733 = vector.extract_strided_slice %732 {offsets = [0, 0], sizes = [2, 32], strides = [1, 1]} : vector<2x64xf32> to vector<2x32xf32>
    %734 = vector.extract_strided_slice %732 {offsets = [0, 32], sizes = [2, 32], strides = [1, 1]} : vector<2x64xf32> to vector<2x32xf32>
    %735 = vector.extract_strided_slice %723 {offsets = [0, 64], sizes = [2, 32], strides = [1, 1]} : vector<2x96xf32> to vector<2x32xf32>
    %736 = vector.extract_strided_slice %724 {offsets = [0, 64], sizes = [2, 32], strides = [1, 1]} : vector<2x96xf32> to vector<2x32xf32>
    %737 = vector.broadcast %718 : vector<1x32xf32> to vector<2x32xf32>
    %738 = arith.addf %736, %737 : vector<2x32xf32>
    %739 = arith.mulf %733, %738 : vector<2x32xf32>
    %740 = arith.addf %735, %739 : vector<2x32xf32>
    %741 = math.tanh %740 : vector<2x32xf32>
    %cst_228 = arith.constant 1.000000e+00 : f32
    %742 = vector.broadcast %cst_228 : f32 to vector<2x32xf32>
    %743 = arith.subf %742, %734 : vector<2x32xf32>
    %744 = arith.mulf %743, %741 : vector<2x32xf32>
    %745 = arith.mulf %734, %719 : vector<2x32xf32>
    %746 = arith.addf %744, %745 : vector<2x32xf32>
    %747 = arith.index_cast %721 : i32 to index
    %c0_229 = arith.constant 0 : index
    %748 = vector.load %arg25[%747, %c0_229] : memref<16x32xf32, #tpu.memory_space<vmem>>, vector<2x32xf32>
    tpu.vector_store %arg25[%747, %c0_229], %746 {strides = array<i32>} : memref<16x32xf32, #tpu.memory_space<vmem>>, vector<2x32xf32>,
    %c1_i32_230 = arith.constant 1 : i32
    %c7_i32_231 = arith.constant 7 : i32
    %749 = arith.subi %c7_i32_231, %c1_i32_230 : i32
    %c2_i32_232 = arith.constant 2 : i32
    %750 = arith.muli %749, %c2_i32_232 : i32
    %751 = arith.index_cast %750 : i32 to index
    %c0_233 = arith.constant 0 : index
    %752 = vector.load %arg21[%751, %c0_233] : memref<16x96xf32, #tpu.memory_space<vmem>>, vector<2x96xf32>
    %cst_234 = arith.constant dense<0.000000e+00> : vector<2x96xf32>
    %753 = tpu.matmul %746, %717, %cst_234 {dimension_numbers = #tpu.dot_dimension_numbers<[1], [0], [0], [1], [0, 0, 1, 1], [], []>} : vector<2x32xf32>, vector<32x96xf32>, vector<2x96xf32> -> vector<2x96xf32>
    %754 = vector.extract_strided_slice %752 {offsets = [0, 0], sizes = [2, 64], strides = [1, 1]} : vector<2x96xf32> to vector<2x64xf32>
    %755 = vector.extract_strided_slice %753 {offsets = [0, 0], sizes = [2, 64], strides = [1, 1]} : vector<2x96xf32> to vector<2x64xf32>
    %756 = arith.addf %754, %755 : vector<2x64xf32>
    %757 = arith.negf %756 : vector<2x64xf32>
    %758 = math.exp %757 : vector<2x64xf32>
    %cst_235 = arith.constant 1.000000e+00 : f32
    %759 = vector.broadcast %cst_235 : f32 to vector<2x64xf32>
    %760 = arith.addf %759, %758 : vector<2x64xf32>
    %761 = arith.divf %759, %760 : vector<2x64xf32>
    %762 = vector.extract_strided_slice %761 {offsets = [0, 0], sizes = [2, 32], strides = [1, 1]} : vector<2x64xf32> to vector<2x32xf32>
    %763 = vector.extract_strided_slice %761 {offsets = [0, 32], sizes = [2, 32], strides = [1, 1]} : vector<2x64xf32> to vector<2x32xf32>
    %764 = vector.extract_strided_slice %752 {offsets = [0, 64], sizes = [2, 32], strides = [1, 1]} : vector<2x96xf32> to vector<2x32xf32>
    %765 = vector.extract_strided_slice %753 {offsets = [0, 64], sizes = [2, 32], strides = [1, 1]} : vector<2x96xf32> to vector<2x32xf32>
    %766 = vector.broadcast %718 : vector<1x32xf32> to vector<2x32xf32>
    %767 = arith.addf %765, %766 : vector<2x32xf32>
    %768 = arith.mulf %762, %767 : vector<2x32xf32>
    %769 = arith.addf %764, %768 : vector<2x32xf32>
    %770 = math.tanh %769 : vector<2x32xf32>
    %cst_236 = arith.constant 1.000000e+00 : f32
    %771 = vector.broadcast %cst_236 : f32 to vector<2x32xf32>
    %772 = arith.subf %771, %763 : vector<2x32xf32>
    %773 = arith.mulf %772, %770 : vector<2x32xf32>
    %774 = arith.mulf %763, %746 : vector<2x32xf32>
    %775 = arith.addf %773, %774 : vector<2x32xf32>
    %776 = arith.index_cast %750 : i32 to index
    %c0_237 = arith.constant 0 : index
    %777 = vector.load %arg25[%776, %c0_237] : memref<16x32xf32, #tpu.memory_space<vmem>>, vector<2x32xf32>
    tpu.vector_store %arg25[%776, %c0_237], %775 {strides = array<i32>} : memref<16x32xf32, #tpu.memory_space<vmem>>, vector<2x32xf32>,
    %c2_i32_238 = arith.constant 2 : i32
    %c7_i32_239 = arith.constant 7 : i32
    %778 = arith.subi %c7_i32_239, %c2_i32_238 : i32
    %c2_i32_240 = arith.constant 2 : i32
    %779 = arith.muli %778, %c2_i32_240 : i32
    %780 = arith.index_cast %779 : i32 to index
    %c0_241 = arith.constant 0 : index
    %781 = vector.load %arg21[%780, %c0_241] : memref<16x96xf32, #tpu.memory_space<vmem>>, vector<2x96xf32>
    %cst_242 = arith.constant dense<0.000000e+00> : vector<2x96xf32>
    %782 = tpu.matmul %775, %717, %cst_242 {dimension_numbers = #tpu.dot_dimension_numbers<[1], [0], [0], [1], [0, 0, 1, 1], [], []>} : vector<2x32xf32>, vector<32x96xf32>, vector<2x96xf32> -> vector<2x96xf32>
    %783 = vector.extract_strided_slice %781 {offsets = [0, 0], sizes = [2, 64], strides = [1, 1]} : vector<2x96xf32> to vector<2x64xf32>
    %784 = vector.extract_strided_slice %782 {offsets = [0, 0], sizes = [2, 64], strides = [1, 1]} : vector<2x96xf32> to vector<2x64xf32>
    %785 = arith.addf %783, %784 : vector<2x64xf32>
    %786 = arith.negf %785 : vector<2x64xf32>
    %787 = math.exp %786 : vector<2x64xf32>
    %cst_243 = arith.constant 1.000000e+00 : f32
    %788 = vector.broadcast %cst_243 : f32 to vector<2x64xf32>
    %789 = arith.addf %788, %787 : vector<2x64xf32>
    %790 = arith.divf %788, %789 : vector<2x64xf32>
    %791 = vector.extract_strided_slice %790 {offsets = [0, 0], sizes = [2, 32], strides = [1, 1]} : vector<2x64xf32> to vector<2x32xf32>
    %792 = vector.extract_strided_slice %790 {offsets = [0, 32], sizes = [2, 32], strides = [1, 1]} : vector<2x64xf32> to vector<2x32xf32>
    %793 = vector.extract_strided_slice %781 {offsets = [0, 64], sizes = [2, 32], strides = [1, 1]} : vector<2x96xf32> to vector<2x32xf32>
    %794 = vector.extract_strided_slice %782 {offsets = [0, 64], sizes = [2, 32], strides = [1, 1]} : vector<2x96xf32> to vector<2x32xf32>
    %795 = vector.broadcast %718 : vector<1x32xf32> to vector<2x32xf32>
    %796 = arith.addf %794, %795 : vector<2x32xf32>
    %797 = arith.mulf %791, %796 : vector<2x32xf32>
    %798 = arith.addf %793, %797 : vector<2x32xf32>
    %799 = math.tanh %798 : vector<2x32xf32>
    %cst_244 = arith.constant 1.000000e+00 : f32
    %800 = vector.broadcast %cst_244 : f32 to vector<2x32xf32>
    %801 = arith.subf %800, %792 : vector<2x32xf32>
    %802 = arith.mulf %801, %799 : vector<2x32xf32>
    %803 = arith.mulf %792, %775 : vector<2x32xf32>
    %804 = arith.addf %802, %803 : vector<2x32xf32>
    %805 = arith.index_cast %779 : i32 to index
    %c0_245 = arith.constant 0 : index
    %806 = vector.load %arg25[%805, %c0_245] : memref<16x32xf32, #tpu.memory_space<vmem>>, vector<2x32xf32>
    tpu.vector_store %arg25[%805, %c0_245], %804 {strides = array<i32>} : memref<16x32xf32, #tpu.memory_space<vmem>>, vector<2x32xf32>,
    %c3_i32_246 = arith.constant 3 : i32
    %c7_i32_247 = arith.constant 7 : i32
    %807 = arith.subi %c7_i32_247, %c3_i32_246 : i32
    %c2_i32_248 = arith.constant 2 : i32
    %808 = arith.muli %807, %c2_i32_248 : i32
    %809 = arith.index_cast %808 : i32 to index
    %c0_249 = arith.constant 0 : index
    %810 = vector.load %arg21[%809, %c0_249] : memref<16x96xf32, #tpu.memory_space<vmem>>, vector<2x96xf32>
    %cst_250 = arith.constant dense<0.000000e+00> : vector<2x96xf32>
    %811 = tpu.matmul %804, %717, %cst_250 {dimension_numbers = #tpu.dot_dimension_numbers<[1], [0], [0], [1], [0, 0, 1, 1], [], []>} : vector<2x32xf32>, vector<32x96xf32>, vector<2x96xf32> -> vector<2x96xf32>
    %812 = vector.extract_strided_slice %810 {offsets = [0, 0], sizes = [2, 64], strides = [1, 1]} : vector<2x96xf32> to vector<2x64xf32>
    %813 = vector.extract_strided_slice %811 {offsets = [0, 0], sizes = [2, 64], strides = [1, 1]} : vector<2x96xf32> to vector<2x64xf32>
    %814 = arith.addf %812, %813 : vector<2x64xf32>
    %815 = arith.negf %814 : vector<2x64xf32>
    %816 = math.exp %815 : vector<2x64xf32>
    %cst_251 = arith.constant 1.000000e+00 : f32
    %817 = vector.broadcast %cst_251 : f32 to vector<2x64xf32>
    %818 = arith.addf %817, %816 : vector<2x64xf32>
    %819 = arith.divf %817, %818 : vector<2x64xf32>
    %820 = vector.extract_strided_slice %819 {offsets = [0, 0], sizes = [2, 32], strides = [1, 1]} : vector<2x64xf32> to vector<2x32xf32>
    %821 = vector.extract_strided_slice %819 {offsets = [0, 32], sizes = [2, 32], strides = [1, 1]} : vector<2x64xf32> to vector<2x32xf32>
    %822 = vector.extract_strided_slice %810 {offsets = [0, 64], sizes = [2, 32], strides = [1, 1]} : vector<2x96xf32> to vector<2x32xf32>
    %823 = vector.extract_strided_slice %811 {offsets = [0, 64], sizes = [2, 32], strides = [1, 1]} : vector<2x96xf32> to vector<2x32xf32>
    %824 = vector.broadcast %718 : vector<1x32xf32> to vector<2x32xf32>
    %825 = arith.addf %823, %824 : vector<2x32xf32>
    %826 = arith.mulf %820, %825 : vector<2x32xf32>
    %827 = arith.addf %822, %826 : vector<2x32xf32>
    %828 = math.tanh %827 : vector<2x32xf32>
    %cst_252 = arith.constant 1.000000e+00 : f32
    %829 = vector.broadcast %cst_252 : f32 to vector<2x32xf32>
    %830 = arith.subf %829, %821 : vector<2x32xf32>
    %831 = arith.mulf %830, %828 : vector<2x32xf32>
    %832 = arith.mulf %821, %804 : vector<2x32xf32>
    %833 = arith.addf %831, %832 : vector<2x32xf32>
    %834 = arith.index_cast %808 : i32 to index
    %c0_253 = arith.constant 0 : index
    %835 = vector.load %arg25[%834, %c0_253] : memref<16x32xf32, #tpu.memory_space<vmem>>, vector<2x32xf32>
    tpu.vector_store %arg25[%834, %c0_253], %833 {strides = array<i32>} : memref<16x32xf32, #tpu.memory_space<vmem>>, vector<2x32xf32>,
    %c4_i32_254 = arith.constant 4 : i32
    %c7_i32_255 = arith.constant 7 : i32
    %836 = arith.subi %c7_i32_255, %c4_i32_254 : i32
    %c2_i32_256 = arith.constant 2 : i32
    %837 = arith.muli %836, %c2_i32_256 : i32
    %838 = arith.index_cast %837 : i32 to index
    %c0_257 = arith.constant 0 : index
    %839 = vector.load %arg21[%838, %c0_257] : memref<16x96xf32, #tpu.memory_space<vmem>>, vector<2x96xf32>
    %cst_258 = arith.constant dense<0.000000e+00> : vector<2x96xf32>
    %840 = tpu.matmul %833, %717, %cst_258 {dimension_numbers = #tpu.dot_dimension_numbers<[1], [0], [0], [1], [0, 0, 1, 1], [], []>} : vector<2x32xf32>, vector<32x96xf32>, vector<2x96xf32> -> vector<2x96xf32>
    %841 = vector.extract_strided_slice %839 {offsets = [0, 0], sizes = [2, 64], strides = [1, 1]} : vector<2x96xf32> to vector<2x64xf32>
    %842 = vector.extract_strided_slice %840 {offsets = [0, 0], sizes = [2, 64], strides = [1, 1]} : vector<2x96xf32> to vector<2x64xf32>
    %843 = arith.addf %841, %842 : vector<2x64xf32>
    %844 = arith.negf %843 : vector<2x64xf32>
    %845 = math.exp %844 : vector<2x64xf32>
    %cst_259 = arith.constant 1.000000e+00 : f32
    %846 = vector.broadcast %cst_259 : f32 to vector<2x64xf32>
    %847 = arith.addf %846, %845 : vector<2x64xf32>
    %848 = arith.divf %846, %847 : vector<2x64xf32>
    %849 = vector.extract_strided_slice %848 {offsets = [0, 0], sizes = [2, 32], strides = [1, 1]} : vector<2x64xf32> to vector<2x32xf32>
    %850 = vector.extract_strided_slice %848 {offsets = [0, 32], sizes = [2, 32], strides = [1, 1]} : vector<2x64xf32> to vector<2x32xf32>
    %851 = vector.extract_strided_slice %839 {offsets = [0, 64], sizes = [2, 32], strides = [1, 1]} : vector<2x96xf32> to vector<2x32xf32>
    %852 = vector.extract_strided_slice %840 {offsets = [0, 64], sizes = [2, 32], strides = [1, 1]} : vector<2x96xf32> to vector<2x32xf32>
    %853 = vector.broadcast %718 : vector<1x32xf32> to vector<2x32xf32>
    %854 = arith.addf %852, %853 : vector<2x32xf32>
    %855 = arith.mulf %849, %854 : vector<2x32xf32>
    %856 = arith.addf %851, %855 : vector<2x32xf32>
    %857 = math.tanh %856 : vector<2x32xf32>
    %cst_260 = arith.constant 1.000000e+00 : f32
    %858 = vector.broadcast %cst_260 : f32 to vector<2x32xf32>
    %859 = arith.subf %858, %850 : vector<2x32xf32>
    %860 = arith.mulf %859, %857 : vector<2x32xf32>
    %861 = arith.mulf %850, %833 : vector<2x32xf32>
    %862 = arith.addf %860, %861 : vector<2x32xf32>
    %863 = arith.index_cast %837 : i32 to index
    %c0_261 = arith.constant 0 : index
    %864 = vector.load %arg25[%863, %c0_261] : memref<16x32xf32, #tpu.memory_space<vmem>>, vector<2x32xf32>
    tpu.vector_store %arg25[%863, %c0_261], %862 {strides = array<i32>} : memref<16x32xf32, #tpu.memory_space<vmem>>, vector<2x32xf32>,
    %c5_i32_262 = arith.constant 5 : i32
    %c7_i32_263 = arith.constant 7 : i32
    %865 = arith.subi %c7_i32_263, %c5_i32_262 : i32
    %c2_i32_264 = arith.constant 2 : i32
    %866 = arith.muli %865, %c2_i32_264 : i32
    %867 = arith.index_cast %866 : i32 to index
    %c0_265 = arith.constant 0 : index
    %868 = vector.load %arg21[%867, %c0_265] : memref<16x96xf32, #tpu.memory_space<vmem>>, vector<2x96xf32>
    %cst_266 = arith.constant dense<0.000000e+00> : vector<2x96xf32>
    %869 = tpu.matmul %862, %717, %cst_266 {dimension_numbers = #tpu.dot_dimension_numbers<[1], [0], [0], [1], [0, 0, 1, 1], [], []>} : vector<2x32xf32>, vector<32x96xf32>, vector<2x96xf32> -> vector<2x96xf32>
    %870 = vector.extract_strided_slice %868 {offsets = [0, 0], sizes = [2, 64], strides = [1, 1]} : vector<2x96xf32> to vector<2x64xf32>
    %871 = vector.extract_strided_slice %869 {offsets = [0, 0], sizes = [2, 64], strides = [1, 1]} : vector<2x96xf32> to vector<2x64xf32>
    %872 = arith.addf %870, %871 : vector<2x64xf32>
    %873 = arith.negf %872 : vector<2x64xf32>
    %874 = math.exp %873 : vector<2x64xf32>
    %cst_267 = arith.constant 1.000000e+00 : f32
    %875 = vector.broadcast %cst_267 : f32 to vector<2x64xf32>
    %876 = arith.addf %875, %874 : vector<2x64xf32>
    %877 = arith.divf %875, %876 : vector<2x64xf32>
    %878 = vector.extract_strided_slice %877 {offsets = [0, 0], sizes = [2, 32], strides = [1, 1]} : vector<2x64xf32> to vector<2x32xf32>
    %879 = vector.extract_strided_slice %877 {offsets = [0, 32], sizes = [2, 32], strides = [1, 1]} : vector<2x64xf32> to vector<2x32xf32>
    %880 = vector.extract_strided_slice %868 {offsets = [0, 64], sizes = [2, 32], strides = [1, 1]} : vector<2x96xf32> to vector<2x32xf32>
    %881 = vector.extract_strided_slice %869 {offsets = [0, 64], sizes = [2, 32], strides = [1, 1]} : vector<2x96xf32> to vector<2x32xf32>
    %882 = vector.broadcast %718 : vector<1x32xf32> to vector<2x32xf32>
    %883 = arith.addf %881, %882 : vector<2x32xf32>
    %884 = arith.mulf %878, %883 : vector<2x32xf32>
    %885 = arith.addf %880, %884 : vector<2x32xf32>
    %886 = math.tanh %885 : vector<2x32xf32>
    %cst_268 = arith.constant 1.000000e+00 : f32
    %887 = vector.broadcast %cst_268 : f32 to vector<2x32xf32>
    %888 = arith.subf %887, %879 : vector<2x32xf32>
    %889 = arith.mulf %888, %886 : vector<2x32xf32>
    %890 = arith.mulf %879, %862 : vector<2x32xf32>
    %891 = arith.addf %889, %890 : vector<2x32xf32>
    %892 = arith.index_cast %866 : i32 to index
    %c0_269 = arith.constant 0 : index
    %893 = vector.load %arg25[%892, %c0_269] : memref<16x32xf32, #tpu.memory_space<vmem>>, vector<2x32xf32>
    tpu.vector_store %arg25[%892, %c0_269], %891 {strides = array<i32>} : memref<16x32xf32, #tpu.memory_space<vmem>>, vector<2x32xf32>,
    %c6_i32_270 = arith.constant 6 : i32
    %c7_i32_271 = arith.constant 7 : i32
    %894 = arith.subi %c7_i32_271, %c6_i32_270 : i32
    %c2_i32_272 = arith.constant 2 : i32
    %895 = arith.muli %894, %c2_i32_272 : i32
    %896 = arith.index_cast %895 : i32 to index
    %c0_273 = arith.constant 0 : index
    %897 = vector.load %arg21[%896, %c0_273] : memref<16x96xf32, #tpu.memory_space<vmem>>, vector<2x96xf32>
    %cst_274 = arith.constant dense<0.000000e+00> : vector<2x96xf32>
    %898 = tpu.matmul %891, %717, %cst_274 {dimension_numbers = #tpu.dot_dimension_numbers<[1], [0], [0], [1], [0, 0, 1, 1], [], []>} : vector<2x32xf32>, vector<32x96xf32>, vector<2x96xf32> -> vector<2x96xf32>
    %899 = vector.extract_strided_slice %897 {offsets = [0, 0], sizes = [2, 64], strides = [1, 1]} : vector<2x96xf32> to vector<2x64xf32>
    %900 = vector.extract_strided_slice %898 {offsets = [0, 0], sizes = [2, 64], strides = [1, 1]} : vector<2x96xf32> to vector<2x64xf32>
    %901 = arith.addf %899, %900 : vector<2x64xf32>
    %902 = arith.negf %901 : vector<2x64xf32>
    %903 = math.exp %902 : vector<2x64xf32>
    %cst_275 = arith.constant 1.000000e+00 : f32
    %904 = vector.broadcast %cst_275 : f32 to vector<2x64xf32>
    %905 = arith.addf %904, %903 : vector<2x64xf32>
    %906 = arith.divf %904, %905 : vector<2x64xf32>
    %907 = vector.extract_strided_slice %906 {offsets = [0, 0], sizes = [2, 32], strides = [1, 1]} : vector<2x64xf32> to vector<2x32xf32>
    %908 = vector.extract_strided_slice %906 {offsets = [0, 32], sizes = [2, 32], strides = [1, 1]} : vector<2x64xf32> to vector<2x32xf32>
    %909 = vector.extract_strided_slice %897 {offsets = [0, 64], sizes = [2, 32], strides = [1, 1]} : vector<2x96xf32> to vector<2x32xf32>
    %910 = vector.extract_strided_slice %898 {offsets = [0, 64], sizes = [2, 32], strides = [1, 1]} : vector<2x96xf32> to vector<2x32xf32>
    %911 = vector.broadcast %718 : vector<1x32xf32> to vector<2x32xf32>
    %912 = arith.addf %910, %911 : vector<2x32xf32>
    %913 = arith.mulf %907, %912 : vector<2x32xf32>
    %914 = arith.addf %909, %913 : vector<2x32xf32>
    %915 = math.tanh %914 : vector<2x32xf32>
    %cst_276 = arith.constant 1.000000e+00 : f32
    %916 = vector.broadcast %cst_276 : f32 to vector<2x32xf32>
    %917 = arith.subf %916, %908 : vector<2x32xf32>
    %918 = arith.mulf %917, %915 : vector<2x32xf32>
    %919 = arith.mulf %908, %891 : vector<2x32xf32>
    %920 = arith.addf %918, %919 : vector<2x32xf32>
    %921 = arith.index_cast %895 : i32 to index
    %c0_277 = arith.constant 0 : index
    %922 = vector.load %arg25[%921, %c0_277] : memref<16x32xf32, #tpu.memory_space<vmem>>, vector<2x32xf32>
    tpu.vector_store %arg25[%921, %c0_277], %920 {strides = array<i32>} : memref<16x32xf32, #tpu.memory_space<vmem>>, vector<2x32xf32>,
    %c7_i32_278 = arith.constant 7 : i32
    %c7_i32_279 = arith.constant 7 : i32
    %923 = arith.subi %c7_i32_279, %c7_i32_278 : i32
    %c2_i32_280 = arith.constant 2 : i32
    %924 = arith.muli %923, %c2_i32_280 : i32
    %925 = arith.index_cast %924 : i32 to index
    %c0_281 = arith.constant 0 : index
    %926 = vector.load %arg21[%925, %c0_281] : memref<16x96xf32, #tpu.memory_space<vmem>>, vector<2x96xf32>
    %cst_282 = arith.constant dense<0.000000e+00> : vector<2x96xf32>
    %927 = tpu.matmul %920, %717, %cst_282 {dimension_numbers = #tpu.dot_dimension_numbers<[1], [0], [0], [1], [0, 0, 1, 1], [], []>} : vector<2x32xf32>, vector<32x96xf32>, vector<2x96xf32> -> vector<2x96xf32>
    %928 = vector.extract_strided_slice %926 {offsets = [0, 0], sizes = [2, 64], strides = [1, 1]} : vector<2x96xf32> to vector<2x64xf32>
    %929 = vector.extract_strided_slice %927 {offsets = [0, 0], sizes = [2, 64], strides = [1, 1]} : vector<2x96xf32> to vector<2x64xf32>
    %930 = arith.addf %928, %929 : vector<2x64xf32>
    %931 = arith.negf %930 : vector<2x64xf32>
    %932 = math.exp %931 : vector<2x64xf32>
    %cst_283 = arith.constant 1.000000e+00 : f32
    %933 = vector.broadcast %cst_283 : f32 to vector<2x64xf32>
    %934 = arith.addf %933, %932 : vector<2x64xf32>
    %935 = arith.divf %933, %934 : vector<2x64xf32>
    %936 = vector.extract_strided_slice %935 {offsets = [0, 0], sizes = [2, 32], strides = [1, 1]} : vector<2x64xf32> to vector<2x32xf32>
    %937 = vector.extract_strided_slice %935 {offsets = [0, 32], sizes = [2, 32], strides = [1, 1]} : vector<2x64xf32> to vector<2x32xf32>
    %938 = vector.extract_strided_slice %926 {offsets = [0, 64], sizes = [2, 32], strides = [1, 1]} : vector<2x96xf32> to vector<2x32xf32>
    %939 = vector.extract_strided_slice %927 {offsets = [0, 64], sizes = [2, 32], strides = [1, 1]} : vector<2x96xf32> to vector<2x32xf32>
    %940 = vector.broadcast %718 : vector<1x32xf32> to vector<2x32xf32>
    %941 = arith.addf %939, %940 : vector<2x32xf32>
    %942 = arith.mulf %936, %941 : vector<2x32xf32>
    %943 = arith.addf %938, %942 : vector<2x32xf32>
    %944 = math.tanh %943 : vector<2x32xf32>
    %cst_284 = arith.constant 1.000000e+00 : f32
    %945 = vector.broadcast %cst_284 : f32 to vector<2x32xf32>
    %946 = arith.subf %945, %937 : vector<2x32xf32>
    %947 = arith.mulf %946, %944 : vector<2x32xf32>
    %948 = arith.mulf %937, %920 : vector<2x32xf32>
    %949 = arith.addf %947, %948 : vector<2x32xf32>
    %950 = arith.index_cast %924 : i32 to index
    %c0_285 = arith.constant 0 : index
    %951 = vector.load %arg25[%950, %c0_285] : memref<16x32xf32, #tpu.memory_space<vmem>>, vector<2x32xf32>
    tpu.vector_store %arg25[%950, %c0_285], %949 {strides = array<i32>} : memref<16x32xf32, #tpu.memory_space<vmem>>, vector<2x32xf32>,
    %c8_i32_286 = arith.constant 8 : i32
    %c0_287 = arith.constant 0 : index
    %c0_288 = arith.constant 0 : index
    %952 = vector.load %arg24[%c0_287, %c0_288] : memref<16x32xf32, #tpu.memory_space<vmem>>, vector<16x32xf32>
    %c0_289 = arith.constant 0 : index
    %c0_290 = arith.constant 0 : index
    %953 = vector.load %arg25[%c0_289, %c0_290] : memref<16x32xf32, #tpu.memory_space<vmem>>, vector<16x32xf32>
    %954 = tpu.concatenate %952, %953 in 1 : vector<16x32xf32>, vector<16x32xf32> -> vector<16x64xf32>
    %c0_291 = arith.constant 0 : index
    %c0_292 = arith.constant 0 : index
    %955 = vector.load %arg19[%c0_291, %c0_292] : memref<16x64xf32, #tpu.memory_space<vmem>>, vector<16x64xf32>
    tpu.vector_store %arg19[%c0_291, %c0_292], %954 {strides = array<i32>} : memref<16x64xf32, #tpu.memory_space<vmem>>, vector<16x64xf32>,
    %956 = tpu.concatenate %231, %472 in 1 : vector<2x32xf32>, vector<2x32xf32> -> vector<2x64xf32>
    %957 = tpu.concatenate %708, %949 in 1 : vector<2x32xf32>, vector<2x32xf32> -> vector<2x64xf32>
    %958 = tpu.concatenate %956, %957 in 0 : vector<2x64xf32>, vector<2x64xf32> -> vector<4x64xf32>
    %c0_293 = arith.constant 0 : index
    %c0_294 = arith.constant 0 : index
    %959 = vector.load %arg17[%c0_293, %c0_294] : memref<64x32xf32, #tpu.memory_space<vmem>>, vector<64x32xf32>
    %cst_295 = arith.constant dense<0.000000e+00> : vector<4x32xf32>
    %960 = tpu.matmul %958, %959, %cst_295 {dimension_numbers = #tpu.dot_dimension_numbers<[1], [0], [0], [1], [0, 0, 1, 1], [], []>} : vector<4x64xf32>, vector<64x32xf32>, vector<4x32xf32> -> vector<4x32xf32>
    %c0_296 = arith.constant 0 : index
    %c0_297 = arith.constant 0 : index
    %961 = vector.load %arg18[%c0_296, %c0_297] : memref<1x32xf32, #tpu.memory_space<vmem>>, vector<1x32xf32>
    %962 = vector.broadcast %961 : vector<1x32xf32> to vector<4x32xf32>
    %963 = arith.addf %960, %962 : vector<4x32xf32>
    %964 = math.tanh %963 : vector<4x32xf32>
    %965 = vector.extract_strided_slice %964 {offsets = [0, 0], sizes = [2, 32], strides = [1, 1]} : vector<4x32xf32> to vector<2x32xf32>
    %966 = vector.extract_strided_slice %964 {offsets = [2, 0], sizes = [2, 32], strides = [1, 1]} : vector<4x32xf32> to vector<2x32xf32>
    %967 = tpu.concatenate %965, %966 in 1 : vector<2x32xf32>, vector<2x32xf32> -> vector<2x64xf32>
    %c0_298 = arith.constant 0 : index
    %c0_299 = arith.constant 0 : index
    %968 = vector.load %arg20[%c0_298, %c0_299] : memref<2x64xf32, #tpu.memory_space<vmem>>, vector<2x64xf32>
    tpu.vector_store %arg20[%c0_298, %c0_299], %967 {strides = array<i32>} : memref<2x64xf32, #tpu.memory_space<vmem>>, vector<2x64xf32>,
    return
  }
}

</mosaic_0001>

<llo_original>
// kernel: encoder_forward.1
$region0: #{encoder_forward.1}
  #allocation0 [shape = 'u32[]', space=smem, size = 0x4, offset = 0x4, fixed_abs, tag = 'smem constant byte address 0x4 - core index']
  #allocation1 [shape = 'u32[144,128]{1,0:T(1,128)}', space=vmem, size = 0x12000, scoped, tag = 'internal scratch']
  #allocation2 [shape = 'f32[16,96]{1,0:T(8,128)}', space=vmem, size = 0x2000, scoped, tag = 'scratch operand']
  #allocation3 [shape = 'f32[16,32]{1,0:T(8,128)}', space=vmem, size = 0x2000, scoped, tag = 'scratch operand']
  #allocation4 [shape = 'f32[16,32]{1,0:T(8,128)}', space=vmem, size = 0x2000, scoped, tag = 'scratch operand']
  #allocation5 [shape = 'f32[16,32]{1,0:T(8,128)}', space=vmem, size = 0x2000, scoped, tag = 'scratch operand']
  #allocation6 [shape = 'f32[16,32]{1,0:T(8,128)}', space=vmem, size = 0x2000, scoped, tag = 'scratch operand']
  %s0 = inlined_call_operand.vmem [shape: f32[16,32], index: 0, kind: input, shape index: {}]
  %s1 = inlined_call_operand.vmem [shape: f32[32,96], index: 1, kind: input, shape index: {}]
  %s2 = inlined_call_operand.hbm [shape: f32[32,96], index: 2, kind: input, shape index: {}]
  %s3 = inlined_call_operand.hbm [shape: f32[1,96], index: 3, kind: input, shape index: {}]
  %s4 = inlined_call_operand.hbm [shape: f32[1,32], index: 4, kind: input, shape index: {}]
  %s5 = inlined_call_operand.hbm [shape: f32[32,96], index: 5, kind: input, shape index: {}]
  %s6 = inlined_call_operand.hbm [shape: f32[32,96], index: 6, kind: input, shape index: {}]
  %s7 = inlined_call_operand.hbm [shape: f32[1,96], index: 7, kind: input, shape index: {}]
  %s8 = inlined_call_operand.hbm [shape: f32[1,32], index: 8, kind: input, shape index: {}]
  %s9 = inlined_call_operand.vmem [shape: f32[64,96], index: 9, kind: input, shape index: {}]
  %s10 = inlined_call_operand.vmem [shape: f32[32,96], index: 10, kind: input, shape index: {}]
  %s11 = inlined_call_operand.vmem [shape: f32[1,96], index: 11, kind: input, shape index: {}]
  %s12 = inlined_call_operand.vmem [shape: f32[1,32], index: 12, kind: input, shape index: {}]
  %s13 = inlined_call_operand.vmem [shape: f32[64,96], index: 13, kind: input, shape index: {}]
  %s14 = inlined_call_operand.hbm [shape: f32[32,96], index: 14, kind: input, shape index: {}]
  %s15 = inlined_call_operand.hbm [shape: f32[1,96], index: 15, kind: input, shape index: {}]
  %s16 = inlined_call_operand.hbm [shape: f32[1,32], index: 16, kind: input, shape index: {}]
  %s17 = inlined_call_operand.vmem [shape: f32[64,32], index: 17, kind: input, shape index: {}]
  %s18 = inlined_call_operand.hbm [shape: f32[1,32], index: 18, kind: input, shape index: {}]
  %s19 = inlined_call_operand.vmem [shape: f32[16,64], index: 19, kind: output, shape index: {0}]
  %s20 = inlined_call_operand.hbm [shape: f32[2,64], index: 20, kind: output, shape index: {1}]
  %21 = xla_tuple %s19, %s20
  %s22 = sld [smem:[#allocation0]]
  $region138: #{encoder_forward.1} parent=0
    _
  %s24 = ssub.s32 1, %s22
  %s25 = scalar_select 0, %s24, %s22
  $region1: #{encoder_forward.1} parent=0
    #allocation7 [shape = 'u8[16384]{0}', space=vmem, size = 0x4000, scoped, tag = 'input window, operand 2, single buffered']
    #allocation8 [shape = 's32[1]{0}', space=sflag, size = 0x4, scoped, tag = 'scoped memory for encoder_forward.1']
    #allocation9 [shape = 's32[1]{0}', space=sflag, size = 0x4, scoped, tag = 'scoped memory for encoder_forward.1']
    #allocation10 [shape = 'u8[512]{0}', space=vmem, size = 0x400, scoped, tag = 'input window, operand 3, single buffered']
    #allocation11 [shape = 's32[1]{0}', space=sflag, size = 0x4, scoped, tag = 'scoped memory for encoder_forward.1']
    #allocation12 [shape = 'u8[512]{0}', space=vmem, size = 0x400, scoped, tag = 'input window, operand 4, single buffered']
    #allocation13 [shape = 'u8[16384]{0}', space=vmem, size = 0x4000, scoped, tag = 'input window, operand 5, single buffered']
    #allocation14 [shape = 's32[1]{0}', space=sflag, size = 0x4, scoped, tag = 'scoped memory for encoder_forward.1']
    #allocation15 [shape = 'u8[16384]{0}', space=vmem, size = 0x4000, scoped, tag = 'input window, operand 6, single buffered']
    #allocation16 [shape = 'u8[512]{0}', space=vmem, size = 0x400, scoped, tag = 'input window, operand 7, single buffered']
    #allocation17 [shape = 's32[1]{0}', space=sflag, size = 0x4, scoped, tag = 'scoped memory for encoder_forward.1']
    #allocation18 [shape = 'u8[512]{0}', space=vmem, size = 0x400, scoped, tag = 'input window, operand 8, single buffered']
    #allocation19 [shape = 'u8[16384]{0}', space=vmem, size = 0x4000, scoped, tag = 'input window, operand 14, single buffered']
    #allocation20 [shape = 's32[1]{0}', space=sflag, size = 0x4, scoped, tag = 'scoped memory for encoder_forward.1']
    #allocation21 [shape = 'u8[512]{0}', space=vmem, size = 0x400, scoped, tag = 'input window, operand 15, single buffered']
    #allocation22 [shape = 'u8[512]{0}', space=vmem, size = 0x400, scoped, tag = 'input window, operand 16, single buffered']
    #allocation23 [shape = 's32[1]{0}', space=sflag, size = 0x4, scoped, tag = 'scoped memory for encoder_forward.1']
    #allocation24 [shape = 'u8[512]{0}', space=vmem, size = 0x400, scoped, tag = 'input window, operand 18, single buffered']
    #allocation25 [shape = 'u8[1024]{0}', space=vmem, size = 0x400, scoped, tag = 'output window, operand 1, single buffered']
    %26 = vsyncpa [#allocation8], 0
    %27 = vsyncpa [#allocation11], 0
    %28 = vsyncpa [#allocation14], 0
    %29 = vsyncpa [#allocation17], 0
    %30 = vsyncpa [#allocation20], 0
    %31 = vsyncpa [#allocation23], 0
    %32 = vsyncpa [#allocation9], 0
    // Predicated region
    $region2: #{encoder_forward.1} parent=1 // pred_check
      _
    $region3: #{encoder_forward.1} parent=1 // pred_check_branch
      %34 = sbr.rel (0) target = $region5
    $region4: #{encoder_forward.1} parent=1 // pred_region
      _
    $region5: #{encoder_forward.1} parent=1 // pred_fallthru
      _
    // Predicated region
    $region6: #{encoder_forward.1} parent=1 // pred_check
      _
    $region7: #{encoder_forward.1} parent=1 // pred_check_branch
      %36 = sbr.rel (0) target = $region9
    $region8: #{encoder_forward.1} parent=1 // pred_region
      _
    $region9: #{encoder_forward.1} parent=1 // pred_fallthru
      _
    // Predicated region
    $region10: #{encoder_forward.1} parent=1 // pred_check
      _
    $region11: #{encoder_forward.1} parent=1 // pred_check_branch
      %38 = sbr.rel (0) target = $region13
    $region12: #{encoder_forward.1} parent=1 // pred_region
      %s40 = ssub.s32 512, 512
      %41 = vsyncadd [#allocation8], %s40
      %s42 = sshll.u32 [#allocation7], 4
      %s43 = int_to_ptr.vmem [resolvable:$true] %s42
      %48 = dma.hbm_to_vmem [thread:$0]  %s2, 512, %s43, [#allocation8], 128, 128, 8
    $region13: #{encoder_forward.1} parent=1 // pred_fallthru
      _
    // Predicated region
    $region14: #{encoder_forward.1} parent=1 // pred_check
      _
    $region15: #{encoder_forward.1} parent=1 // pred_check_branch
      %50 = sbr.rel (0) target = $region17
    $region16: #{encoder_forward.1} parent=1 // pred_region
      %s52 = ssub.s32 16, 16
      %53 = vsyncadd [#allocation11], %s52
      %s55 = sshll.u32 [#allocation10], 4
      %s56 = int_to_ptr.vmem [resolvable:$true] %s55
      %58 = dma.hbm_to_vmem [thread:$0]  %s3, 16, %s56, [#allocation11]
    $region17: #{encoder_forward.1} parent=1 // pred_fallthru
      _
    // Predicated region
    $region18: #{encoder_forward.1} parent=1 // pred_check
      _
    $region19: #{encoder_forward.1} parent=1 // pred_check_branch
      %60 = sbr.rel (0) target = $region21
    $region20: #{encoder_forward.1} parent=1 // pred_region
      %s62 = ssub.s32 16, 16
      %63 = vsyncadd [#allocation11], %s62
      %s65 = sshll.u32 [#allocation12], 4
      %s66 = int_to_ptr.vmem [resolvable:$true] %s65
      %68 = dma.hbm_to_vmem [thread:$0]  %s4, 16, %s66, [#allocation11]
    $region21: #{encoder_forward.1} parent=1 // pred_fallthru
      _
    // Predicated region
    $region22: #{encoder_forward.1} parent=1 // pred_check
      _
    $region23: #{encoder_forward.1} parent=1 // pred_check_branch
      %70 = sbr.rel (0) target = $region25
    $region24: #{encoder_forward.1} parent=1 // pred_region
      %s72 = ssub.s32 512, 512
      %73 = vsyncadd [#allocation14], %s72
      %s74 = sshll.u32 [#allocation13], 4
      %s75 = int_to_ptr.vmem [resolvable:$true] %s74
      %80 = dma.hbm_to_vmem [thread:$0]  %s5, 512, %s75, [#allocation14], 128, 128, 8
    $region25: #{encoder_forward.1} parent=1 // pred_fallthru
      _
    // Predicated region
    $region26: #{encoder_forward.1} parent=1 // pred_check
      _
    $region27: #{encoder_forward.1} parent=1 // pred_check_branch
      %82 = sbr.rel (0) target = $region29
    $region28: #{encoder_forward.1} parent=1 // pred_region
      %s84 = ssub.s32 512, 512
      %85 = vsyncadd [#allocation14], %s84
      %s86 = sshll.u32 [#allocation15], 4
      %s87 = int_to_ptr.vmem [resolvable:$true] %s86
      %92 = dma.hbm_to_vmem [thread:$0]  %s6, 512, %s87, [#allocation14], 128, 128, 8
    $region29: #{encoder_forward.1} parent=1 // pred_fallthru
      _
    // Predicated region
    $region30: #{encoder_forward.1} parent=1 // pred_check
      _
    $region31: #{encoder_forward.1} parent=1 // pred_check_branch
      %94 = sbr.rel (0) target = $region33
    $region32: #{encoder_forward.1} parent=1 // pred_region
      %s96 = ssub.s32 16, 16
      %97 = vsyncadd [#allocation17], %s96
      %s99 = sshll.u32 [#allocation16], 4
      %s100 = int_to_ptr.vmem [resolvable:$true] %s99
      %102 = dma.hbm_to_vmem [thread:$0]  %s7, 16, %s100, [#allocation17]
    $region33: #{encoder_forward.1} parent=1 // pred_fallthru
      _
    // Predicated region
    $region34: #{encoder_forward.1} parent=1 // pred_check
      _
    $region35: #{encoder_forward.1} parent=1 // pred_check_branch
      %104 = sbr.rel (0) target = $region37
    $region36: #{encoder_forward.1} parent=1 // pred_region
      %s106 = ssub.s32 16, 16
      %107 = vsyncadd [#allocation17], %s106
      %s109 = sshll.u32 [#allocation18], 4
      %s110 = int_to_ptr.vmem [resolvable:$true] %s109
      %112 = dma.hbm_to_vmem [thread:$0]  %s8, 16, %s110, [#allocation17]
    $region37: #{encoder_forward.1} parent=1 // pred_fallthru
      _
    // Predicated region
    $region38: #{encoder_forward.1} parent=1 // pred_check
      _
    $region39: #{encoder_forward.1} parent=1 // pred_check_branch
      %114 = sbr.rel (0) target = $region41
    $region40: #{encoder_forward.1} parent=1 // pred_region
      _
    $region41: #{encoder_forward.1} parent=1 // pred_fallthru
      _
    // Predicated region
    $region42: #{encoder_forward.1} parent=1 // pred_check
      _
    $region43: #{encoder_forward.1} parent=1 // pred_check_branch
      %116 = sbr.rel (0) target = $region45
    $region44: #{encoder_forward.1} parent=1 // pred_region
      _
    $region45: #{encoder_forward.1} parent=1 // pred_fallthru
      _
    // Predicated region
    $region46: #{encoder_forward.1} parent=1 // pred_check
      _
    $region47: #{encoder_forward.1} parent=1 // pred_check_branch
      %118 = sbr.rel (0) target = $region49
    $region48: #{encoder_forward.1} parent=1 // pred_region
      _
    $region49: #{encoder_forward.1} parent=1 // pred_fallthru
      _
    // Predicated region
    $region50: #{encoder_forward.1} parent=1 // pred_check
      _
    $region51: #{encoder_forward.1} parent=1 // pred_check_branch
      %120 = sbr.rel (0) target = $region53
    $region52: #{encoder_forward.1} parent=1 // pred_region
      _
    $region53: #{encoder_forward.1} parent=1 // pred_fallthru
      _
    // Predicated region
    $region54: #{encoder_forward.1} parent=1 // pred_check
      _
    $region55: #{encoder_forward.1} parent=1 // pred_check_branch
      %122 = sbr.rel (0) target = $region57
    $region56: #{encoder_forward.1} parent=1 // pred_region
      _
    $region57: #{encoder_forward.1} parent=1 // pred_fallthru
      _
    // Predicated region
    $region58: #{encoder_forward.1} parent=1 // pred_check
      _
    $region59: #{encoder_forward.1} parent=1 // pred_check_branch
      %124 = sbr.rel (0) target = $region61
    $region60: #{encoder_forward.1} parent=1 // pred_region
      %s126 = ssub.s32 512, 512
      %127 = vsyncadd [#allocation20], %s126
      %s128 = sshll.u32 [#allocation19], 4
      %s129 = int_to_ptr.vmem [resolvable:$true] %s128
      %134 = dma.hbm_to_vmem [thread:$0]  %s14, 512, %s129, [#allocation20], 128, 128, 8
    $region61: #{encoder_forward.1} parent=1 // pred_fallthru
      _
    // Predicated region
    $region62: #{encoder_forward.1} parent=1 // pred_check
      _
    $region63: #{encoder_forward.1} parent=1 // pred_check_branch
      %136 = sbr.rel (0) target = $region65
    $region64: #{encoder_forward.1} parent=1 // pred_region
      %s138 = ssub.s32 16, 16
      %139 = vsyncadd [#allocation20], %s138
      %s141 = sshll.u32 [#allocation21], 4
      %s142 = int_to_ptr.vmem [resolvable:$true] %s141
      %144 = dma.hbm_to_vmem [thread:$0]  %s15, 16, %s142, [#allocation20]
    $region65: #{encoder_forward.1} parent=1 // pred_fallthru
      _
    // Predicated region
    $region66: #{encoder_forward.1} parent=1 // pred_check
      _
    $region67: #{encoder_forward.1} parent=1 // pred_check_branch
      %146 = sbr.rel (0) target = $region69
    $region68: #{encoder_forward.1} parent=1 // pred_region
      %s148 = ssub.s32 16, 16
      %149 = vsyncadd [#allocation23], %s148
      %s151 = sshll.u32 [#allocation22], 4
      %s152 = int_to_ptr.vmem [resolvable:$true] %s151
      %154 = dma.hbm_to_vmem [thread:$0]  %s16, 16, %s152, [#allocation23]
    $region69: #{encoder_forward.1} parent=1 // pred_fallthru
      _
    // Predicated region
    $region70: #{encoder_forward.1} parent=1 // pred_check
      _
    $region71: #{encoder_forward.1} parent=1 // pred_check_branch
      %156 = sbr.rel (0) target = $region73
    $region72: #{encoder_forward.1} parent=1 // pred_region
      _
    $region73: #{encoder_forward.1} parent=1 // pred_fallthru
      _
    // Predicated region
    $region74: #{encoder_forward.1} parent=1 // pred_check
      _
    $region75: #{encoder_forward.1} parent=1 // pred_check_branch
      %158 = sbr.rel (0) target = $region77
    $region76: #{encoder_forward.1} parent=1 // pred_region
      %s160 = ssub.s32 16, 16
      %161 = vsyncadd [#allocation23], %s160
      %s163 = sshll.u32 [#allocation24], 4
      %s164 = int_to_ptr.vmem [resolvable:$true] %s163
      %166 = dma.hbm_to_vmem [thread:$0]  %s18, 16, %s164, [#allocation23]
    $region77: #{encoder_forward.1} parent=1 // pred_fallthru
      _
    // Predicated region
    $region78: #{encoder_forward.1} parent=1 // pred_check
      _
    $region79: #{encoder_forward.1} parent=1 // pred_check_branch
      %168 = sbr.rel (0) target = $region81
    $region80: #{encoder_forward.1} parent=1 // pred_region
      %169 = dma.done [#allocation8], 512
    $region81: #{encoder_forward.1} parent=1 // pred_fallthru
      _
    // Predicated region
    $region82: #{encoder_forward.1} parent=1 // pred_check
      _
    $region83: #{encoder_forward.1} parent=1 // pred_check_branch
      %171 = sbr.rel (0) target = $region85
    $region84: #{encoder_forward.1} parent=1 // pred_region
      %172 = dma.done [#allocation11], 16
    $region85: #{encoder_forward.1} parent=1 // pred_fallthru
      _
    // Predicated region
    $region86: #{encoder_forward.1} parent=1 // pred_check
      _
    $region87: #{encoder_forward.1} parent=1 // pred_check_branch
      %174 = sbr.rel (0) target = $region89
    $region88: #{encoder_forward.1} parent=1 // pred_region
      %175 = dma.done [#allocation11], 16
    $region89: #{encoder_forward.1} parent=1 // pred_fallthru
      _
    // Predicated region
    $region90: #{encoder_forward.1} parent=1 // pred_check
      _
    $region91: #{encoder_forward.1} parent=1 // pred_check_branch
      %177 = sbr.rel (0) target = $region93
    $region92: #{encoder_forward.1} parent=1 // pred_region
      %178 = dma.done [#allocation14], 512
    $region93: #{encoder_forward.1} parent=1 // pred_fallthru
      _
    // Predicated region
    $region94: #{encoder_forward.1} parent=1 // pred_check
      _
    $region95: #{encoder_forward.1} parent=1 // pred_check_branch
      %180 = sbr.rel (0) target = $region97
    $region96: #{encoder_forward.1} parent=1 // pred_region
      %181 = dma.done [#allocation14], 512
    $region97: #{encoder_forward.1} parent=1 // pred_fallthru
      _
    // Predicated region
    $region98: #{encoder_forward.1} parent=1 // pred_check
      _
    $region99: #{encoder_forward.1} parent=1 // pred_check_branch
      %183 = sbr.rel (0) target = $region101
    $region100: #{encoder_forward.1} parent=1 // pred_region
      %184 = dma.done [#allocation17], 16
    $region101: #{encoder_forward.1} parent=1 // pred_fallthru
      _
    // Predicated region
    $region102: #{encoder_forward.1} parent=1 // pred_check
      _
    $region103: #{encoder_forward.1} parent=1 // pred_check_branch
      %186 = sbr.rel (0) target = $region105
    $region104: #{encoder_forward.1} parent=1 // pred_region
      %187 = dma.done [#allocation17], 16
    $region105: #{encoder_forward.1} parent=1 // pred_fallthru
      _
    // Predicated region
    $region106: #{encoder_forward.1} parent=1 // pred_check
      _
    $region107: #{encoder_forward.1} parent=1 // pred_check_branch
      %189 = sbr.rel (0) target = $region109
    $region108: #{encoder_forward.1} parent=1 // pred_region
      %190 = dma.done [#allocation20], 512
    $region109: #{encoder_forward.1} parent=1 // pred_fallthru
      _
    // Predicated region
    $region110: #{encoder_forward.1} parent=1 // pred_check
      _
    $region111: #{encoder_forward.1} parent=1 // pred_check_branch
      %192 = sbr.rel (0) target = $region113
    $region112: #{encoder_forward.1} parent=1 // pred_region
      %193 = dma.done [#allocation20], 16
    $region113: #{encoder_forward.1} parent=1 // pred_fallthru
      _
    // Predicated region
    $region114: #{encoder_forward.1} parent=1 // pred_check
      _
    $region115: #{encoder_forward.1} parent=1 // pred_check_branch
      %195 = sbr.rel (0) target = $region117
    $region116: #{encoder_forward.1} parent=1 // pred_region
      %196 = dma.done [#allocation23], 16
    $region117: #{encoder_forward.1} parent=1 // pred_fallthru
      _
    // Predicated region
    $region118: #{encoder_forward.1} parent=1 // pred_check
      _
    $region119: #{encoder_forward.1} parent=1 // pred_check_branch
      %198 = sbr.rel (0) target = $region121
    $region120: #{encoder_forward.1} parent=1 // pred_region
      %199 = dma.done [#allocation23], 16
    $region121: #{encoder_forward.1} parent=1 // pred_fallthru
      _
    %v200 = vld [vmem:[%s0] sm:$0xff]
    %v201 = vld [vmem:[%s0 + $0x8] sm:$0xff]
    %v202 = vld [vmem:[%s1] sm:$0xff]
    %v203 = vld [vmem:[%s1 + $0x8] sm:$0xff]
    %v204 = vld [vmem:[%s1 + $0x10] sm:$0xff]
    %v205 = vld [vmem:[%s1 + $0x18] sm:$0xff]
    %v206 = vld [vmem:[#allocation10] sm:$0x1]
    %v208 = vlaneseq
    %v209 = vshrl.u32 %v208, 7
    %v210 = vsub.s32 0, %v209
    %v211 = vrot.slane %v206, %v210
    %vm213 = vcmask 261120
    %v215 = vsel %vm213, %v200, 0
    %v218 = vsel %vm213, %v201, 0
    %220 = vmatprep.subr.mxu0 0.0
    %221 = vmatpush1.msra.mxu0 %v202
    %222 = vmatprep.subr.mxu0 0.0
    %223 = vmatpush1.msra.mxu0 %v203
    %224 = vmatprep.subr.mxu0 0.0
    %225 = vmatpush1.msra.mxu0 %v204
    %226 = vmatprep.subr.mxu0 0.0
    %227 = vmatpush1.msra.mxu0 %v205
    %228 = vmatprep.subr.mxu0 0.0
    %229 = vmatpush1.msra.mxu0 0.0
    %230 = vmatprep.subr.mxu0 0.0
    %231 = vmatpush1.msra.mxu0 0.0
    %232 = vmatprep.subr.mxu0 0.0
    %233 = vmatpush1.msra.mxu0 0.0
    %234 = vmatprep.subr.mxu0 0.0
    %235 = vmatpush1.msra.mxu0 0.0
    %236 = vmatprep.subr.mxu0 0.0
    %237 = vmatpush1.msra.mxu0 0.0
    %238 = vmatprep.subr.mxu0 0.0
    %239 = vmatpush1.msra.mxu0 0.0
    %240 = vmatprep.subr.mxu0 0.0
    %241 = vmatpush1.msra.mxu0 0.0
    %242 = vmatprep.subr.mxu0 0.0
    %243 = vmatpush1.msra.mxu0 0.0
    %244 = vmatprep.subr.mxu0 0.0
    %245 = vmatpush1.msra.mxu0 0.0
    %246 = vmatprep.subr.mxu0 0.0
    %247 = vmatpush1.msra.mxu0 0.0
    %248 = vmatprep.subr.mxu0 0.0
    %249 = vmatpush1.msra.mxu0 0.0
    %250 = vmatprep.subr.mxu0 0.0
    %251 = vmatpush1.msra.mxu0 0.0
    %252 = vmatprep.subr.mxu0 0.0
    %253 = vmatpush1.msra.mxu0 0.0
    %254 = vmatprep.subr.mxu0 0.0
    %255 = vmatpush1.msra.mxu0 0.0
    %256 = vmatprep.subr.mxu0 0.0
    %257 = vmatpush1.msra.mxu0 0.0
    %258 = vmatprep.subr.mxu0 0.0
    %259 = vmatpush1.msra.mxu0 0.0
    %260 = vmatprep.subr.mxu0 0.0
    %261 = vmatpush1.msra.mxu0 0.0
    %262 = vmatprep.subr.mxu0 0.0
    %263 = vmatpush1.msra.mxu0 0.0
    %264 = vmatprep.subr.mxu0 0.0
    %265 = vmatpush1.msra.mxu0 0.0
    %266 = vmatprep.subr.mxu0 0.0
    %267 = vmatpush1.msra.mxu0 0.0
    %268 = vmatprep.subr.mxu0 0.0
    %269 = vmatpush1.msra.mxu0 0.0
    %270 = vmatprep.subr.mxu0 0.0
    %271 = vmatpush1.msra.mxu0 0.0
    %272 = vmatprep.subr.mxu0 0.0
    %273 = vmatpush1.msra.mxu0 0.0
    %274 = vmatprep.subr.mxu0 0.0
    %275 = vmatpush1.msra.mxu0 0.0
    %276 = vmatprep.subr.mxu0 0.0
    %277 = vmatpush1.msra.mxu0 0.0
    %278 = vmatprep.subr.mxu0 0.0
    %279 = vmatpush1.msra.mxu0 0.0
    %280 = vmatprep.subr.mxu0 0.0
    %281 = vmatpush1.msra.mxu0 0.0
    %282 = vmatprep.subr.mxu0 0.0
    %283 = vmatpush1.msra.mxu0 0.0
    %284 = vmatprep.mubr.f32.mxu0 0.0
    %285 = vmatmul.mubr.f32.gmra.mrb[0].mxu0 %v215
    %v286 = vpop.f32.mrb[0].mxu0
    %v287 = vadd.f32 %v211, %v286
    %v288 = vpop.f32.mrb[0].mxu0
    %289 = vmatprep.mubr.f32.mxu0 0.0
    %290 = vmatmul.mubr.f32.gmra.mrb[0].mxu0 %v218
    %v291 = vpop.f32.mrb[0].mxu0
    %v292 = vadd.f32 %v211, %v291
    %v293 = vpop.f32.mrb[0].mxu0
    %294 = vdwg.mxu0
    %vm295 = vcmask 785408
    %296 = vst.msk [vmem:[#allocation2] sm:$0xff] %vm295, %v287
    %297 = vst.msk [vmem:[#allocation2 + $0x8] sm:$0xff] %vm295, %v292
    %v298 = vld [vmem:[#allocation7] sm:$0xff]
    %v299 = vld [vmem:[#allocation7 + $0x8] sm:$0xff]
    %v300 = vld [vmem:[#allocation7 + $0x10] sm:$0xff]
    %v301 = vld [vmem:[#allocation7 + $0x18] sm:$0xff]
    %v302 = vld [vmem:[#allocation12] sm:$0x1]
    %v303 = vld [vmem:[#allocation2] sm:$0x3]
    %v305 = vsel %vm213, 0.0, 0
    %307 = vmatprep.subr.mxu0 0.0
    %308 = vmatpush1.msra.mxu0 %v298
    %309 = vmatprep.subr.mxu0 0.0
    %310 = vmatpush1.msra.mxu0 %v299
    %311 = vmatprep.subr.mxu0 0.0
    %312 = vmatpush1.msra.mxu0 %v300
    %313 = vmatprep.subr.mxu0 0.0
    %314 = vmatpush1.msra.mxu0 %v301
    %315 = vmatprep.subr.mxu0 0.0
    %316 = vmatpush1.msra.mxu0 0.0
    %317 = vmatprep.subr.mxu0 0.0
    %318 = vmatpush1.msra.mxu0 0.0
    %319 = vmatprep.subr.mxu0 0.0
    %320 = vmatpush1.msra.mxu0 0.0
    %321 = vmatprep.subr.mxu0 0.0
    %322 = vmatpush1.msra.mxu0 0.0
    %323 = vmatprep.subr.mxu0 0.0
    %324 = vmatpush1.msra.mxu0 0.0
    %325 = vmatprep.subr.mxu0 0.0
    %326 = vmatpush1.msra.mxu0 0.0
    %327 = vmatprep.subr.mxu0 0.0
    %328 = vmatpush1.msra.mxu0 0.0
    %329 = vmatprep.subr.mxu0 0.0
    %330 = vmatpush1.msra.mxu0 0.0
    %331 = vmatprep.subr.mxu0 0.0
    %332 = vmatpush1.msra.mxu0 0.0
    %333 = vmatprep.subr.mxu0 0.0
    %334 = vmatpush1.msra.mxu0 0.0
    %335 = vmatprep.subr.mxu0 0.0
    %336 = vmatpush1.msra.mxu0 0.0
    %337 = vmatprep.subr.mxu0 0.0
    %338 = vmatpush1.msra.mxu0 0.0
    %339 = vmatprep.subr.mxu0 0.0
    %340 = vmatpush1.msra.mxu0 0.0
    %341 = vmatprep.subr.mxu0 0.0
    %342 = vmatpush1.msra.mxu0 0.0
    %343 = vmatprep.subr.mxu0 0.0
    %344 = vmatpush1.msra.mxu0 0.0
    %345 = vmatprep.subr.mxu0 0.0
    %346 = vmatpush1.msra.mxu0 0.0
    %347 = vmatprep.subr.mxu0 0.0
    %348 = vmatpush1.msra.mxu0 0.0
    %349 = vmatprep.subr.mxu0 0.0
    %350 = vmatpush1.msra.mxu0 0.0
    %351 = vmatprep.subr.mxu0 0.0
    %352 = vmatpush1.msra.mxu0 0.0
    %353 = vmatprep.subr.mxu0 0.0
    %354 = vmatpush1.msra.mxu0 0.0
    %355 = vmatprep.subr.mxu0 0.0
    %356 = vmatpush1.msra.mxu0 0.0
    %357 = vmatprep.subr.mxu0 0.0
    %358 = vmatpush1.msra.mxu0 0.0
    %359 = vmatprep.subr.mxu0 0.0
    %360 = vmatpush1.msra.mxu0 0.0
    %361 = vmatprep.subr.mxu0 0.0
    %362 = vmatpush1.msra.mxu0 0.0
    %363 = vmatprep.subr.mxu0 0.0
    %364 = vmatpush1.msra.mxu0 0.0
    %365 = vmatprep.subr.mxu0 0.0
    %366 = vmatpush1.msra.mxu0 0.0
    %367 = vmatprep.subr.mxu0 0.0
    %368 = vmatpush1.msra.mxu0 0.0
    %369 = vmatprep.subr.mxu0 0.0
    %370 = vmatpush1.msra.mxu0 0.0
    %371 = vmatprep.mubr.f32.mxu0 0.0
    %372 = vmatmul.mubr.f32.gmra.mrb[0].mxu0 %v305
    %v373 = vpop.f32.mrb[0].mxu0
    %v374 = vadd.f32 0.0, %v373
    %v375 = vpop.f32.mrb[0].mxu0
    %376 = vdwg.mxu0
    %v377 = vadd.f32 %v303, %v374
    %v378 = vxor.u32 %v377, 2147483648
    %v379 = vmul.f32 %v378, 1.442695
    %v380 = vpow.pop %v379
    %v381 = vadd.f32 %v380, 1.0
    %v382 = vrcp.pop %v381
    %v383 = vmul.f32 1.0, %v382
    %v385 = vlaneseq
    %v386 = vshrl.u32 %v385, 7
    %v387 = vsub.s32 0, %v386
    %v388 = vrot.slane %v302, %v387
    %389 = vrot.lane.b32.xlu0 %v388, 64
    %v390 = vpop.permute.xlu0 %389
    %v392 = vadd.f32 %v374, %v390
    %394 = vrot.lane.b32.xlu0 %v392, 64
    %v395 = vpop.permute.xlu0 %394
    %v397 = vmul.f32 %v383, %v395
    %399 = vrot.lane.b32.xlu0 %v397, 64
    %v400 = vpop.permute.xlu0 %399
    %v402 = vadd.f32 %v303, %v400
    %v403 = vtanh.pop %v402
    %v404 = vsub.f32 1.0, %v383
    %406 = vrot.lane.b32.xlu0 %v403, 96
    %v407 = vpop.permute.xlu0 %406
    %v409 = vmul.f32 %v404, %v407
    %v410 = vmul.f32 %v383, 0.0
    %v411 = vadd.f32 %v409, %v410
    %413 = vrot.lane.b32.xlu0 %v411, 96
    %v414 = vpop.permute.xlu0 %413
    %vm416 = vcmask 254976
    %417 = vst.msk [vmem:[#allocation3] sm:$0x3] %vm416, %v414
    %v418 = vld [vmem:[#allocation2 + $0x2] sm:$0x3]
    %v419 = vsel %vm213, %v414, 0
    %421 = vmatprep.subr.mxu0 0.0
    %422 = vmatpush1.msra.mxu0 %v298
    %423 = vmatprep.subr.mxu0 0.0
    %424 = vmatpush1.msra.mxu0 %v299
    %425 = vmatprep.subr.mxu0 0.0
    %426 = vmatpush1.msra.mxu0 %v300
    %427 = vmatprep.subr.mxu0 0.0
    %428 = vmatpush1.msra.mxu0 %v301
    %429 = vmatprep.subr.mxu0 0.0
    %430 = vmatpush1.msra.mxu0 0.0
    %431 = vmatprep.subr.mxu0 0.0
    %432 = vmatpush1.msra.mxu0 0.0
    %433 = vmatprep.subr.mxu0 0.0
    %434 = vmatpush1.msra.mxu0 0.0
    %435 = vmatprep.subr.mxu0 0.0
    %436 = vmatpush1.msra.mxu0 0.0
    %437 = vmatprep.subr.mxu0 0.0
    %438 = vmatpush1.msra.mxu0 0.0
    %439 = vmatprep.subr.mxu0 0.0
    %440 = vmatpush1.msra.mxu0 0.0
    %441 = vmatprep.subr.mxu0 0.0
    %442 = vmatpush1.msra.mxu0 0.0
    %443 = vmatprep.subr.mxu0 0.0
    %444 = vmatpush1.msra.mxu0 0.0
    %445 = vmatprep.subr.mxu0 0.0
    %446 = vmatpush1.msra.mxu0 0.0
    %447 = vmatprep.subr.mxu0 0.0
    %448 = vmatpush1.msra.mxu0 0.0
    %449 = vmatprep.subr.mxu0 0.0
    %450 = vmatpush1.msra.mxu0 0.0
    %451 = vmatprep.subr.mxu0 0.0
    %452 = vmatpush1.msra.mxu0 0.0
    %453 = vmatprep.subr.mxu0 0.0
    %454 = vmatpush1.msra.mxu0 0.0
    %455 = vmatprep.subr.mxu0 0.0
    %456 = vmatpush1.msra.mxu0 0.0
    %457 = vmatprep.subr.mxu0 0.0
    %458 = vmatpush1.msra.mxu0 0.0
    %459 = vmatprep.subr.mxu0 0.0
    %460 = vmatpush1.msra.mxu0 0.0
    %461 = vmatprep.subr.mxu0 0.0
    %462 = vmatpush1.msra.mxu0 0.0
    %463 = vmatprep.subr.mxu0 0.0
    %464 = vmatpush1.msra.mxu0 0.0
    %465 = vmatprep.subr.mxu0 0.0
    %466 = vmatpush1.msra.mxu0 0.0
    %467 = vmatprep.subr.mxu0 0.0
    %468 = vmatpush1.msra.mxu0 0.0
    %469 = vmatprep.subr.mxu0 0.0
    %470 = vmatpush1.msra.mxu0 0.0
    %471 = vmatprep.subr.mxu0 0.0
    %472 = vmatpush1.msra.mxu0 0.0
    %473 = vmatprep.subr.mxu0 0.0
    %474 = vmatpush1.msra.mxu0 0.0
    %475 = vmatprep.subr.mxu0 0.0
    %476 = vmatpush1.msra.mxu0 0.0
    %477 = vmatprep.subr.mxu0 0.0
    %478 = vmatpush1.msra.mxu0 0.0
    %479 = vmatprep.subr.mxu0 0.0
    %480 = vmatpush1.msra.mxu0 0.0
    %481 = vmatprep.subr.mxu0 0.0
    %482 = vmatpush1.msra.mxu0 0.0
    %483 = vmatprep.subr.mxu0 0.0
    %484 = vmatpush1.msra.mxu0 0.0
    %485 = vmatprep.mubr.f32.mxu0 0.0
    %486 = vmatmul.mubr.f32.gmra.mrb[0].mxu0 %v419
    %v487 = vpop.f32.mrb[0].mxu0
    %v488 = vadd.f32 0.0, %v487
    %v489 = vpop.f32.mrb[0].mxu0
    %490 = vdwg.mxu0
    %v491 = vadd.f32 %v418, %v488
    %v492 = vxor.u32 %v491, 2147483648
    %v493 = vmul.f32 %v492, 1.442695
    %v494 = vpow.pop %v493
    %v495 = vadd.f32 %v494, 1.0
    %v496 = vrcp.pop %v495
    %v497 = vmul.f32 1.0, %v496
    %v498 = vadd.f32 %v488, %v390
    %500 = vrot.lane.b32.xlu0 %v498, 64
    %v501 = vpop.permute.xlu0 %500
    %v503 = vmul.f32 %v497, %v501
    %505 = vrot.lane.b32.xlu0 %v503, 64
    %v506 = vpop.permute.xlu0 %505
    %v508 = vadd.f32 %v418, %v506
    %v509 = vtanh.pop %v508
    %v510 = vsub.f32 1.0, %v497
    %512 = vrot.lane.b32.xlu0 %v509, 96
    %v513 = vpop.permute.xlu0 %512
    %v515 = vmul.f32 %v510, %v513
    %v516 = vmul.f32 %v497, %v411
    %v517 = vadd.f32 %v515, %v516
    %519 = vrot.lane.b32.xlu0 %v517, 96
    %v520 = vpop.permute.xlu0 %519
    %522 = vst.msk [vmem:[#allocation3 + $0x2] sm:$0x3] %vm416, %v520
    %v523 = vld [vmem:[#allocation2 + $0x4] sm:$0x3]
    %v524 = vsel %vm213, %v520, 0
    %526 = vmatprep.subr.mxu0 0.0
    %527 = vmatpush1.msra.mxu0 %v298
    %528 = vmatprep.subr.mxu0 0.0
    %529 = vmatpush1.msra.mxu0 %v299
    %530 = vmatprep.subr.mxu0 0.0
    %531 = vmatpush1.msra.mxu0 %v300
    %532 = vmatprep.subr.mxu0 0.0
    %533 = vmatpush1.msra.mxu0 %v301
    %534 = vmatprep.subr.mxu0 0.0
    %535 = vmatpush1.msra.mxu0 0.0
    %536 = vmatprep.subr.mxu0 0.0
    %537 = vmatpush1.msra.mxu0 0.0
    %538 = vmatprep.subr.mxu0 0.0
    %539 = vmatpush1.msra.mxu0 0.0
    %540 = vmatprep.subr.mxu0 0.0
    %541 = vmatpush1.msra.mxu0 0.0
    %542 = vmatprep.subr.mxu0 0.0
    %543 = vmatpush1.msra.mxu0 0.0
    %544 = vmatprep.subr.mxu0 0.0
    %545 = vmatpush1.msra.mxu0 0.0
    %546 = vmatprep.subr.mxu0 0.0
    %547 = vmatpush1.msra.mxu0 0.0
    %548 = vmatprep.subr.mxu0 0.0
    %549 = vmatpush1.msra.mxu0 0.0
    %550 = vmatprep.subr.mxu0 0.0
    %551 = vmatpush1.msra.mxu0 0.0
    %552 = vmatprep.subr.mxu0 0.0
    %553 = vmatpush1.msra.mxu0 0.0
    %554 = vmatprep.subr.mxu0 0.0
    %555 = vmatpush1.msra.mxu0 0.0
    %556 = vmatprep.subr.mxu0 0.0
    %557 = vmatpush1.msra.mxu0 0.0
    %558 = vmatprep.subr.mxu0 0.0
    %559 = vmatpush1.msra.mxu0 0.0
    %560 = vmatprep.subr.mxu0 0.0
    %561 = vmatpush1.msra.mxu0 0.0
    %562 = vmatprep.subr.mxu0 0.0
    %563 = vmatpush1.msra.mxu0 0.0
    %564 = vmatprep.subr.mxu0 0.0
    %565 = vmatpush1.msra.mxu0 0.0
    %566 = vmatprep.subr.mxu0 0.0
    %567 = vmatpush1.msra.mxu0 0.0
    %568 = vmatprep.subr.mxu0 0.0
    %569 = vmatpush1.msra.mxu0 0.0
    %570 = vmatprep.subr.mxu0 0.0
    %571 = vmatpush1.msra.mxu0 0.0
    %572 = vmatprep.subr.mxu0 0.0
    %573 = vmatpush1.msra.mxu0 0.0
    %574 = vmatprep.subr.mxu0 0.0
    %575 = vmatpush1.msra.mxu0 0.0
    %576 = vmatprep.subr.mxu0 0.0
    %577 = vmatpush1.msra.mxu0 0.0
    %578 = vmatprep.subr.mxu0 0.0
    %579 = vmatpush1.msra.mxu0 0.0
    %580 = vmatprep.subr.mxu0 0.0
    %581 = vmatpush1.msra.mxu0 0.0
    %582 = vmatprep.subr.mxu0 0.0
    %583 = vmatpush1.msra.mxu0 0.0
    %584 = vmatprep.subr.mxu0 0.0
    %585 = vmatpush1.msra.mxu0 0.0
    %586 = vmatprep.subr.mxu0 0.0
    %587 = vmatpush1.msra.mxu0 0.0
    %588 = vmatprep.subr.mxu0 0.0
    %589 = vmatpush1.msra.mxu0 0.0
    %590 = vmatprep.mubr.f32.mxu0 0.0
    %591 = vmatmul.mubr.f32.gmra.mrb[0].mxu0 %v524
    %v592 = vpop.f32.mrb[0].mxu0
    %v593 = vadd.f32 0.0, %v592
    %v594 = vpop.f32.mrb[0].mxu0
    %595 = vdwg.mxu0
    %v596 = vadd.f32 %v523, %v593
    %v597 = vxor.u32 %v596, 2147483648
    %v598 = vmul.f32 %v597, 1.442695
    %v599 = vpow.pop %v598
    %v600 = vadd.f32 %v599, 1.0
    %v601 = vrcp.pop %v600
    %v602 = vmul.f32 1.0, %v601
    %v603 = vadd.f32 %v593, %v390
    %605 = vrot.lane.b32.xlu0 %v603, 64
    %v606 = vpop.permute.xlu0 %605
    %v608 = vmul.f32 %v602, %v606
    %610 = vrot.lane.b32.xlu0 %v608, 64
    %v611 = vpop.permute.xlu0 %610
    %v613 = vadd.f32 %v523, %v611
    %v614 = vtanh.pop %v613
    %v615 = vsub.f32 1.0, %v602
    %617 = vrot.lane.b32.xlu0 %v614, 96
    %v618 = vpop.permute.xlu0 %617
    %v620 = vmul.f32 %v615, %v618
    %v621 = vmul.f32 %v602, %v517
    %v622 = vadd.f32 %v620, %v621
    %624 = vrot.lane.b32.xlu0 %v622, 96
    %v625 = vpop.permute.xlu0 %624
    %627 = vst.msk [vmem:[#allocation3 + $0x4] sm:$0x3] %vm416, %v625
    %v628 = vld [vmem:[#allocation2 + $0x6] sm:$0x3]
    %v629 = vsel %vm213, %v625, 0
    %631 = vmatprep.subr.mxu0 0.0
    %632 = vmatpush1.msra.mxu0 %v298
    %633 = vmatprep.subr.mxu0 0.0
    %634 = vmatpush1.msra.mxu0 %v299
    %635 = vmatprep.subr.mxu0 0.0
    %636 = vmatpush1.msra.mxu0 %v300
    %637 = vmatprep.subr.mxu0 0.0
    %638 = vmatpush1.msra.mxu0 %v301
    %639 = vmatprep.subr.mxu0 0.0
    %640 = vmatpush1.msra.mxu0 0.0
    %641 = vmatprep.subr.mxu0 0.0
    %642 = vmatpush1.msra.mxu0 0.0
    %643 = vmatprep.subr.mxu0 0.0
    %644 = vmatpush1.msra.mxu0 0.0
    %645 = vmatprep.subr.mxu0 0.0
    %646 = vmatpush1.msra.mxu0 0.0
    %647 = vmatprep.subr.mxu0 0.0
    %648 = vmatpush1.msra.mxu0 0.0
    %649 = vmatprep.subr.mxu0 0.0
    %650 = vmatpush1.msra.mxu0 0.0
    %651 = vmatprep.subr.mxu0 0.0
    %652 = vmatpush1.msra.mxu0 0.0
    %653 = vmatprep.subr.mxu0 0.0
    %654 = vmatpush1.msra.mxu0 0.0
    %655 = vmatprep.subr.mxu0 0.0
    %656 = vmatpush1.msra.mxu0 0.0
    %657 = vmatprep.subr.mxu0 0.0
    %658 = vmatpush1.msra.mxu0 0.0
    %659 = vmatprep.subr.mxu0 0.0
    %660 = vmatpush1.msra.mxu0 0.0
    %661 = vmatprep.subr.mxu0 0.0
    %662 = vmatpush1.msra.mxu0 0.0
    %663 = vmatprep.subr.mxu0 0.0
    %664 = vmatpush1.msra.mxu0 0.0
    %665 = vmatprep.subr.mxu0 0.0
    %666 = vmatpush1.msra.mxu0 0.0
    %667 = vmatprep.subr.mxu0 0.0
    %668 = vmatpush1.msra.mxu0 0.0
    %669 = vmatprep.subr.mxu0 0.0
    %670 = vmatpush1.msra.mxu0 0.0
    %671 = vmatprep.subr.mxu0 0.0
    %672 = vmatpush1.msra.mxu0 0.0
    %673 = vmatprep.subr.mxu0 0.0
    %674 = vmatpush1.msra.mxu0 0.0
    %675 = vmatprep.subr.mxu0 0.0
    %676 = vmatpush1.msra.mxu0 0.0
    %677 = vmatprep.subr.mxu0 0.0
    %678 = vmatpush1.msra.mxu0 0.0
    %679 = vmatprep.subr.mxu0 0.0
    %680 = vmatpush1.msra.mxu0 0.0
    %681 = vmatprep.subr.mxu0 0.0
    %682 = vmatpush1.msra.mxu0 0.0
    %683 = vmatprep.subr.mxu0 0.0
    %684 = vmatpush1.msra.mxu0 0.0
    %685 = vmatprep.subr.mxu0 0.0
    %686 = vmatpush1.msra.mxu0 0.0
    %687 = vmatprep.subr.mxu0 0.0
    %688 = vmatpush1.msra.mxu0 0.0
    %689 = vmatprep.subr.mxu0 0.0
    %690 = vmatpush1.msra.mxu0 0.0
    %691 = vmatprep.subr.mxu0 0.0
    %692 = vmatpush1.msra.mxu0 0.0
    %693 = vmatprep.subr.mxu0 0.0
    %694 = vmatpush1.msra.mxu0 0.0
    %695 = vmatprep.mubr.f32.mxu0 0.0
    %696 = vmatmul.mubr.f32.gmra.mrb[0].mxu0 %v629
    %v697 = vpop.f32.mrb[0].mxu0
    %v698 = vadd.f32 0.0, %v697
    %v699 = vpop.f32.mrb[0].mxu0
    %700 = vdwg.mxu0
    %v701 = vadd.f32 %v628, %v698
    %v702 = vxor.u32 %v701, 2147483648
    %v703 = vmul.f32 %v702, 1.442695
    %v704 = vpow.pop %v703
    %v705 = vadd.f32 %v704, 1.0
    %v706 = vrcp.pop %v705
    %v707 = vmul.f32 1.0, %v706
    %v708 = vadd.f32 %v698, %v390
    %710 = vrot.lane.b32.xlu0 %v708, 64
    %v711 = vpop.permute.xlu0 %710
    %v713 = vmul.f32 %v707, %v711
    %715 = vrot.lane.b32.xlu0 %v713, 64
    %v716 = vpop.permute.xlu0 %715
    %v718 = vadd.f32 %v628, %v716
    %v719 = vtanh.pop %v718
    %v720 = vsub.f32 1.0, %v707
    %722 = vrot.lane.b32.xlu0 %v719, 96
    %v723 = vpop.permute.xlu0 %722
    %v725 = vmul.f32 %v720, %v723
    %v726 = vmul.f32 %v707, %v622
    %v727 = vadd.f32 %v725, %v726
    %729 = vrot.lane.b32.xlu0 %v727, 96
    %v730 = vpop.permute.xlu0 %729
    %732 = vst.msk [vmem:[#allocation3 + $0x6] sm:$0x3] %vm416, %v730
    %v733 = vld [vmem:[#allocation2 + $0x8] sm:$0x3]
    %v734 = vsel %vm213, %v730, 0
    %736 = vmatprep.subr.mxu0 0.0
    %737 = vmatpush1.msra.mxu0 %v298
    %738 = vmatprep.subr.mxu0 0.0
    %739 = vmatpush1.msra.mxu0 %v299
    %740 = vmatprep.subr.mxu0 0.0
    %741 = vmatpush1.msra.mxu0 %v300
    %742 = vmatprep.subr.mxu0 0.0
    %743 = vmatpush1.msra.mxu0 %v301
    %744 = vmatprep.subr.mxu0 0.0
    %745 = vmatpush1.msra.mxu0 0.0
    %746 = vmatprep.subr.mxu0 0.0
    %747 = vmatpush1.msra.mxu0 0.0
    %748 = vmatprep.subr.mxu0 0.0
    %749 = vmatpush1.msra.mxu0 0.0
    %750 = vmatprep.subr.mxu0 0.0
    %751 = vmatpush1.msra.mxu0 0.0
    %752 = vmatprep.subr.mxu0 0.0
    %753 = vmatpush1.msra.mxu0 0.0
    %754 = vmatprep.subr.mxu0 0.0
    %755 = vmatpush1.msra.mxu0 0.0
    %756 = vmatprep.subr.mxu0 0.0
    %757 = vmatpush1.msra.mxu0 0.0
    %758 = vmatprep.subr.mxu0 0.0
    %759 = vmatpush1.msra.mxu0 0.0
    %760 = vmatprep.subr.mxu0 0.0
    %761 = vmatpush1.msra.mxu0 0.0
    %762 = vmatprep.subr.mxu0 0.0
    %763 = vmatpush1.msra.mxu0 0.0
    %764 = vmatprep.subr.mxu0 0.0
    %765 = vmatpush1.msra.mxu0 0.0
    %766 = vmatprep.subr.mxu0 0.0
    %767 = vmatpush1.msra.mxu0 0.0
    %768 = vmatprep.subr.mxu0 0.0
    %769 = vmatpush1.msra.mxu0 0.0
    %770 = vmatprep.subr.mxu0 0.0
    %771 = vmatpush1.msra.mxu0 0.0
    %772 = vmatprep.subr.mxu0 0.0
    %773 = vmatpush1.msra.mxu0 0.0
    %774 = vmatprep.subr.mxu0 0.0
    %775 = vmatpush1.msra.mxu0 0.0
    %776 = vmatprep.subr.mxu0 0.0
    %777 = vmatpush1.msra.mxu0 0.0
    %778 = vmatprep.subr.mxu0 0.0
    %779 = vmatpush1.msra.mxu0 0.0
    %780 = vmatprep.subr.mxu0 0.0
    %781 = vmatpush1.msra.mxu0 0.0
    %782 = vmatprep.subr.mxu0 0.0
    %783 = vmatpush1.msra.mxu0 0.0
    %784 = vmatprep.subr.mxu0 0.0
    %785 = vmatpush1.msra.mxu0 0.0
    %786 = vmatprep.subr.mxu0 0.0
    %787 = vmatpush1.msra.mxu0 0.0
    %788 = vmatprep.subr.mxu0 0.0
    %789 = vmatpush1.msra.mxu0 0.0
    %790 = vmatprep.subr.mxu0 0.0
    %791 = vmatpush1.msra.mxu0 0.0
    %792 = vmatprep.subr.mxu0 0.0
    %793 = vmatpush1.msra.mxu0 0.0
    %794 = vmatprep.subr.mxu0 0.0
    %795 = vmatpush1.msra.mxu0 0.0
    %796 = vmatprep.subr.mxu0 0.0
    %797 = vmatpush1.msra.mxu0 0.0
    %798 = vmatprep.subr.mxu0 0.0
    %799 = vmatpush1.msra.mxu0 0.0
    %800 = vmatprep.mubr.f32.mxu0 0.0
    %801 = vmatmul.mubr.f32.gmra.mrb[0].mxu0 %v734
    %v802 = vpop.f32.mrb[0].mxu0
    %v803 = vadd.f32 0.0, %v802
    %v804 = vpop.f32.mrb[0].mxu0
    %805 = vdwg.mxu0
    %v806 = vadd.f32 %v733, %v803
    %v807 = vxor.u32 %v806, 2147483648
    %v808 = vmul.f32 %v807, 1.442695
    %v809 = vpow.pop %v808
    %v810 = vadd.f32 %v809, 1.0
    %v811 = vrcp.pop %v810
    %v812 = vmul.f32 1.0, %v811
    %v813 = vadd.f32 %v803, %v390
    %815 = vrot.lane.b32.xlu0 %v813, 64
    %v816 = vpop.permute.xlu0 %815
    %v818 = vmul.f32 %v812, %v816
    %820 = vrot.lane.b32.xlu0 %v818, 64
    %v821 = vpop.permute.xlu0 %820
    %v823 = vadd.f32 %v733, %v821
    %v824 = vtanh.pop %v823
    %v825 = vsub.f32 1.0, %v812
    %827 = vrot.lane.b32.xlu0 %v824, 96
    %v828 = vpop.permute.xlu0 %827
    %v830 = vmul.f32 %v825, %v828
    %v831 = vmul.f32 %v812, %v727
    %v832 = vadd.f32 %v830, %v831
    %834 = vrot.lane.b32.xlu0 %v832, 96
    %v835 = vpop.permute.xlu0 %834
    %837 = vst.msk [vmem:[#allocation3 + $0x8] sm:$0x3] %vm416, %v835
    %v838 = vld [vmem:[#allocation2 + $0xa] sm:$0x3]
    %v839 = vsel %vm213, %v835, 0
    %841 = vmatprep.subr.mxu0 0.0
    %842 = vmatpush1.msra.mxu0 %v298
    %843 = vmatprep.subr.mxu0 0.0
    %844 = vmatpush1.msra.mxu0 %v299
    %845 = vmatprep.subr.mxu0 0.0
    %846 = vmatpush1.msra.mxu0 %v300
    %847 = vmatprep.subr.mxu0 0.0
    %848 = vmatpush1.msra.mxu0 %v301
    %849 = vmatprep.subr.mxu0 0.0
    %850 = vmatpush1.msra.mxu0 0.0
    %851 = vmatprep.subr.mxu0 0.0
    %852 = vmatpush1.msra.mxu0 0.0
    %853 = vmatprep.subr.mxu0 0.0
    %854 = vmatpush1.msra.mxu0 0.0
    %855 = vmatprep.subr.mxu0 0.0
    %856 = vmatpush1.msra.mxu0 0.0
    %857 = vmatprep.subr.mxu0 0.0
    %858 = vmatpush1.msra.mxu0 0.0
    %859 = vmatprep.subr.mxu0 0.0
    %860 = vmatpush1.msra.mxu0 0.0
    %861 = vmatprep.subr.mxu0 0.0
    %862 = vmatpush1.msra.mxu0 0.0
    %863 = vmatprep.subr.mxu0 0.0
    %864 = vmatpush1.msra.mxu0 0.0
    %865 = vmatprep.subr.mxu0 0.0
    %866 = vmatpush1.msra.mxu0 0.0
    %867 = vmatprep.subr.mxu0 0.0
    %868 = vmatpush1.msra.mxu0 0.0
    %869 = vmatprep.subr.mxu0 0.0
    %870 = vmatpush1.msra.mxu0 0.0
    %871 = vmatprep.subr.mxu0 0.0
    %872 = vmatpush1.msra.mxu0 0.0
    %873 = vmatprep.subr.mxu0 0.0
    %874 = vmatpush1.msra.mxu0 0.0
    %875 = vmatprep.subr.mxu0 0.0
    %876 = vmatpush1.msra.mxu0 0.0
    %877 = vmatprep.subr.mxu0 0.0
    %878 = vmatpush1.msra.mxu0 0.0
    %879 = vmatprep.subr.mxu0 0.0
    %880 = vmatpush1.msra.mxu0 0.0
    %881 = vmatprep.subr.mxu0 0.0
    %882 = vmatpush1.msra.mxu0 0.0
    %883 = vmatprep.subr.mxu0 0.0
    %884 = vmatpush1.msra.mxu0 0.0
    %885 = vmatprep.subr.mxu0 0.0
    %886 = vmatpush1.msra.mxu0 0.0
    %887 = vmatprep.subr.mxu0 0.0
    %888 = vmatpush1.msra.mxu0 0.0
    %889 = vmatprep.subr.mxu0 0.0
    %890 = vmatpush1.msra.mxu0 0.0
    %891 = vmatprep.subr.mxu0 0.0
    %892 = vmatpush1.msra.mxu0 0.0
    %893 = vmatprep.subr.mxu0 0.0
    %894 = vmatpush1.msra.mxu0 0.0
    %895 = vmatprep.subr.mxu0 0.0
    %896 = vmatpush1.msra.mxu0 0.0
    %897 = vmatprep.subr.mxu0 0.0
    %898 = vmatpush1.msra.mxu0 0.0
    %899 = vmatprep.subr.mxu0 0.0
    %900 = vmatpush1.msra.mxu0 0.0
    %901 = vmatprep.subr.mxu0 0.0
    %902 = vmatpush1.msra.mxu0 0.0
    %903 = vmatprep.subr.mxu0 0.0
    %904 = vmatpush1.msra.mxu0 0.0
    %905 = vmatprep.mubr.f32.mxu0 0.0
    %906 = vmatmul.mubr.f32.gmra.mrb[0].mxu0 %v839
    %v907 = vpop.f32.mrb[0].mxu0
    %v908 = vadd.f32 0.0, %v907
    %v909 = vpop.f32.mrb[0].mxu0
    %910 = vdwg.mxu0
    %v911 = vadd.f32 %v838, %v908
    %v912 = vxor.u32 %v911, 2147483648
    %v913 = vmul.f32 %v912, 1.442695
    %v914 = vpow.pop %v913
    %v915 = vadd.f32 %v914, 1.0
    %v916 = vrcp.pop %v915
    %v917 = vmul.f32 1.0, %v916
    %v918 = vadd.f32 %v908, %v390
    %920 = vrot.lane.b32.xlu0 %v918, 64
    %v921 = vpop.permute.xlu0 %920
    %v923 = vmul.f32 %v917, %v921
    %925 = vrot.lane.b32.xlu0 %v923, 64
    %v926 = vpop.permute.xlu0 %925
    %v928 = vadd.f32 %v838, %v926
    %v929 = vtanh.pop %v928
    %v930 = vsub.f32 1.0, %v917
    %932 = vrot.lane.b32.xlu0 %v929, 96
    %v933 = vpop.permute.xlu0 %932
    %v935 = vmul.f32 %v930, %v933
    %v936 = vmul.f32 %v917, %v832
    %v937 = vadd.f32 %v935, %v936
    %939 = vrot.lane.b32.xlu0 %v937, 96
    %v940 = vpop.permute.xlu0 %939
    %942 = vst.msk [vmem:[#allocation3 + $0xa] sm:$0x3] %vm416, %v940
    %v943 = vld [vmem:[#allocation2 + $0xc] sm:$0x3]
    %v944 = vsel %vm213, %v940, 0
    %946 = vmatprep.subr.mxu0 0.0
    %947 = vmatpush1.msra.mxu0 %v298
    %948 = vmatprep.subr.mxu0 0.0
    %949 = vmatpush1.msra.mxu0 %v299
    %950 = vmatprep.subr.mxu0 0.0
    %951 = vmatpush1.msra.mxu0 %v300
    %952 = vmatprep.subr.mxu0 0.0
    %953 = vmatpush1.msra.mxu0 %v301
    %954 = vmatprep.subr.mxu0 0.0
    %955 = vmatpush1.msra.mxu0 0.0
    %956 = vmatprep.subr.mxu0 0.0
    %957 = vmatpush1.msra.mxu0 0.0
    %958 = vmatprep.subr.mxu0 0.0
    %959 = vmatpush1.msra.mxu0 0.0
    %960 = vmatprep.subr.mxu0 0.0
    %961 = vmatpush1.msra.mxu0 0.0
    %962 = vmatprep.subr.mxu0 0.0
    %963 = vmatpush1.msra.mxu0 0.0
    %964 = vmatprep.subr.mxu0 0.0
    %965 = vmatpush1.msra.mxu0 0.0
    %966 = vmatprep.subr.mxu0 0.0
    %967 = vmatpush1.msra.mxu0 0.0
    %968 = vmatprep.subr.mxu0 0.0
    %969 = vmatpush1.msra.mxu0 0.0
    %970 = vmatprep.subr.mxu0 0.0
    %971 = vmatpush1.msra.mxu0 0.0
    %972 = vmatprep.subr.mxu0 0.0
    %973 = vmatpush1.msra.mxu0 0.0
    %974 = vmatprep.subr.mxu0 0.0
    %975 = vmatpush1.msra.mxu0 0.0
    %976 = vmatprep.subr.mxu0 0.0
    %977 = vmatpush1.msra.mxu0 0.0
    %978 = vmatprep.subr.mxu0 0.0
    %979 = vmatpush1.msra.mxu0 0.0
    %980 = vmatprep.subr.mxu0 0.0
    %981 = vmatpush1.msra.mxu0 0.0
    %982 = vmatprep.subr.mxu0 0.0
    %983 = vmatpush1.msra.mxu0 0.0
    %984 = vmatprep.subr.mxu0 0.0
    %985 = vmatpush1.msra.mxu0 0.0
    %986 = vmatprep.subr.mxu0 0.0
    %987 = vmatpush1.msra.mxu0 0.0
    %988 = vmatprep.subr.mxu0 0.0
    %989 = vmatpush1.msra.mxu0 0.0
    %990 = vmatprep.subr.mxu0 0.0
    %991 = vmatpush1.msra.mxu0 0.0
    %992 = vmatprep.subr.mxu0 0.0
    %993 = vmatpush1.msra.mxu0 0.0
    %994 = vmatprep.subr.mxu0 0.0
    %995 = vmatpush1.msra.mxu0 0.0
    %996 = vmatprep.subr.mxu0 0.0
    %997 = vmatpush1.msra.mxu0 0.0
    %998 = vmatprep.subr.mxu0 0.0
    %999 = vmatpush1.msra.mxu0 0.0
    %1000 = vmatprep.subr.mxu0 0.0
    %1001 = vmatpush1.msra.mxu0 0.0
    %1002 = vmatprep.subr.mxu0 0.0
    %1003 = vmatpush1.msra.mxu0 0.0
    %1004 = vmatprep.subr.mxu0 0.0
    %1005 = vmatpush1.msra.mxu0 0.0
    %1006 = vmatprep.subr.mxu0 0.0
    %1007 = vmatpush1.msra.mxu0 0.0
    %1008 = vmatprep.subr.mxu0 0.0
    %1009 = vmatpush1.msra.mxu0 0.0
    %1010 = vmatprep.mubr.f32.mxu0 0.0
    %1011 = vmatmul.mubr.f32.gmra.mrb[0].mxu0 %v944
    %v1012 = vpop.f32.mrb[0].mxu0
    %v1013 = vadd.f32 0.0, %v1012
    %v1014 = vpop.f32.mrb[0].mxu0
    %1015 = vdwg.mxu0
    %v1016 = vadd.f32 %v943, %v1013
    %v1017 = vxor.u32 %v1016, 2147483648
    %v1018 = vmul.f32 %v1017, 1.442695
    %v1019 = vpow.pop %v1018
    %v1020 = vadd.f32 %v1019, 1.0
    %v1021 = vrcp.pop %v1020
    %v1022 = vmul.f32 1.0, %v1021
    %v1023 = vadd.f32 %v1013, %v390
    %1025 = vrot.lane.b32.xlu0 %v1023, 64
    %v1026 = vpop.permute.xlu0 %1025
    %v1028 = vmul.f32 %v1022, %v1026
    %1030 = vrot.lane.b32.xlu0 %v1028, 64
    %v1031 = vpop.permute.xlu0 %1030
    %v1033 = vadd.f32 %v943, %v1031
    %v1034 = vtanh.pop %v1033
    %v1035 = vsub.f32 1.0, %v1022
    %1037 = vrot.lane.b32.xlu0 %v1034, 96
    %v1038 = vpop.permute.xlu0 %1037
    %v1040 = vmul.f32 %v1035, %v1038
    %v1041 = vmul.f32 %v1022, %v937
    %v1042 = vadd.f32 %v1040, %v1041
    %1044 = vrot.lane.b32.xlu0 %v1042, 96
    %v1045 = vpop.permute.xlu0 %1044
    %1047 = vst.msk [vmem:[#allocation3 + $0xc] sm:$0x3] %vm416, %v1045
    %v1048 = vld [vmem:[#allocation2 + $0xe] sm:$0x3]
    %v1049 = vsel %vm213, %v1045, 0
    %1051 = vmatprep.subr.mxu0 0.0
    %1052 = vmatpush1.msra.mxu0 %v298
    %1053 = vmatprep.subr.mxu0 0.0
    %1054 = vmatpush1.msra.mxu0 %v299
    %1055 = vmatprep.subr.mxu0 0.0
    %1056 = vmatpush1.msra.mxu0 %v300
    %1057 = vmatprep.subr.mxu0 0.0
    %1058 = vmatpush1.msra.mxu0 %v301
    %1059 = vmatprep.subr.mxu0 0.0
    %1060 = vmatpush1.msra.mxu0 0.0
    %1061 = vmatprep.subr.mxu0 0.0
    %1062 = vmatpush1.msra.mxu0 0.0
    %1063 = vmatprep.subr.mxu0 0.0
    %1064 = vmatpush1.msra.mxu0 0.0
    %1065 = vmatprep.subr.mxu0 0.0
    %1066 = vmatpush1.msra.mxu0 0.0
    %1067 = vmatprep.subr.mxu0 0.0
    %1068 = vmatpush1.msra.mxu0 0.0
    %1069 = vmatprep.subr.mxu0 0.0
    %1070 = vmatpush1.msra.mxu0 0.0
    %1071 = vmatprep.subr.mxu0 0.0
    %1072 = vmatpush1.msra.mxu0 0.0
    %1073 = vmatprep.subr.mxu0 0.0
    %1074 = vmatpush1.msra.mxu0 0.0
    %1075 = vmatprep.subr.mxu0 0.0
    %1076 = vmatpush1.msra.mxu0 0.0
    %1077 = vmatprep.subr.mxu0 0.0
    %1078 = vmatpush1.msra.mxu0 0.0
    %1079 = vmatprep.subr.mxu0 0.0
    %1080 = vmatpush1.msra.mxu0 0.0
    %1081 = vmatprep.subr.mxu0 0.0
    %1082 = vmatpush1.msra.mxu0 0.0
    %1083 = vmatprep.subr.mxu0 0.0
    %1084 = vmatpush1.msra.mxu0 0.0
    %1085 = vmatprep.subr.mxu0 0.0
    %1086 = vmatpush1.msra.mxu0 0.0
    %1087 = vmatprep.subr.mxu0 0.0
    %1088 = vmatpush1.msra.mxu0 0.0
    %1089 = vmatprep.subr.mxu0 0.0
    %1090 = vmatpush1.msra.mxu0 0.0
    %1091 = vmatprep.subr.mxu0 0.0
    %1092 = vmatpush1.msra.mxu0 0.0
    %1093 = vmatprep.subr.mxu0 0.0
    %1094 = vmatpush1.msra.mxu0 0.0
    %1095 = vmatprep.subr.mxu0 0.0
    %1096 = vmatpush1.msra.mxu0 0.0
    %1097 = vmatprep.subr.mxu0 0.0
    %1098 = vmatpush1.msra.mxu0 0.0
    %1099 = vmatprep.subr.mxu0 0.0
    %1100 = vmatpush1.msra.mxu0 0.0
    %1101 = vmatprep.subr.mxu0 0.0
    %1102 = vmatpush1.msra.mxu0 0.0
    %1103 = vmatprep.subr.mxu0 0.0
    %1104 = vmatpush1.msra.mxu0 0.0
    %1105 = vmatprep.subr.mxu0 0.0
    %1106 = vmatpush1.msra.mxu0 0.0
    %1107 = vmatprep.subr.mxu0 0.0
    %1108 = vmatpush1.msra.mxu0 0.0
    %1109 = vmatprep.subr.mxu0 0.0
    %1110 = vmatpush1.msra.mxu0 0.0
    %1111 = vmatprep.subr.mxu0 0.0
    %1112 = vmatpush1.msra.mxu0 0.0
    %1113 = vmatprep.subr.mxu0 0.0
    %1114 = vmatpush1.msra.mxu0 0.0
    %1115 = vmatprep.mubr.f32.mxu0 0.0
    %1116 = vmatmul.mubr.f32.gmra.mrb[0].mxu0 %v1049
    %v1117 = vpop.f32.mrb[0].mxu0
    %v1118 = vadd.f32 0.0, %v1117
    %v1119 = vpop.f32.mrb[0].mxu0
    %1120 = vdwg.mxu0
    %v1121 = vadd.f32 %v1048, %v1118
    %v1122 = vxor.u32 %v1121, 2147483648
    %v1123 = vmul.f32 %v1122, 1.442695
    %v1124 = vpow.pop %v1123
    %v1125 = vadd.f32 %v1124, 1.0
    %v1126 = vrcp.pop %v1125
    %v1127 = vmul.f32 1.0, %v1126
    %v1128 = vadd.f32 %v1118, %v390
    %1130 = vrot.lane.b32.xlu0 %v1128, 64
    %v1131 = vpop.permute.xlu0 %1130
    %v1133 = vmul.f32 %v1127, %v1131
    %1135 = vrot.lane.b32.xlu0 %v1133, 64
    %v1136 = vpop.permute.xlu0 %1135
    %v1138 = vadd.f32 %v1048, %v1136
    %v1139 = vtanh.pop %v1138
    %v1140 = vsub.f32 1.0, %v1127
    %1142 = vrot.lane.b32.xlu0 %v1139, 96
    %v1143 = vpop.permute.xlu0 %1142
    %v1145 = vmul.f32 %v1140, %v1143
    %v1146 = vmul.f32 %v1127, %v1042
    %v1147 = vadd.f32 %v1145, %v1146
    %1149 = vrot.lane.b32.xlu0 %v1147, 96
    %v1150 = vpop.permute.xlu0 %1149
    %1152 = vst.msk [vmem:[#allocation3 + $0xe] sm:$0x3] %vm416, %v1150
    %v1153 = vld [vmem:[#allocation13] sm:$0xff]
    %v1154 = vld [vmem:[#allocation13 + $0x8] sm:$0xff]
    %v1155 = vld [vmem:[#allocation13 + $0x10] sm:$0xff]
    %v1156 = vld [vmem:[#allocation13 + $0x18] sm:$0xff]
    %v1157 = vld [vmem:[#allocation16] sm:$0x1]
    %v1159 = vlaneseq
    %v1160 = vshrl.u32 %v1159, 7
    %v1161 = vsub.s32 0, %v1160
    %v1162 = vrot.slane %v1157, %v1161
    %1164 = vmatprep.subr.mxu0 0.0
    %1165 = vmatpush1.msra.mxu0 %v1153
    %1166 = vmatprep.subr.mxu0 0.0
    %1167 = vmatpush1.msra.mxu0 %v1154
    %1168 = vmatprep.subr.mxu0 0.0
    %1169 = vmatpush1.msra.mxu0 %v1155
    %1170 = vmatprep.subr.mxu0 0.0
    %1171 = vmatpush1.msra.mxu0 %v1156
    %1172 = vmatprep.subr.mxu0 0.0
    %1173 = vmatpush1.msra.mxu0 0.0
    %1174 = vmatprep.subr.mxu0 0.0
    %1175 = vmatpush1.msra.mxu0 0.0
    %1176 = vmatprep.subr.mxu0 0.0
    %1177 = vmatpush1.msra.mxu0 0.0
    %1178 = vmatprep.subr.mxu0 0.0
    %1179 = vmatpush1.msra.mxu0 0.0
    %1180 = vmatprep.subr.mxu0 0.0
    %1181 = vmatpush1.msra.mxu0 0.0
    %1182 = vmatprep.subr.mxu0 0.0
    %1183 = vmatpush1.msra.mxu0 0.0
    %1184 = vmatprep.subr.mxu0 0.0
    %1185 = vmatpush1.msra.mxu0 0.0
    %1186 = vmatprep.subr.mxu0 0.0
    %1187 = vmatpush1.msra.mxu0 0.0
    %1188 = vmatprep.subr.mxu0 0.0
    %1189 = vmatpush1.msra.mxu0 0.0
    %1190 = vmatprep.subr.mxu0 0.0
    %1191 = vmatpush1.msra.mxu0 0.0
    %1192 = vmatprep.subr.mxu0 0.0
    %1193 = vmatpush1.msra.mxu0 0.0
    %1194 = vmatprep.subr.mxu0 0.0
    %1195 = vmatpush1.msra.mxu0 0.0
    %1196 = vmatprep.subr.mxu0 0.0
    %1197 = vmatpush1.msra.mxu0 0.0
    %1198 = vmatprep.subr.mxu0 0.0
    %1199 = vmatpush1.msra.mxu0 0.0
    %1200 = vmatprep.subr.mxu0 0.0
    %1201 = vmatpush1.msra.mxu0 0.0
    %1202 = vmatprep.subr.mxu0 0.0
    %1203 = vmatpush1.msra.mxu0 0.0
    %1204 = vmatprep.subr.mxu0 0.0
    %1205 = vmatpush1.msra.mxu0 0.0
    %1206 = vmatprep.subr.mxu0 0.0
    %1207 = vmatpush1.msra.mxu0 0.0
    %1208 = vmatprep.subr.mxu0 0.0
    %1209 = vmatpush1.msra.mxu0 0.0
    %1210 = vmatprep.subr.mxu0 0.0
    %1211 = vmatpush1.msra.mxu0 0.0
    %1212 = vmatprep.subr.mxu0 0.0
    %1213 = vmatpush1.msra.mxu0 0.0
    %1214 = vmatprep.subr.mxu0 0.0
    %1215 = vmatpush1.msra.mxu0 0.0
    %1216 = vmatprep.subr.mxu0 0.0
    %1217 = vmatpush1.msra.mxu0 0.0
    %1218 = vmatprep.subr.mxu0 0.0
    %1219 = vmatpush1.msra.mxu0 0.0
    %1220 = vmatprep.subr.mxu0 0.0
    %1221 = vmatpush1.msra.mxu0 0.0
    %1222 = vmatprep.subr.mxu0 0.0
    %1223 = vmatpush1.msra.mxu0 0.0
    %1224 = vmatprep.subr.mxu0 0.0
    %1225 = vmatpush1.msra.mxu0 0.0
    %1226 = vmatprep.subr.mxu0 0.0
    %1227 = vmatpush1.msra.mxu0 0.0
    %1228 = vmatprep.mubr.f32.mxu0 0.0
    %1229 = vmatmul.mubr.f32.gmra.mrb[0].mxu0 %v215
    %v1230 = vpop.f32.mrb[0].mxu0
    %v1231 = vadd.f32 %v1162, %v1230
    %v1232 = vpop.f32.mrb[0].mxu0
    %1233 = vmatprep.mubr.f32.mxu0 0.0
    %1234 = vmatmul.mubr.f32.gmra.mrb[0].mxu0 %v218
    %v1235 = vpop.f32.mrb[0].mxu0
    %v1236 = vadd.f32 %v1162, %v1235
    %v1237 = vpop.f32.mrb[0].mxu0
    %1238 = vdwg.mxu0
    %1239 = vst.msk [vmem:[#allocation2] sm:$0xff] %vm295, %v1231
    %1240 = vst.msk [vmem:[#allocation2 + $0x8] sm:$0xff] %vm295, %v1236
    %v1241 = vld [vmem:[#allocation15] sm:$0xff]
    %v1242 = vld [vmem:[#allocation15 + $0x8] sm:$0xff]
    %v1243 = vld [vmem:[#allocation15 + $0x10] sm:$0xff]
    %v1244 = vld [vmem:[#allocation15 + $0x18] sm:$0xff]
    %v1245 = vld [vmem:[#allocation18] sm:$0x1]
    %v1246 = vld [vmem:[#allocation2 + $0xe] sm:$0x3]
    %1247 = vmatprep.subr.mxu0 0.0
    %1248 = vmatpush1.msra.mxu0 %v1241
    %1249 = vmatprep.subr.mxu0 0.0
    %1250 = vmatpush1.msra.mxu0 %v1242
    %1251 = vmatprep.subr.mxu0 0.0
    %1252 = vmatpush1.msra.mxu0 %v1243
    %1253 = vmatprep.subr.mxu0 0.0
    %1254 = vmatpush1.msra.mxu0 %v1244
    %1255 = vmatprep.subr.mxu0 0.0
    %1256 = vmatpush1.msra.mxu0 0.0
    %1257 = vmatprep.subr.mxu0 0.0
    %1258 = vmatpush1.msra.mxu0 0.0
    %1259 = vmatprep.subr.mxu0 0.0
    %1260 = vmatpush1.msra.mxu0 0.0
    %1261 = vmatprep.subr.mxu0 0.0
    %1262 = vmatpush1.msra.mxu0 0.0
    %1263 = vmatprep.subr.mxu0 0.0
    %1264 = vmatpush1.msra.mxu0 0.0
    %1265 = vmatprep.subr.mxu0 0.0
    %1266 = vmatpush1.msra.mxu0 0.0
    %1267 = vmatprep.subr.mxu0 0.0
    %1268 = vmatpush1.msra.mxu0 0.0
    %1269 = vmatprep.subr.mxu0 0.0
    %1270 = vmatpush1.msra.mxu0 0.0
    %1271 = vmatprep.subr.mxu0 0.0
    %1272 = vmatpush1.msra.mxu0 0.0
    %1273 = vmatprep.subr.mxu0 0.0
    %1274 = vmatpush1.msra.mxu0 0.0
    %1275 = vmatprep.subr.mxu0 0.0
    %1276 = vmatpush1.msra.mxu0 0.0
    %1277 = vmatprep.subr.mxu0 0.0
    %1278 = vmatpush1.msra.mxu0 0.0
    %1279 = vmatprep.subr.mxu0 0.0
    %1280 = vmatpush1.msra.mxu0 0.0
    %1281 = vmatprep.subr.mxu0 0.0
    %1282 = vmatpush1.msra.mxu0 0.0
    %1283 = vmatprep.subr.mxu0 0.0
    %1284 = vmatpush1.msra.mxu0 0.0
    %1285 = vmatprep.subr.mxu0 0.0
    %1286 = vmatpush1.msra.mxu0 0.0
    %1287 = vmatprep.subr.mxu0 0.0
    %1288 = vmatpush1.msra.mxu0 0.0
    %1289 = vmatprep.subr.mxu0 0.0
    %1290 = vmatpush1.msra.mxu0 0.0
    %1291 = vmatprep.subr.mxu0 0.0
    %1292 = vmatpush1.msra.mxu0 0.0
    %1293 = vmatprep.subr.mxu0 0.0
    %1294 = vmatpush1.msra.mxu0 0.0
    %1295 = vmatprep.subr.mxu0 0.0
    %1296 = vmatpush1.msra.mxu0 0.0
    %1297 = vmatprep.subr.mxu0 0.0
    %1298 = vmatpush1.msra.mxu0 0.0
    %1299 = vmatprep.subr.mxu0 0.0
    %1300 = vmatpush1.msra.mxu0 0.0
    %1301 = vmatprep.subr.mxu0 0.0
    %1302 = vmatpush1.msra.mxu0 0.0
    %1303 = vmatprep.subr.mxu0 0.0
    %1304 = vmatpush1.msra.mxu0 0.0
    %1305 = vmatprep.subr.mxu0 0.0
    %1306 = vmatpush1.msra.mxu0 0.0
    %1307 = vmatprep.subr.mxu0 0.0
    %1308 = vmatpush1.msra.mxu0 0.0
    %1309 = vmatprep.subr.mxu0 0.0
    %1310 = vmatpush1.msra.mxu0 0.0
    %1311 = vmatprep.mubr.f32.mxu0 0.0
    %1312 = vmatmul.mubr.f32.gmra.mrb[0].mxu0 %v305
    %v1313 = vpop.f32.mrb[0].mxu0
    %v1314 = vadd.f32 0.0, %v1313
    %v1315 = vpop.f32.mrb[0].mxu0
    %1316 = vdwg.mxu0
    %v1317 = vadd.f32 %v1246, %v1314
    %v1318 = vxor.u32 %v1317, 2147483648
    %v1319 = vmul.f32 %v1318, 1.442695
    %v1320 = vpow.pop %v1319
    %v1321 = vadd.f32 %v1320, 1.0
    %v1322 = vrcp.pop %v1321
    %v1323 = vmul.f32 1.0, %v1322
    %v1325 = vlaneseq
    %v1326 = vshrl.u32 %v1325, 7
    %v1327 = vsub.s32 0, %v1326
    %v1328 = vrot.slane %v1245, %v1327
    %1329 = vrot.lane.b32.xlu0 %v1328, 64
    %v1330 = vpop.permute.xlu0 %1329
    %v1332 = vadd.f32 %v1314, %v1330
    %1334 = vrot.lane.b32.xlu0 %v1332, 64
    %v1335 = vpop.permute.xlu0 %1334
    %v1337 = vmul.f32 %v1323, %v1335
    %1339 = vrot.lane.b32.xlu0 %v1337, 64
    %v1340 = vpop.permute.xlu0 %1339
    %v1342 = vadd.f32 %v1246, %v1340
    %v1343 = vtanh.pop %v1342
    %v1344 = vsub.f32 1.0, %v1323
    %1346 = vrot.lane.b32.xlu0 %v1343, 96
    %v1347 = vpop.permute.xlu0 %1346
    %v1349 = vmul.f32 %v1344, %v1347
    %v1350 = vmul.f32 %v1323, 0.0
    %v1351 = vadd.f32 %v1349, %v1350
    %1353 = vrot.lane.b32.xlu0 %v1351, 96
    %v1354 = vpop.permute.xlu0 %1353
    %1356 = vst.msk [vmem:[#allocation4 + $0xe] sm:$0x3] %vm416, %v1354
    %v1357 = vld [vmem:[#allocation2 + $0xc] sm:$0x3]
    %v1358 = vsel %vm213, %v1354, 0
    %1360 = vmatprep.subr.mxu0 0.0
    %1361 = vmatpush1.msra.mxu0 %v1241
    %1362 = vmatprep.subr.mxu0 0.0
    %1363 = vmatpush1.msra.mxu0 %v1242
    %1364 = vmatprep.subr.mxu0 0.0
    %1365 = vmatpush1.msra.mxu0 %v1243
    %1366 = vmatprep.subr.mxu0 0.0
    %1367 = vmatpush1.msra.mxu0 %v1244
    %1368 = vmatprep.subr.mxu0 0.0
    %1369 = vmatpush1.msra.mxu0 0.0
    %1370 = vmatprep.subr.mxu0 0.0
    %1371 = vmatpush1.msra.mxu0 0.0
    %1372 = vmatprep.subr.mxu0 0.0
    %1373 = vmatpush1.msra.mxu0 0.0
    %1374 = vmatprep.subr.mxu0 0.0
    %1375 = vmatpush1.msra.mxu0 0.0
    %1376 = vmatprep.subr.mxu0 0.0
    %1377 = vmatpush1.msra.mxu0 0.0
    %1378 = vmatprep.subr.mxu0 0.0
    %1379 = vmatpush1.msra.mxu0 0.0
    %1380 = vmatprep.subr.mxu0 0.0
    %1381 = vmatpush1.msra.mxu0 0.0
    %1382 = vmatprep.subr.mxu0 0.0
    %1383 = vmatpush1.msra.mxu0 0.0
    %1384 = vmatprep.subr.mxu0 0.0
    %1385 = vmatpush1.msra.mxu0 0.0
    %1386 = vmatprep.subr.mxu0 0.0
    %1387 = vmatpush1.msra.mxu0 0.0
    %1388 = vmatprep.subr.mxu0 0.0
    %1389 = vmatpush1.msra.mxu0 0.0
    %1390 = vmatprep.subr.mxu0 0.0
    %1391 = vmatpush1.msra.mxu0 0.0
    %1392 = vmatprep.subr.mxu0 0.0
    %1393 = vmatpush1.msra.mxu0 0.0
    %1394 = vmatprep.subr.mxu0 0.0
    %1395 = vmatpush1.msra.mxu0 0.0
    %1396 = vmatprep.subr.mxu0 0.0
    %1397 = vmatpush1.msra.mxu0 0.0
    %1398 = vmatprep.subr.mxu0 0.0
    %1399 = vmatpush1.msra.mxu0 0.0
    %1400 = vmatprep.subr.mxu0 0.0
    %1401 = vmatpush1.msra.mxu0 0.0
    %1402 = vmatprep.subr.mxu0 0.0
    %1403 = vmatpush1.msra.mxu0 0.0
    %1404 = vmatprep.subr.mxu0 0.0
    %1405 = vmatpush1.msra.mxu0 0.0
    %1406 = vmatprep.subr.mxu0 0.0
    %1407 = vmatpush1.msra.mxu0 0.0
    %1408 = vmatprep.subr.mxu0 0.0
    %1409 = vmatpush1.msra.mxu0 0.0
    %1410 = vmatprep.subr.mxu0 0.0
    %1411 = vmatpush1.msra.mxu0 0.0
    %1412 = vmatprep.subr.mxu0 0.0
    %1413 = vmatpush1.msra.mxu0 0.0
    %1414 = vmatprep.subr.mxu0 0.0
    %1415 = vmatpush1.msra.mxu0 0.0
    %1416 = vmatprep.subr.mxu0 0.0
    %1417 = vmatpush1.msra.mxu0 0.0
    %1418 = vmatprep.subr.mxu0 0.0
    %1419 = vmatpush1.msra.mxu0 0.0
    %1420 = vmatprep.subr.mxu0 0.0
    %1421 = vmatpush1.msra.mxu0 0.0
    %1422 = vmatprep.subr.mxu0 0.0
    %1423 = vmatpush1.msra.mxu0 0.0
    %1424 = vmatprep.mubr.f32.mxu0 0.0
    %1425 = vmatmul.mubr.f32.gmra.mrb[0].mxu0 %v1358
    %v1426 = vpop.f32.mrb[0].mxu0
    %v1427 = vadd.f32 0.0, %v1426
    %v1428 = vpop.f32.mrb[0].mxu0
    %1429 = vdwg.mxu0
    %v1430 = vadd.f32 %v1357, %v1427
    %v1431 = vxor.u32 %v1430, 2147483648
    %v1432 = vmul.f32 %v1431, 1.442695
    %v1433 = vpow.pop %v1432
    %v1434 = vadd.f32 %v1433, 1.0
    %v1435 = vrcp.pop %v1434
    %v1436 = vmul.f32 1.0, %v1435
    %v1437 = vadd.f32 %v1427, %v1330
    %1439 = vrot.lane.b32.xlu0 %v1437, 64
    %v1440 = vpop.permute.xlu0 %1439
    %v1442 = vmul.f32 %v1436, %v1440
    %1444 = vrot.lane.b32.xlu0 %v1442, 64
    %v1445 = vpop.permute.xlu0 %1444
    %v1447 = vadd.f32 %v1357, %v1445
    %v1448 = vtanh.pop %v1447
    %v1449 = vsub.f32 1.0, %v1436
    %1451 = vrot.lane.b32.xlu0 %v1448, 96
    %v1452 = vpop.permute.xlu0 %1451
    %v1454 = vmul.f32 %v1449, %v1452
    %v1455 = vmul.f32 %v1436, %v1351
    %v1456 = vadd.f32 %v1454, %v1455
    %1458 = vrot.lane.b32.xlu0 %v1456, 96
    %v1459 = vpop.permute.xlu0 %1458
    %1461 = vst.msk [vmem:[#allocation4 + $0xc] sm:$0x3] %vm416, %v1459
    %v1462 = vld [vmem:[#allocation2 + $0xa] sm:$0x3]
    %v1463 = vsel %vm213, %v1459, 0
    %1465 = vmatprep.subr.mxu0 0.0
    %1466 = vmatpush1.msra.mxu0 %v1241
    %1467 = vmatprep.subr.mxu0 0.0
    %1468 = vmatpush1.msra.mxu0 %v1242
    %1469 = vmatprep.subr.mxu0 0.0
    %1470 = vmatpush1.msra.mxu0 %v1243
    %1471 = vmatprep.subr.mxu0 0.0
    %1472 = vmatpush1.msra.mxu0 %v1244
    %1473 = vmatprep.subr.mxu0 0.0
    %1474 = vmatpush1.msra.mxu0 0.0
    %1475 = vmatprep.subr.mxu0 0.0
    %1476 = vmatpush1.msra.mxu0 0.0
    %1477 = vmatprep.subr.mxu0 0.0
    %1478 = vmatpush1.msra.mxu0 0.0
    %1479 = vmatprep.subr.mxu0 0.0
    %1480 = vmatpush1.msra.mxu0 0.0
    %1481 = vmatprep.subr.mxu0 0.0
    %1482 = vmatpush1.msra.mxu0 0.0
    %1483 = vmatprep.subr.mxu0 0.0
    %1484 = vmatpush1.msra.mxu0 0.0
    %1485 = vmatprep.subr.mxu0 0.0
    %1486 = vmatpush1.msra.mxu0 0.0
    %1487 = vmatprep.subr.mxu0 0.0
    %1488 = vmatpush1.msra.mxu0 0.0
    %1489 = vmatprep.subr.mxu0 0.0
    %1490 = vmatpush1.msra.mxu0 0.0
    %1491 = vmatprep.subr.mxu0 0.0
    %1492 = vmatpush1.msra.mxu0 0.0
    %1493 = vmatprep.subr.mxu0 0.0
    %1494 = vmatpush1.msra.mxu0 0.0
    %1495 = vmatprep.subr.mxu0 0.0
    %1496 = vmatpush1.msra.mxu0 0.0
    %1497 = vmatprep.subr.mxu0 0.0
    %1498 = vmatpush1.msra.mxu0 0.0
    %1499 = vmatprep.subr.mxu0 0.0
    %1500 = vmatpush1.msra.mxu0 0.0
    %1501 = vmatprep.subr.mxu0 0.0
    %1502 = vmatpush1.msra.mxu0 0.0
    %1503 = vmatprep.subr.mxu0 0.0
    %1504 = vmatpush1.msra.mxu0 0.0
    %1505 = vmatprep.subr.mxu0 0.0
    %1506 = vmatpush1.msra.mxu0 0.0
    %1507 = vmatprep.subr.mxu0 0.0
    %1508 = vmatpush1.msra.mxu0 0.0
    %1509 = vmatprep.subr.mxu0 0.0
    %1510 = vmatpush1.msra.mxu0 0.0
    %1511 = vmatprep.subr.mxu0 0.0
    %1512 = vmatpush1.msra.mxu0 0.0
    %1513 = vmatprep.subr.mxu0 0.0
    %1514 = vmatpush1.msra.mxu0 0.0
    %1515 = vmatprep.subr.mxu0 0.0
    %1516 = vmatpush1.msra.mxu0 0.0
    %1517 = vmatprep.subr.mxu0 0.0
    %1518 = vmatpush1.msra.mxu0 0.0
    %1519 = vmatprep.subr.mxu0 0.0
    %1520 = vmatpush1.msra.mxu0 0.0
    %1521 = vmatprep.subr.mxu0 0.0
    %1522 = vmatpush1.msra.mxu0 0.0
    %1523 = vmatprep.subr.mxu0 0.0
    %1524 = vmatpush1.msra.mxu0 0.0
    %1525 = vmatprep.subr.mxu0 0.0
    %1526 = vmatpush1.msra.mxu0 0.0
    %1527 = vmatprep.subr.mxu0 0.0
    %1528 = vmatpush1.msra.mxu0 0.0
    %1529 = vmatprep.mubr.f32.mxu0 0.0
    %1530 = vmatmul.mubr.f32.gmra.mrb[0].mxu0 %v1463
    %v1531 = vpop.f32.mrb[0].mxu0
    %v1532 = vadd.f32 0.0, %v1531
    %v1533 = vpop.f32.mrb[0].mxu0
    %1534 = vdwg.mxu0
    %v1535 = vadd.f32 %v1462, %v1532
    %v1536 = vxor.u32 %v1535, 2147483648
    %v1537 = vmul.f32 %v1536, 1.442695
    %v1538 = vpow.pop %v1537
    %v1539 = vadd.f32 %v1538, 1.0
    %v1540 = vrcp.pop %v1539
    %v1541 = vmul.f32 1.0, %v1540
    %v1542 = vadd.f32 %v1532, %v1330
    %1544 = vrot.lane.b32.xlu0 %v1542, 64
    %v1545 = vpop.permute.xlu0 %1544
    %v1547 = vmul.f32 %v1541, %v1545
    %1549 = vrot.lane.b32.xlu0 %v1547, 64
    %v1550 = vpop.permute.xlu0 %1549
    %v1552 = vadd.f32 %v1462, %v1550
    %v1553 = vtanh.pop %v1552
    %v1554 = vsub.f32 1.0, %v1541
    %1556 = vrot.lane.b32.xlu0 %v1553, 96
    %v1557 = vpop.permute.xlu0 %1556
    %v1559 = vmul.f32 %v1554, %v1557
    %v1560 = vmul.f32 %v1541, %v1456
    %v1561 = vadd.f32 %v1559, %v1560
    %1563 = vrot.lane.b32.xlu0 %v1561, 96
    %v1564 = vpop.permute.xlu0 %1563
    %1566 = vst.msk [vmem:[#allocation4 + $0xa] sm:$0x3] %vm416, %v1564
    %v1567 = vld [vmem:[#allocation2 + $0x8] sm:$0x3]
    %v1568 = vsel %vm213, %v1564, 0
    %1570 = vmatprep.subr.mxu0 0.0
    %1571 = vmatpush1.msra.mxu0 %v1241
    %1572 = vmatprep.subr.mxu0 0.0
    %1573 = vmatpush1.msra.mxu0 %v1242
    %1574 = vmatprep.subr.mxu0 0.0
    %1575 = vmatpush1.msra.mxu0 %v1243
    %1576 = vmatprep.subr.mxu0 0.0
    %1577 = vmatpush1.msra.mxu0 %v1244
    %1578 = vmatprep.subr.mxu0 0.0
    %1579 = vmatpush1.msra.mxu0 0.0
    %1580 = vmatprep.subr.mxu0 0.0
    %1581 = vmatpush1.msra.mxu0 0.0
    %1582 = vmatprep.subr.mxu0 0.0
    %1583 = vmatpush1.msra.mxu0 0.0
    %1584 = vmatprep.subr.mxu0 0.0
    %1585 = vmatpush1.msra.mxu0 0.0
    %1586 = vmatprep.subr.mxu0 0.0
    %1587 = vmatpush1.msra.mxu0 0.0
    %1588 = vmatprep.subr.mxu0 0.0
    %1589 = vmatpush1.msra.mxu0 0.0
    %1590 = vmatprep.subr.mxu0 0.0
    %1591 = vmatpush1.msra.mxu0 0.0
    %1592 = vmatprep.subr.mxu0 0.0
    %1593 = vmatpush1.msra.mxu0 0.0
    %1594 = vmatprep.subr.mxu0 0.0
    %1595 = vmatpush1.msra.mxu0 0.0
    %1596 = vmatprep.subr.mxu0 0.0
    %1597 = vmatpush1.msra.mxu0 0.0
    %1598 = vmatprep.subr.mxu0 0.0
    %1599 = vmatpush1.msra.mxu0 0.0
    %1600 = vmatprep.subr.mxu0 0.0
    %1601 = vmatpush1.msra.mxu0 0.0
    %1602 = vmatprep.subr.mxu0 0.0
    %1603 = vmatpush1.msra.mxu0 0.0
    %1604 = vmatprep.subr.mxu0 0.0
    %1605 = vmatpush1.msra.mxu0 0.0
    %1606 = vmatprep.subr.mxu0 0.0
    %1607 = vmatpush1.msra.mxu0 0.0
    %1608 = vmatprep.subr.mxu0 0.0
    %1609 = vmatpush1.msra.mxu0 0.0
    %1610 = vmatprep.subr.mxu0 0.0
    %1611 = vmatpush1.msra.mxu0 0.0
    %1612 = vmatprep.subr.mxu0 0.0
    %1613 = vmatpush1.msra.mxu0 0.0
    %1614 = vmatprep.subr.mxu0 0.0
    %1615 = vmatpush1.msra.mxu0 0.0
    %1616 = vmatprep.subr.mxu0 0.0
    %1617 = vmatpush1.msra.mxu0 0.0
    %1618 = vmatprep.subr.mxu0 0.0
    %1619 = vmatpush1.msra.mxu0 0.0
    %1620 = vmatprep.subr.mxu0 0.0
    %1621 = vmatpush1.msra.mxu0 0.0
    %1622 = vmatprep.subr.mxu0 0.0
    %1623 = vmatpush1.msra.mxu0 0.0
    %1624 = vmatprep.subr.mxu0 0.0
    %1625 = vmatpush1.msra.mxu0 0.0
    %1626 = vmatprep.subr.mxu0 0.0
    %1627 = vmatpush1.msra.mxu0 0.0
    %1628 = vmatprep.subr.mxu0 0.0
    %1629 = vmatpush1.msra.mxu0 0.0
    %1630 = vmatprep.subr.mxu0 0.0
    %1631 = vmatpush1.msra.mxu0 0.0
    %1632 = vmatprep.subr.mxu0 0.0
    %1633 = vmatpush1.msra.mxu0 0.0
    %1634 = vmatprep.mubr.f32.mxu0 0.0
    %1635 = vmatmul.mubr.f32.gmra.mrb[0].mxu0 %v1568
    %v1636 = vpop.f32.mrb[0].mxu0
    %v1637 = vadd.f32 0.0, %v1636
    %v1638 = vpop.f32.mrb[0].mxu0
    %1639 = vdwg.mxu0
    %v1640 = vadd.f32 %v1567, %v1637
    %v1641 = vxor.u32 %v1640, 2147483648
    %v1642 = vmul.f32 %v1641, 1.442695
    %v1643 = vpow.pop %v1642
    %v1644 = vadd.f32 %v1643, 1.0
    %v1645 = vrcp.pop %v1644
    %v1646 = vmul.f32 1.0, %v1645
    %v1647 = vadd.f32 %v1637, %v1330
    %1649 = vrot.lane.b32.xlu0 %v1647, 64
    %v1650 = vpop.permute.xlu0 %1649
    %v1652 = vmul.f32 %v1646, %v1650
    %1654 = vrot.lane.b32.xlu0 %v1652, 64
    %v1655 = vpop.permute.xlu0 %1654
    %v1657 = vadd.f32 %v1567, %v1655
    %v1658 = vtanh.pop %v1657
    %v1659 = vsub.f32 1.0, %v1646
    %1661 = vrot.lane.b32.xlu0 %v1658, 96
    %v1662 = vpop.permute.xlu0 %1661
    %v1664 = vmul.f32 %v1659, %v1662
    %v1665 = vmul.f32 %v1646, %v1561
    %v1666 = vadd.f32 %v1664, %v1665
    %1668 = vrot.lane.b32.xlu0 %v1666, 96
    %v1669 = vpop.permute.xlu0 %1668
    %1671 = vst.msk [vmem:[#allocation4 + $0x8] sm:$0x3] %vm416, %v1669
    %v1672 = vld [vmem:[#allocation2 + $0x6] sm:$0x3]
    %v1673 = vsel %vm213, %v1669, 0
    %1675 = vmatprep.subr.mxu0 0.0
    %1676 = vmatpush1.msra.mxu0 %v1241
    %1677 = vmatprep.subr.mxu0 0.0
    %1678 = vmatpush1.msra.mxu0 %v1242
    %1679 = vmatprep.subr.mxu0 0.0
    %1680 = vmatpush1.msra.mxu0 %v1243
    %1681 = vmatprep.subr.mxu0 0.0
    %1682 = vmatpush1.msra.mxu0 %v1244
    %1683 = vmatprep.subr.mxu0 0.0
    %1684 = vmatpush1.msra.mxu0 0.0
    %1685 = vmatprep.subr.mxu0 0.0
    %1686 = vmatpush1.msra.mxu0 0.0
    %1687 = vmatprep.subr.mxu0 0.0
    %1688 = vmatpush1.msra.mxu0 0.0
    %1689 = vmatprep.subr.mxu0 0.0
    %1690 = vmatpush1.msra.mxu0 0.0
    %1691 = vmatprep.subr.mxu0 0.0
    %1692 = vmatpush1.msra.mxu0 0.0
    %1693 = vmatprep.subr.mxu0 0.0
    %1694 = vmatpush1.msra.mxu0 0.0
    %1695 = vmatprep.subr.mxu0 0.0
    %1696 = vmatpush1.msra.mxu0 0.0
    %1697 = vmatprep.subr.mxu0 0.0
    %1698 = vmatpush1.msra.mxu0 0.0
    %1699 = vmatprep.subr.mxu0 0.0
    %1700 = vmatpush1.msra.mxu0 0.0
    %1701 = vmatprep.subr.mxu0 0.0
    %1702 = vmatpush1.msra.mxu0 0.0
    %1703 = vmatprep.subr.mxu0 0.0
    %1704 = vmatpush1.msra.mxu0 0.0
    %1705 = vmatprep.subr.mxu0 0.0
    %1706 = vmatpush1.msra.mxu0 0.0
    %1707 = vmatprep.subr.mxu0 0.0
    %1708 = vmatpush1.msra.mxu0 0.0
    %1709 = vmatprep.subr.mxu0 0.0
    %1710 = vmatpush1.msra.mxu0 0.0
    %1711 = vmatprep.subr.mxu0 0.0
    %1712 = vmatpush1.msra.mxu0 0.0
    %1713 = vmatprep.subr.mxu0 0.0
    %1714 = vmatpush1.msra.mxu0 0.0
    %1715 = vmatprep.subr.mxu0 0.0
    %1716 = vmatpush1.msra.mxu0 0.0
    %1717 = vmatprep.subr.mxu0 0.0
    %1718 = vmatpush1.msra.mxu0 0.0
    %1719 = vmatprep.subr.mxu0 0.0
    %1720 = vmatpush1.msra.mxu0 0.0
    %1721 = vmatprep.subr.mxu0 0.0
    %1722 = vmatpush1.msra.mxu0 0.0
    %1723 = vmatprep.subr.mxu0 0.0
    %1724 = vmatpush1.msra.mxu0 0.0
    %1725 = vmatprep.subr.mxu0 0.0
    %1726 = vmatpush1.msra.mxu0 0.0
    %1727 = vmatprep.subr.mxu0 0.0
    %1728 = vmatpush1.msra.mxu0 0.0
    %1729 = vmatprep.subr.mxu0 0.0
    %1730 = vmatpush1.msra.mxu0 0.0
    %1731 = vmatprep.subr.mxu0 0.0
    %1732 = vmatpush1.msra.mxu0 0.0
    %1733 = vmatprep.subr.mxu0 0.0
    %1734 = vmatpush1.msra.mxu0 0.0
    %1735 = vmatprep.subr.mxu0 0.0
    %1736 = vmatpush1.msra.mxu0 0.0
    %1737 = vmatprep.subr.mxu0 0.0
    %1738 = vmatpush1.msra.mxu0 0.0
    %1739 = vmatprep.mubr.f32.mxu0 0.0
    %1740 = vmatmul.mubr.f32.gmra.mrb[0].mxu0 %v1673
    %v1741 = vpop.f32.mrb[0].mxu0
    %v1742 = vadd.f32 0.0, %v1741
    %v1743 = vpop.f32.mrb[0].mxu0
    %1744 = vdwg.mxu0
    %v1745 = vadd.f32 %v1672, %v1742
    %v1746 = vxor.u32 %v1745, 2147483648
    %v1747 = vmul.f32 %v1746, 1.442695
    %v1748 = vpow.pop %v1747
    %v1749 = vadd.f32 %v1748, 1.0
    %v1750 = vrcp.pop %v1749
    %v1751 = vmul.f32 1.0, %v1750
    %v1752 = vadd.f32 %v1742, %v1330
    %1754 = vrot.lane.b32.xlu0 %v1752, 64
    %v1755 = vpop.permute.xlu0 %1754
    %v1757 = vmul.f32 %v1751, %v1755
    %1759 = vrot.lane.b32.xlu0 %v1757, 64
    %v1760 = vpop.permute.xlu0 %1759
    %v1762 = vadd.f32 %v1672, %v1760
    %v1763 = vtanh.pop %v1762
    %v1764 = vsub.f32 1.0, %v1751
    %1766 = vrot.lane.b32.xlu0 %v1763, 96
    %v1767 = vpop.permute.xlu0 %1766
    %v1769 = vmul.f32 %v1764, %v1767
    %v1770 = vmul.f32 %v1751, %v1666
    %v1771 = vadd.f32 %v1769, %v1770
    %1773 = vrot.lane.b32.xlu0 %v1771, 96
    %v1774 = vpop.permute.xlu0 %1773
    %1776 = vst.msk [vmem:[#allocation4 + $0x6] sm:$0x3] %vm416, %v1774
    %v1777 = vld [vmem:[#allocation2 + $0x4] sm:$0x3]
    %v1778 = vsel %vm213, %v1774, 0
    %1780 = vmatprep.subr.mxu0 0.0
    %1781 = vmatpush1.msra.mxu0 %v1241
    %1782 = vmatprep.subr.mxu0 0.0
    %1783 = vmatpush1.msra.mxu0 %v1242
    %1784 = vmatprep.subr.mxu0 0.0
    %1785 = vmatpush1.msra.mxu0 %v1243
    %1786 = vmatprep.subr.mxu0 0.0
    %1787 = vmatpush1.msra.mxu0 %v1244
    %1788 = vmatprep.subr.mxu0 0.0
    %1789 = vmatpush1.msra.mxu0 0.0
    %1790 = vmatprep.subr.mxu0 0.0
    %1791 = vmatpush1.msra.mxu0 0.0
    %1792 = vmatprep.subr.mxu0 0.0
    %1793 = vmatpush1.msra.mxu0 0.0
    %1794 = vmatprep.subr.mxu0 0.0
    %1795 = vmatpush1.msra.mxu0 0.0
    %1796 = vmatprep.subr.mxu0 0.0
    %1797 = vmatpush1.msra.mxu0 0.0
    %1798 = vmatprep.subr.mxu0 0.0
    %1799 = vmatpush1.msra.mxu0 0.0
    %1800 = vmatprep.subr.mxu0 0.0
    %1801 = vmatpush1.msra.mxu0 0.0
    %1802 = vmatprep.subr.mxu0 0.0
    %1803 = vmatpush1.msra.mxu0 0.0
    %1804 = vmatprep.subr.mxu0 0.0
    %1805 = vmatpush1.msra.mxu0 0.0
    %1806 = vmatprep.subr.mxu0 0.0
    %1807 = vmatpush1.msra.mxu0 0.0
    %1808 = vmatprep.subr.mxu0 0.0
    %1809 = vmatpush1.msra.mxu0 0.0
    %1810 = vmatprep.subr.mxu0 0.0
    %1811 = vmatpush1.msra.mxu0 0.0
    %1812 = vmatprep.subr.mxu0 0.0
    %1813 = vmatpush1.msra.mxu0 0.0
    %1814 = vmatprep.subr.mxu0 0.0
    %1815 = vmatpush1.msra.mxu0 0.0
    %1816 = vmatprep.subr.mxu0 0.0
    %1817 = vmatpush1.msra.mxu0 0.0
    %1818 = vmatprep.subr.mxu0 0.0
    %1819 = vmatpush1.msra.mxu0 0.0
    %1820 = vmatprep.subr.mxu0 0.0
    %1821 = vmatpush1.msra.mxu0 0.0
    %1822 = vmatprep.subr.mxu0 0.0
    %1823 = vmatpush1.msra.mxu0 0.0
    %1824 = vmatprep.subr.mxu0 0.0
    %1825 = vmatpush1.msra.mxu0 0.0
    %1826 = vmatprep.subr.mxu0 0.0
    %1827 = vmatpush1.msra.mxu0 0.0
    %1828 = vmatprep.subr.mxu0 0.0
    %1829 = vmatpush1.msra.mxu0 0.0
    %1830 = vmatprep.subr.mxu0 0.0
    %1831 = vmatpush1.msra.mxu0 0.0
    %1832 = vmatprep.subr.mxu0 0.0
    %1833 = vmatpush1.msra.mxu0 0.0
    %1834 = vmatprep.subr.mxu0 0.0
    %1835 = vmatpush1.msra.mxu0 0.0
    %1836 = vmatprep.subr.mxu0 0.0
    %1837 = vmatpush1.msra.mxu0 0.0
    %1838 = vmatprep.subr.mxu0 0.0
    %1839 = vmatpush1.msra.mxu0 0.0
    %1840 = vmatprep.subr.mxu0 0.0
    %1841 = vmatpush1.msra.mxu0 0.0
    %1842 = vmatprep.subr.mxu0 0.0
    %1843 = vmatpush1.msra.mxu0 0.0
    %1844 = vmatprep.mubr.f32.mxu0 0.0
    %1845 = vmatmul.mubr.f32.gmra.mrb[0].mxu0 %v1778
    %v1846 = vpop.f32.mrb[0].mxu0
    %v1847 = vadd.f32 0.0, %v1846
    %v1848 = vpop.f32.mrb[0].mxu0
    %1849 = vdwg.mxu0
    %v1850 = vadd.f32 %v1777, %v1847
    %v1851 = vxor.u32 %v1850, 2147483648
    %v1852 = vmul.f32 %v1851, 1.442695
    %v1853 = vpow.pop %v1852
    %v1854 = vadd.f32 %v1853, 1.0
    %v1855 = vrcp.pop %v1854
    %v1856 = vmul.f32 1.0, %v1855
    %v1857 = vadd.f32 %v1847, %v1330
    %1859 = vrot.lane.b32.xlu0 %v1857, 64
    %v1860 = vpop.permute.xlu0 %1859
    %v1862 = vmul.f32 %v1856, %v1860
    %1864 = vrot.lane.b32.xlu0 %v1862, 64
    %v1865 = vpop.permute.xlu0 %1864
    %v1867 = vadd.f32 %v1777, %v1865
    %v1868 = vtanh.pop %v1867
    %v1869 = vsub.f32 1.0, %v1856
    %1871 = vrot.lane.b32.xlu0 %v1868, 96
    %v1872 = vpop.permute.xlu0 %1871
    %v1874 = vmul.f32 %v1869, %v1872
    %v1875 = vmul.f32 %v1856, %v1771
    %v1876 = vadd.f32 %v1874, %v1875
    %1878 = vrot.lane.b32.xlu0 %v1876, 96
    %v1879 = vpop.permute.xlu0 %1878
    %1881 = vst.msk [vmem:[#allocation4 + $0x4] sm:$0x3] %vm416, %v1879
    %v1882 = vld [vmem:[#allocation2 + $0x2] sm:$0x3]
    %v1883 = vsel %vm213, %v1879, 0
    %1885 = vmatprep.subr.mxu0 0.0
    %1886 = vmatpush1.msra.mxu0 %v1241
    %1887 = vmatprep.subr.mxu0 0.0
    %1888 = vmatpush1.msra.mxu0 %v1242
    %1889 = vmatprep.subr.mxu0 0.0
    %1890 = vmatpush1.msra.mxu0 %v1243
    %1891 = vmatprep.subr.mxu0 0.0
    %1892 = vmatpush1.msra.mxu0 %v1244
    %1893 = vmatprep.subr.mxu0 0.0
    %1894 = vmatpush1.msra.mxu0 0.0
    %1895 = vmatprep.subr.mxu0 0.0
    %1896 = vmatpush1.msra.mxu0 0.0
    %1897 = vmatprep.subr.mxu0 0.0
    %1898 = vmatpush1.msra.mxu0 0.0
    %1899 = vmatprep.subr.mxu0 0.0
    %1900 = vmatpush1.msra.mxu0 0.0
    %1901 = vmatprep.subr.mxu0 0.0
    %1902 = vmatpush1.msra.mxu0 0.0
    %1903 = vmatprep.subr.mxu0 0.0
    %1904 = vmatpush1.msra.mxu0 0.0
    %1905 = vmatprep.subr.mxu0 0.0
    %1906 = vmatpush1.msra.mxu0 0.0
    %1907 = vmatprep.subr.mxu0 0.0
    %1908 = vmatpush1.msra.mxu0 0.0
    %1909 = vmatprep.subr.mxu0 0.0
    %1910 = vmatpush1.msra.mxu0 0.0
    %1911 = vmatprep.subr.mxu0 0.0
    %1912 = vmatpush1.msra.mxu0 0.0
    %1913 = vmatprep.subr.mxu0 0.0
    %1914 = vmatpush1.msra.mxu0 0.0
    %1915 = vmatprep.subr.mxu0 0.0
    %1916 = vmatpush1.msra.mxu0 0.0
    %1917 = vmatprep.subr.mxu0 0.0
    %1918 = vmatpush1.msra.mxu0 0.0
    %1919 = vmatprep.subr.mxu0 0.0
    %1920 = vmatpush1.msra.mxu0 0.0
    %1921 = vmatprep.subr.mxu0 0.0
    %1922 = vmatpush1.msra.mxu0 0.0
    %1923 = vmatprep.subr.mxu0 0.0
    %1924 = vmatpush1.msra.mxu0 0.0
    %1925 = vmatprep.subr.mxu0 0.0
    %1926 = vmatpush1.msra.mxu0 0.0
    %1927 = vmatprep.subr.mxu0 0.0
    %1928 = vmatpush1.msra.mxu0 0.0
    %1929 = vmatprep.subr.mxu0 0.0
    %1930 = vmatpush1.msra.mxu0 0.0
    %1931 = vmatprep.subr.mxu0 0.0
    %1932 = vmatpush1.msra.mxu0 0.0
    %1933 = vmatprep.subr.mxu0 0.0
    %1934 = vmatpush1.msra.mxu0 0.0
    %1935 = vmatprep.subr.mxu0 0.0
    %1936 = vmatpush1.msra.mxu0 0.0
    %1937 = vmatprep.subr.mxu0 0.0
    %1938 = vmatpush1.msra.mxu0 0.0
    %1939 = vmatprep.subr.mxu0 0.0
    %1940 = vmatpush1.msra.mxu0 0.0
    %1941 = vmatprep.subr.mxu0 0.0
    %1942 = vmatpush1.msra.mxu0 0.0
    %1943 = vmatprep.subr.mxu0 0.0
    %1944 = vmatpush1.msra.mxu0 0.0
    %1945 = vmatprep.subr.mxu0 0.0
    %1946 = vmatpush1.msra.mxu0 0.0
    %1947 = vmatprep.subr.mxu0 0.0
    %1948 = vmatpush1.msra.mxu0 0.0
    %1949 = vmatprep.mubr.f32.mxu0 0.0
    %1950 = vmatmul.mubr.f32.gmra.mrb[0].mxu0 %v1883
    %v1951 = vpop.f32.mrb[0].mxu0
    %v1952 = vadd.f32 0.0, %v1951
    %v1953 = vpop.f32.mrb[0].mxu0
    %1954 = vdwg.mxu0
    %v1955 = vadd.f32 %v1882, %v1952
    %v1956 = vxor.u32 %v1955, 2147483648
    %v1957 = vmul.f32 %v1956, 1.442695
    %v1958 = vpow.pop %v1957
    %v1959 = vadd.f32 %v1958, 1.0
    %v1960 = vrcp.pop %v1959
    %v1961 = vmul.f32 1.0, %v1960
    %v1962 = vadd.f32 %v1952, %v1330
    %1964 = vrot.lane.b32.xlu0 %v1962, 64
    %v1965 = vpop.permute.xlu0 %1964
    %v1967 = vmul.f32 %v1961, %v1965
    %1969 = vrot.lane.b32.xlu0 %v1967, 64
    %v1970 = vpop.permute.xlu0 %1969
    %v1972 = vadd.f32 %v1882, %v1970
    %v1973 = vtanh.pop %v1972
    %v1974 = vsub.f32 1.0, %v1961
    %1976 = vrot.lane.b32.xlu0 %v1973, 96
    %v1977 = vpop.permute.xlu0 %1976
    %v1979 = vmul.f32 %v1974, %v1977
    %v1980 = vmul.f32 %v1961, %v1876
    %v1981 = vadd.f32 %v1979, %v1980
    %1983 = vrot.lane.b32.xlu0 %v1981, 96
    %v1984 = vpop.permute.xlu0 %1983
    %1986 = vst.msk [vmem:[#allocation4 + $0x2] sm:$0x3] %vm416, %v1984
    %v1987 = vld [vmem:[#allocation2] sm:$0x3]
    %v1988 = vsel %vm213, %v1984, 0
    %1990 = vmatprep.subr.mxu0 0.0
    %1991 = vmatpush1.msra.mxu0 %v1241
    %1992 = vmatprep.subr.mxu0 0.0
    %1993 = vmatpush1.msra.mxu0 %v1242
    %1994 = vmatprep.subr.mxu0 0.0
    %1995 = vmatpush1.msra.mxu0 %v1243
    %1996 = vmatprep.subr.mxu0 0.0
    %1997 = vmatpush1.msra.mxu0 %v1244
    %1998 = vmatprep.subr.mxu0 0.0
    %1999 = vmatpush1.msra.mxu0 0.0
    %2000 = vmatprep.subr.mxu0 0.0
    %2001 = vmatpush1.msra.mxu0 0.0
    %2002 = vmatprep.subr.mxu0 0.0
    %2003 = vmatpush1.msra.mxu0 0.0
    %2004 = vmatprep.subr.mxu0 0.0
    %2005 = vmatpush1.msra.mxu0 0.0
    %2006 = vmatprep.subr.mxu0 0.0
    %2007 = vmatpush1.msra.mxu0 0.0
    %2008 = vmatprep.subr.mxu0 0.0
    %2009 = vmatpush1.msra.mxu0 0.0
    %2010 = vmatprep.subr.mxu0 0.0
    %2011 = vmatpush1.msra.mxu0 0.0
    %2012 = vmatprep.subr.mxu0 0.0
    %2013 = vmatpush1.msra.mxu0 0.0
    %2014 = vmatprep.subr.mxu0 0.0
    %2015 = vmatpush1.msra.mxu0 0.0
    %2016 = vmatprep.subr.mxu0 0.0
    %2017 = vmatpush1.msra.mxu0 0.0
    %2018 = vmatprep.subr.mxu0 0.0
    %2019 = vmatpush1.msra.mxu0 0.0
    %2020 = vmatprep.subr.mxu0 0.0
    %2021 = vmatpush1.msra.mxu0 0.0
    %2022 = vmatprep.subr.mxu0 0.0
    %2023 = vmatpush1.msra.mxu0 0.0
    %2024 = vmatprep.subr.mxu0 0.0
    %2025 = vmatpush1.msra.mxu0 0.0
    %2026 = vmatprep.subr.mxu0 0.0
    %2027 = vmatpush1.msra.mxu0 0.0
    %2028 = vmatprep.subr.mxu0 0.0
    %2029 = vmatpush1.msra.mxu0 0.0
    %2030 = vmatprep.subr.mxu0 0.0
    %2031 = vmatpush1.msra.mxu0 0.0
    %2032 = vmatprep.subr.mxu0 0.0
    %2033 = vmatpush1.msra.mxu0 0.0
    %2034 = vmatprep.subr.mxu0 0.0
    %2035 = vmatpush1.msra.mxu0 0.0
    %2036 = vmatprep.subr.mxu0 0.0
    %2037 = vmatpush1.msra.mxu0 0.0
    %2038 = vmatprep.subr.mxu0 0.0
    %2039 = vmatpush1.msra.mxu0 0.0
    %2040 = vmatprep.subr.mxu0 0.0
    %2041 = vmatpush1.msra.mxu0 0.0
    %2042 = vmatprep.subr.mxu0 0.0
    %2043 = vmatpush1.msra.mxu0 0.0
    %2044 = vmatprep.subr.mxu0 0.0
    %2045 = vmatpush1.msra.mxu0 0.0
    %2046 = vmatprep.subr.mxu0 0.0
    %2047 = vmatpush1.msra.mxu0 0.0
    %2048 = vmatprep.subr.mxu0 0.0
    %2049 = vmatpush1.msra.mxu0 0.0
    %2050 = vmatprep.subr.mxu0 0.0
    %2051 = vmatpush1.msra.mxu0 0.0
    %2052 = vmatprep.subr.mxu0 0.0
    %2053 = vmatpush1.msra.mxu0 0.0
    %2054 = vmatprep.mubr.f32.mxu0 0.0
    %2055 = vmatmul.mubr.f32.gmra.mrb[0].mxu0 %v1988
    %v2056 = vpop.f32.mrb[0].mxu0
    %v2057 = vadd.f32 0.0, %v2056
    %v2058 = vpop.f32.mrb[0].mxu0
    %2059 = vdwg.mxu0
    %v2060 = vadd.f32 %v1987, %v2057
    %v2061 = vxor.u32 %v2060, 2147483648
    %v2062 = vmul.f32 %v2061, 1.442695
    %v2063 = vpow.pop %v2062
    %v2064 = vadd.f32 %v2063, 1.0
    %v2065 = vrcp.pop %v2064
    %v2066 = vmul.f32 1.0, %v2065
    %v2067 = vadd.f32 %v2057, %v1330
    %2069 = vrot.lane.b32.xlu0 %v2067, 64
    %v2070 = vpop.permute.xlu0 %2069
    %v2072 = vmul.f32 %v2066, %v2070
    %2074 = vrot.lane.b32.xlu0 %v2072, 64
    %v2075 = vpop.permute.xlu0 %2074
    %v2077 = vadd.f32 %v1987, %v2075
    %v2078 = vtanh.pop %v2077
    %v2079 = vsub.f32 1.0, %v2066
    %2081 = vrot.lane.b32.xlu0 %v2078, 96
    %v2082 = vpop.permute.xlu0 %2081
    %v2084 = vmul.f32 %v2079, %v2082
    %v2085 = vmul.f32 %v2066, %v1981
    %v2086 = vadd.f32 %v2084, %v2085
    %2088 = vrot.lane.b32.xlu0 %v2086, 96
    %v2089 = vpop.permute.xlu0 %2088
    %2091 = vst.msk [vmem:[#allocation4] sm:$0x3] %vm416, %v2089
    %v2092 = vld [vmem:[#allocation3] sm:$0xff]
    %v2093 = vld [vmem:[#allocation3 + $0x8] sm:$0xff]
    %v2094 = vld [vmem:[#allocation4] sm:$0xff]
    %v2095 = vld [vmem:[#allocation4 + $0x8] sm:$0xff]
    %2098 = vrot.lane.b32.xlu0 %v2094, 32
    %v2099 = vpop.permute.xlu0 %2098
    %2100 = vrot.lane.b32.xlu0 %v2095, 32
    %v2101 = vpop.permute.xlu0 %2100
    %v2104 = vsel %vm213, %v2092, %v2099
    %v2105 = vsel %vm213, %v2093, %v2101
    %v2106 = vld [vmem:[%s9] sm:$0xff]
    %v2107 = vld [vmem:[%s9 + $0x8] sm:$0xff]
    %v2108 = vld [vmem:[%s9 + $0x10] sm:$0xff]
    %v2109 = vld [vmem:[%s9 + $0x18] sm:$0xff]
    %v2110 = vld [vmem:[%s9 + $0x20] sm:$0xff]
    %v2111 = vld [vmem:[%s9 + $0x28] sm:$0xff]
    %v2112 = vld [vmem:[%s9 + $0x30] sm:$0xff]
    %v2113 = vld [vmem:[%s9 + $0x38] sm:$0xff]
    %v2114 = vld [vmem:[%s11] sm:$0x1]
    %v2116 = vlaneseq
    %v2117 = vshrl.u32 %v2116, 7
    %v2118 = vsub.s32 0, %v2117
    %v2119 = vrot.slane %v2114, %v2118
    %vm2121 = vcmask 523264
    %v2123 = vsel %vm2121, %v2104, 0
    %v2126 = vsel %vm2121, %v2105, 0
    %2128 = vmatprep.subr.mxu0 0.0
    %2129 = vmatpush1.msra.mxu0 %v2106
    %2130 = vmatprep.subr.mxu0 0.0
    %2131 = vmatpush1.msra.mxu0 %v2107
    %2132 = vmatprep.subr.mxu0 0.0
    %2133 = vmatpush1.msra.mxu0 %v2108
    %2134 = vmatprep.subr.mxu0 0.0
    %2135 = vmatpush1.msra.mxu0 %v2109
    %2136 = vmatprep.subr.mxu0 0.0
    %2137 = vmatpush1.msra.mxu0 %v2110
    %2138 = vmatprep.subr.mxu0 0.0
    %2139 = vmatpush1.msra.mxu0 %v2111
    %2140 = vmatprep.subr.mxu0 0.0
    %2141 = vmatpush1.msra.mxu0 %v2112
    %2142 = vmatprep.subr.mxu0 0.0
    %2143 = vmatpush1.msra.mxu0 %v2113
    %2144 = vmatprep.subr.mxu0 0.0
    %2145 = vmatpush1.msra.mxu0 0.0
    %2146 = vmatprep.subr.mxu0 0.0
    %2147 = vmatpush1.msra.mxu0 0.0
    %2148 = vmatprep.subr.mxu0 0.0
    %2149 = vmatpush1.msra.mxu0 0.0
    %2150 = vmatprep.subr.mxu0 0.0
    %2151 = vmatpush1.msra.mxu0 0.0
    %2152 = vmatprep.subr.mxu0 0.0
    %2153 = vmatpush1.msra.mxu0 0.0
    %2154 = vmatprep.subr.mxu0 0.0
    %2155 = vmatpush1.msra.mxu0 0.0
    %2156 = vmatprep.subr.mxu0 0.0
    %2157 = vmatpush1.msra.mxu0 0.0
    %2158 = vmatprep.subr.mxu0 0.0
    %2159 = vmatpush1.msra.mxu0 0.0
    %2160 = vmatprep.subr.mxu0 0.0
    %2161 = vmatpush1.msra.mxu0 0.0
    %2162 = vmatprep.subr.mxu0 0.0
    %2163 = vmatpush1.msra.mxu0 0.0
    %2164 = vmatprep.subr.mxu0 0.0
    %2165 = vmatpush1.msra.mxu0 0.0
    %2166 = vmatprep.subr.mxu0 0.0
    %2167 = vmatpush1.msra.mxu0 0.0
    %2168 = vmatprep.subr.mxu0 0.0
    %2169 = vmatpush1.msra.mxu0 0.0
    %2170 = vmatprep.subr.mxu0 0.0
    %2171 = vmatpush1.msra.mxu0 0.0
    %2172 = vmatprep.subr.mxu0 0.0
    %2173 = vmatpush1.msra.mxu0 0.0
    %2174 = vmatprep.subr.mxu0 0.0
    %2175 = vmatpush1.msra.mxu0 0.0
    %2176 = vmatprep.subr.mxu0 0.0
    %2177 = vmatpush1.msra.mxu0 0.0
    %2178 = vmatprep.subr.mxu0 0.0
    %2179 = vmatpush1.msra.mxu0 0.0
    %2180 = vmatprep.subr.mxu0 0.0
    %2181 = vmatpush1.msra.mxu0 0.0
    %2182 = vmatprep.subr.mxu0 0.0
    %2183 = vmatpush1.msra.mxu0 0.0
    %2184 = vmatprep.subr.mxu0 0.0
    %2185 = vmatpush1.msra.mxu0 0.0
    %2186 = vmatprep.subr.mxu0 0.0
    %2187 = vmatpush1.msra.mxu0 0.0
    %2188 = vmatprep.subr.mxu0 0.0
    %2189 = vmatpush1.msra.mxu0 0.0
    %2190 = vmatprep.subr.mxu0 0.0
    %2191 = vmatpush1.msra.mxu0 0.0
    %2192 = vmatprep.mubr.f32.mxu0 0.0
    %2193 = vmatmul.mubr.f32.gmra.mrb[0].mxu0 %v2123
    %v2194 = vpop.f32.mrb[0].mxu0
    %v2195 = vadd.f32 %v2119, %v2194
    %v2196 = vpop.f32.mrb[0].mxu0
    %2197 = vmatprep.mubr.f32.mxu0 0.0
    %2198 = vmatmul.mubr.f32.gmra.mrb[0].mxu0 %v2126
    %v2199 = vpop.f32.mrb[0].mxu0
    %v2200 = vadd.f32 %v2119, %v2199
    %v2201 = vpop.f32.mrb[0].mxu0
    %2202 = vdwg.mxu0
    %2203 = vst.msk [vmem:[#allocation2] sm:$0xff] %vm295, %v2195
    %2204 = vst.msk [vmem:[#allocation2 + $0x8] sm:$0xff] %vm295, %v2200
    %v2205 = vld [vmem:[%s10] sm:$0xff]
    %v2206 = vld [vmem:[%s10 + $0x8] sm:$0xff]
    %v2207 = vld [vmem:[%s10 + $0x10] sm:$0xff]
    %v2208 = vld [vmem:[%s10 + $0x18] sm:$0xff]
    %v2209 = vld [vmem:[%s12] sm:$0x1]
    %v2210 = vld [vmem:[#allocation2] sm:$0x3]
    %2211 = vmatprep.subr.mxu0 0.0
    %2212 = vmatpush1.msra.mxu0 %v2205
    %2213 = vmatprep.subr.mxu0 0.0
    %2214 = vmatpush1.msra.mxu0 %v2206
    %2215 = vmatprep.subr.mxu0 0.0
    %2216 = vmatpush1.msra.mxu0 %v2207
    %2217 = vmatprep.subr.mxu0 0.0
    %2218 = vmatpush1.msra.mxu0 %v2208
    %2219 = vmatprep.subr.mxu0 0.0
    %2220 = vmatpush1.msra.mxu0 0.0
    %2221 = vmatprep.subr.mxu0 0.0
    %2222 = vmatpush1.msra.mxu0 0.0
    %2223 = vmatprep.subr.mxu0 0.0
    %2224 = vmatpush1.msra.mxu0 0.0
    %2225 = vmatprep.subr.mxu0 0.0
    %2226 = vmatpush1.msra.mxu0 0.0
    %2227 = vmatprep.subr.mxu0 0.0
    %2228 = vmatpush1.msra.mxu0 0.0
    %2229 = vmatprep.subr.mxu0 0.0
    %2230 = vmatpush1.msra.mxu0 0.0
    %2231 = vmatprep.subr.mxu0 0.0
    %2232 = vmatpush1.msra.mxu0 0.0
    %2233 = vmatprep.subr.mxu0 0.0
    %2234 = vmatpush1.msra.mxu0 0.0
    %2235 = vmatprep.subr.mxu0 0.0
    %2236 = vmatpush1.msra.mxu0 0.0
    %2237 = vmatprep.subr.mxu0 0.0
    %2238 = vmatpush1.msra.mxu0 0.0
    %2239 = vmatprep.subr.mxu0 0.0
    %2240 = vmatpush1.msra.mxu0 0.0
    %2241 = vmatprep.subr.mxu0 0.0
    %2242 = vmatpush1.msra.mxu0 0.0
    %2243 = vmatprep.subr.mxu0 0.0
    %2244 = vmatpush1.msra.mxu0 0.0
    %2245 = vmatprep.subr.mxu0 0.0
    %2246 = vmatpush1.msra.mxu0 0.0
    %2247 = vmatprep.subr.mxu0 0.0
    %2248 = vmatpush1.msra.mxu0 0.0
    %2249 = vmatprep.subr.mxu0 0.0
    %2250 = vmatpush1.msra.mxu0 0.0
    %2251 = vmatprep.subr.mxu0 0.0
    %2252 = vmatpush1.msra.mxu0 0.0
    %2253 = vmatprep.subr.mxu0 0.0
    %2254 = vmatpush1.msra.mxu0 0.0
    %2255 = vmatprep.subr.mxu0 0.0
    %2256 = vmatpush1.msra.mxu0 0.0
    %2257 = vmatprep.subr.mxu0 0.0
    %2258 = vmatpush1.msra.mxu0 0.0
    %2259 = vmatprep.subr.mxu0 0.0
    %2260 = vmatpush1.msra.mxu0 0.0
    %2261 = vmatprep.subr.mxu0 0.0
    %2262 = vmatpush1.msra.mxu0 0.0
    %2263 = vmatprep.subr.mxu0 0.0
    %2264 = vmatpush1.msra.mxu0 0.0
    %2265 = vmatprep.subr.mxu0 0.0
    %2266 = vmatpush1.msra.mxu0 0.0
    %2267 = vmatprep.subr.mxu0 0.0
    %2268 = vmatpush1.msra.mxu0 0.0
    %2269 = vmatprep.subr.mxu0 0.0
    %2270 = vmatpush1.msra.mxu0 0.0
    %2271 = vmatprep.subr.mxu0 0.0
    %2272 = vmatpush1.msra.mxu0 0.0
    %2273 = vmatprep.subr.mxu0 0.0
    %2274 = vmatpush1.msra.mxu0 0.0
    %2275 = vmatprep.mubr.f32.mxu0 0.0
    %2276 = vmatmul.mubr.f32.gmra.mrb[0].mxu0 %v305
    %v2277 = vpop.f32.mrb[0].mxu0
    %v2278 = vadd.f32 0.0, %v2277
    %v2279 = vpop.f32.mrb[0].mxu0
    %2280 = vdwg.mxu0
    %v2281 = vadd.f32 %v2210, %v2278
    %v2282 = vxor.u32 %v2281, 2147483648
    %v2283 = vmul.f32 %v2282, 1.442695
    %v2284 = vpow.pop %v2283
    %v2285 = vadd.f32 %v2284, 1.0
    %v2286 = vrcp.pop %v2285
    %v2287 = vmul.f32 1.0, %v2286
    %v2289 = vlaneseq
    %v2290 = vshrl.u32 %v2289, 7
    %v2291 = vsub.s32 0, %v2290
    %v2292 = vrot.slane %v2209, %v2291
    %2293 = vrot.lane.b32.xlu0 %v2292, 64
    %v2294 = vpop.permute.xlu0 %2293
    %v2296 = vadd.f32 %v2278, %v2294
    %2298 = vrot.lane.b32.xlu0 %v2296, 64
    %v2299 = vpop.permute.xlu0 %2298
    %v2301 = vmul.f32 %v2287, %v2299
    %2303 = vrot.lane.b32.xlu0 %v2301, 64
    %v2304 = vpop.permute.xlu0 %2303
    %v2306 = vadd.f32 %v2210, %v2304
    %v2307 = vtanh.pop %v2306
    %v2308 = vsub.f32 1.0, %v2287
    %2310 = vrot.lane.b32.xlu0 %v2307, 96
    %v2311 = vpop.permute.xlu0 %2310
    %v2313 = vmul.f32 %v2308, %v2311
    %v2314 = vmul.f32 %v2287, 0.0
    %v2315 = vadd.f32 %v2313, %v2314
    %2317 = vrot.lane.b32.xlu0 %v2315, 96
    %v2318 = vpop.permute.xlu0 %2317
    %2320 = vst.msk [vmem:[#allocation5] sm:$0x3] %vm416, %v2318
    %v2321 = vld [vmem:[#allocation2 + $0x2] sm:$0x3]
    %v2322 = vsel %vm213, %v2318, 0
    %2324 = vmatprep.subr.mxu0 0.0
    %2325 = vmatpush1.msra.mxu0 %v2205
    %2326 = vmatprep.subr.mxu0 0.0
    %2327 = vmatpush1.msra.mxu0 %v2206
    %2328 = vmatprep.subr.mxu0 0.0
    %2329 = vmatpush1.msra.mxu0 %v2207
    %2330 = vmatprep.subr.mxu0 0.0
    %2331 = vmatpush1.msra.mxu0 %v2208
    %2332 = vmatprep.subr.mxu0 0.0
    %2333 = vmatpush1.msra.mxu0 0.0
    %2334 = vmatprep.subr.mxu0 0.0
    %2335 = vmatpush1.msra.mxu0 0.0
    %2336 = vmatprep.subr.mxu0 0.0
    %2337 = vmatpush1.msra.mxu0 0.0
    %2338 = vmatprep.subr.mxu0 0.0
    %2339 = vmatpush1.msra.mxu0 0.0
    %2340 = vmatprep.subr.mxu0 0.0
    %2341 = vmatpush1.msra.mxu0 0.0
    %2342 = vmatprep.subr.mxu0 0.0
    %2343 = vmatpush1.msra.mxu0 0.0
    %2344 = vmatprep.subr.mxu0 0.0
    %2345 = vmatpush1.msra.mxu0 0.0
    %2346 = vmatprep.subr.mxu0 0.0
    %2347 = vmatpush1.msra.mxu0 0.0
    %2348 = vmatprep.subr.mxu0 0.0
    %2349 = vmatpush1.msra.mxu0 0.0
    %2350 = vmatprep.subr.mxu0 0.0
    %2351 = vmatpush1.msra.mxu0 0.0
    %2352 = vmatprep.subr.mxu0 0.0
    %2353 = vmatpush1.msra.mxu0 0.0
    %2354 = vmatprep.subr.mxu0 0.0
    %2355 = vmatpush1.msra.mxu0 0.0
    %2356 = vmatprep.subr.mxu0 0.0
    %2357 = vmatpush1.msra.mxu0 0.0
    %2358 = vmatprep.subr.mxu0 0.0
    %2359 = vmatpush1.msra.mxu0 0.0
    %2360 = vmatprep.subr.mxu0 0.0
    %2361 = vmatpush1.msra.mxu0 0.0
    %2362 = vmatprep.subr.mxu0 0.0
    %2363 = vmatpush1.msra.mxu0 0.0
    %2364 = vmatprep.subr.mxu0 0.0
    %2365 = vmatpush1.msra.mxu0 0.0
    %2366 = vmatprep.subr.mxu0 0.0
    %2367 = vmatpush1.msra.mxu0 0.0
    %2368 = vmatprep.subr.mxu0 0.0
    %2369 = vmatpush1.msra.mxu0 0.0
    %2370 = vmatprep.subr.mxu0 0.0
    %2371 = vmatpush1.msra.mxu0 0.0
    %2372 = vmatprep.subr.mxu0 0.0
    %2373 = vmatpush1.msra.mxu0 0.0
    %2374 = vmatprep.subr.mxu0 0.0
    %2375 = vmatpush1.msra.mxu0 0.0
    %2376 = vmatprep.subr.mxu0 0.0
    %2377 = vmatpush1.msra.mxu0 0.0
    %2378 = vmatprep.subr.mxu0 0.0
    %2379 = vmatpush1.msra.mxu0 0.0
    %2380 = vmatprep.subr.mxu0 0.0
    %2381 = vmatpush1.msra.mxu0 0.0
    %2382 = vmatprep.subr.mxu0 0.0
    %2383 = vmatpush1.msra.mxu0 0.0
    %2384 = vmatprep.subr.mxu0 0.0
    %2385 = vmatpush1.msra.mxu0 0.0
    %2386 = vmatprep.subr.mxu0 0.0
    %2387 = vmatpush1.msra.mxu0 0.0
    %2388 = vmatprep.mubr.f32.mxu0 0.0
    %2389 = vmatmul.mubr.f32.gmra.mrb[0].mxu0 %v2322
    %v2390 = vpop.f32.mrb[0].mxu0
    %v2391 = vadd.f32 0.0, %v2390
    %v2392 = vpop.f32.mrb[0].mxu0
    %2393 = vdwg.mxu0
    %v2394 = vadd.f32 %v2321, %v2391
    %v2395 = vxor.u32 %v2394, 2147483648
    %v2396 = vmul.f32 %v2395, 1.442695
    %v2397 = vpow.pop %v2396
    %v2398 = vadd.f32 %v2397, 1.0
    %v2399 = vrcp.pop %v2398
    %v2400 = vmul.f32 1.0, %v2399
    %v2401 = vadd.f32 %v2391, %v2294
    %2403 = vrot.lane.b32.xlu0 %v2401, 64
    %v2404 = vpop.permute.xlu0 %2403
    %v2406 = vmul.f32 %v2400, %v2404
    %2408 = vrot.lane.b32.xlu0 %v2406, 64
    %v2409 = vpop.permute.xlu0 %2408
    %v2411 = vadd.f32 %v2321, %v2409
    %v2412 = vtanh.pop %v2411
    %v2413 = vsub.f32 1.0, %v2400
    %2415 = vrot.lane.b32.xlu0 %v2412, 96
    %v2416 = vpop.permute.xlu0 %2415
    %v2418 = vmul.f32 %v2413, %v2416
    %v2419 = vmul.f32 %v2400, %v2315
    %v2420 = vadd.f32 %v2418, %v2419
    %2422 = vrot.lane.b32.xlu0 %v2420, 96
    %v2423 = vpop.permute.xlu0 %2422
    %2425 = vst.msk [vmem:[#allocation5 + $0x2] sm:$0x3] %vm416, %v2423
    %v2426 = vld [vmem:[#allocation2 + $0x4] sm:$0x3]
    %v2427 = vsel %vm213, %v2423, 0
    %2429 = vmatprep.subr.mxu0 0.0
    %2430 = vmatpush1.msra.mxu0 %v2205
    %2431 = vmatprep.subr.mxu0 0.0
    %2432 = vmatpush1.msra.mxu0 %v2206
    %2433 = vmatprep.subr.mxu0 0.0
    %2434 = vmatpush1.msra.mxu0 %v2207
    %2435 = vmatprep.subr.mxu0 0.0
    %2436 = vmatpush1.msra.mxu0 %v2208
    %2437 = vmatprep.subr.mxu0 0.0
    %2438 = vmatpush1.msra.mxu0 0.0
    %2439 = vmatprep.subr.mxu0 0.0
    %2440 = vmatpush1.msra.mxu0 0.0
    %2441 = vmatprep.subr.mxu0 0.0
    %2442 = vmatpush1.msra.mxu0 0.0
    %2443 = vmatprep.subr.mxu0 0.0
    %2444 = vmatpush1.msra.mxu0 0.0
    %2445 = vmatprep.subr.mxu0 0.0
    %2446 = vmatpush1.msra.mxu0 0.0
    %2447 = vmatprep.subr.mxu0 0.0
    %2448 = vmatpush1.msra.mxu0 0.0
    %2449 = vmatprep.subr.mxu0 0.0
    %2450 = vmatpush1.msra.mxu0 0.0
    %2451 = vmatprep.subr.mxu0 0.0
    %2452 = vmatpush1.msra.mxu0 0.0
    %2453 = vmatprep.subr.mxu0 0.0
    %2454 = vmatpush1.msra.mxu0 0.0
    %2455 = vmatprep.subr.mxu0 0.0
    %2456 = vmatpush1.msra.mxu0 0.0
    %2457 = vmatprep.subr.mxu0 0.0
    %2458 = vmatpush1.msra.mxu0 0.0
    %2459 = vmatprep.subr.mxu0 0.0
    %2460 = vmatpush1.msra.mxu0 0.0
    %2461 = vmatprep.subr.mxu0 0.0
    %2462 = vmatpush1.msra.mxu0 0.0
    %2463 = vmatprep.subr.mxu0 0.0
    %2464 = vmatpush1.msra.mxu0 0.0
    %2465 = vmatprep.subr.mxu0 0.0
    %2466 = vmatpush1.msra.mxu0 0.0
    %2467 = vmatprep.subr.mxu0 0.0
    %2468 = vmatpush1.msra.mxu0 0.0
    %2469 = vmatprep.subr.mxu0 0.0
    %2470 = vmatpush1.msra.mxu0 0.0
    %2471 = vmatprep.subr.mxu0 0.0
    %2472 = vmatpush1.msra.mxu0 0.0
    %2473 = vmatprep.subr.mxu0 0.0
    %2474 = vmatpush1.msra.mxu0 0.0
    %2475 = vmatprep.subr.mxu0 0.0
    %2476 = vmatpush1.msra.mxu0 0.0
    %2477 = vmatprep.subr.mxu0 0.0
    %2478 = vmatpush1.msra.mxu0 0.0
    %2479 = vmatprep.subr.mxu0 0.0
    %2480 = vmatpush1.msra.mxu0 0.0
    %2481 = vmatprep.subr.mxu0 0.0
    %2482 = vmatpush1.msra.mxu0 0.0
    %2483 = vmatprep.subr.mxu0 0.0
    %2484 = vmatpush1.msra.mxu0 0.0
    %2485 = vmatprep.subr.mxu0 0.0
    %2486 = vmatpush1.msra.mxu0 0.0
    %2487 = vmatprep.subr.mxu0 0.0
    %2488 = vmatpush1.msra.mxu0 0.0
    %2489 = vmatprep.subr.mxu0 0.0
    %2490 = vmatpush1.msra.mxu0 0.0
    %2491 = vmatprep.subr.mxu0 0.0
    %2492 = vmatpush1.msra.mxu0 0.0
    %2493 = vmatprep.mubr.f32.mxu0 0.0
    %2494 = vmatmul.mubr.f32.gmra.mrb[0].mxu0 %v2427
    %v2495 = vpop.f32.mrb[0].mxu0
    %v2496 = vadd.f32 0.0, %v2495
    %v2497 = vpop.f32.mrb[0].mxu0
    %2498 = vdwg.mxu0
    %v2499 = vadd.f32 %v2426, %v2496
    %v2500 = vxor.u32 %v2499, 2147483648
    %v2501 = vmul.f32 %v2500, 1.442695
    %v2502 = vpow.pop %v2501
    %v2503 = vadd.f32 %v2502, 1.0
    %v2504 = vrcp.pop %v2503
    %v2505 = vmul.f32 1.0, %v2504
    %v2506 = vadd.f32 %v2496, %v2294
    %2508 = vrot.lane.b32.xlu0 %v2506, 64
    %v2509 = vpop.permute.xlu0 %2508
    %v2511 = vmul.f32 %v2505, %v2509
    %2513 = vrot.lane.b32.xlu0 %v2511, 64
    %v2514 = vpop.permute.xlu0 %2513
    %v2516 = vadd.f32 %v2426, %v2514
    %v2517 = vtanh.pop %v2516
    %v2518 = vsub.f32 1.0, %v2505
    %2520 = vrot.lane.b32.xlu0 %v2517, 96
    %v2521 = vpop.permute.xlu0 %2520
    %v2523 = vmul.f32 %v2518, %v2521
    %v2524 = vmul.f32 %v2505, %v2420
    %v2525 = vadd.f32 %v2523, %v2524
    %2527 = vrot.lane.b32.xlu0 %v2525, 96
    %v2528 = vpop.permute.xlu0 %2527
    %2530 = vst.msk [vmem:[#allocation5 + $0x4] sm:$0x3] %vm416, %v2528
    %v2531 = vld [vmem:[#allocation2 + $0x6] sm:$0x3]
    %v2532 = vsel %vm213, %v2528, 0
    %2534 = vmatprep.subr.mxu0 0.0
    %2535 = vmatpush1.msra.mxu0 %v2205
    %2536 = vmatprep.subr.mxu0 0.0
    %2537 = vmatpush1.msra.mxu0 %v2206
    %2538 = vmatprep.subr.mxu0 0.0
    %2539 = vmatpush1.msra.mxu0 %v2207
    %2540 = vmatprep.subr.mxu0 0.0
    %2541 = vmatpush1.msra.mxu0 %v2208
    %2542 = vmatprep.subr.mxu0 0.0
    %2543 = vmatpush1.msra.mxu0 0.0
    %2544 = vmatprep.subr.mxu0 0.0
    %2545 = vmatpush1.msra.mxu0 0.0
    %2546 = vmatprep.subr.mxu0 0.0
    %2547 = vmatpush1.msra.mxu0 0.0
    %2548 = vmatprep.subr.mxu0 0.0
    %2549 = vmatpush1.msra.mxu0 0.0
    %2550 = vmatprep.subr.mxu0 0.0
    %2551 = vmatpush1.msra.mxu0 0.0
    %2552 = vmatprep.subr.mxu0 0.0
    %2553 = vmatpush1.msra.mxu0 0.0
    %2554 = vmatprep.subr.mxu0 0.0
    %2555 = vmatpush1.msra.mxu0 0.0
    %2556 = vmatprep.subr.mxu0 0.0
    %2557 = vmatpush1.msra.mxu0 0.0
    %2558 = vmatprep.subr.mxu0 0.0
    %2559 = vmatpush1.msra.mxu0 0.0
    %2560 = vmatprep.subr.mxu0 0.0
    %2561 = vmatpush1.msra.mxu0 0.0
    %2562 = vmatprep.subr.mxu0 0.0
    %2563 = vmatpush1.msra.mxu0 0.0
    %2564 = vmatprep.subr.mxu0 0.0
    %2565 = vmatpush1.msra.mxu0 0.0
    %2566 = vmatprep.subr.mxu0 0.0
    %2567 = vmatpush1.msra.mxu0 0.0
    %2568 = vmatprep.subr.mxu0 0.0
    %2569 = vmatpush1.msra.mxu0 0.0
    %2570 = vmatprep.subr.mxu0 0.0
    %2571 = vmatpush1.msra.mxu0 0.0
    %2572 = vmatprep.subr.mxu0 0.0
    %2573 = vmatpush1.msra.mxu0 0.0
    %2574 = vmatprep.subr.mxu0 0.0
    %2575 = vmatpush1.msra.mxu0 0.0
    %2576 = vmatprep.subr.mxu0 0.0
    %2577 = vmatpush1.msra.mxu0 0.0
    %2578 = vmatprep.subr.mxu0 0.0
    %2579 = vmatpush1.msra.mxu0 0.0
    %2580 = vmatprep.subr.mxu0 0.0
    %2581 = vmatpush1.msra.mxu0 0.0
    %2582 = vmatprep.subr.mxu0 0.0
    %2583 = vmatpush1.msra.mxu0 0.0
    %2584 = vmatprep.subr.mxu0 0.0
    %2585 = vmatpush1.msra.mxu0 0.0
    %2586 = vmatprep.subr.mxu0 0.0
    %2587 = vmatpush1.msra.mxu0 0.0
    %2588 = vmatprep.subr.mxu0 0.0
    %2589 = vmatpush1.msra.mxu0 0.0
    %2590 = vmatprep.subr.mxu0 0.0
    %2591 = vmatpush1.msra.mxu0 0.0
    %2592 = vmatprep.subr.mxu0 0.0
    %2593 = vmatpush1.msra.mxu0 0.0
    %2594 = vmatprep.subr.mxu0 0.0
    %2595 = vmatpush1.msra.mxu0 0.0
    %2596 = vmatprep.subr.mxu0 0.0
    %2597 = vmatpush1.msra.mxu0 0.0
    %2598 = vmatprep.mubr.f32.mxu0 0.0
    %2599 = vmatmul.mubr.f32.gmra.mrb[0].mxu0 %v2532
    %v2600 = vpop.f32.mrb[0].mxu0
    %v2601 = vadd.f32 0.0, %v2600
    %v2602 = vpop.f32.mrb[0].mxu0
    %2603 = vdwg.mxu0
    %v2604 = vadd.f32 %v2531, %v2601
    %v2605 = vxor.u32 %v2604, 2147483648
    %v2606 = vmul.f32 %v2605, 1.442695
    %v2607 = vpow.pop %v2606
    %v2608 = vadd.f32 %v2607, 1.0
    %v2609 = vrcp.pop %v2608
    %v2610 = vmul.f32 1.0, %v2609
    %v2611 = vadd.f32 %v2601, %v2294
    %2613 = vrot.lane.b32.xlu0 %v2611, 64
    %v2614 = vpop.permute.xlu0 %2613
    %v2616 = vmul.f32 %v2610, %v2614
    %2618 = vrot.lane.b32.xlu0 %v2616, 64
    %v2619 = vpop.permute.xlu0 %2618
    %v2621 = vadd.f32 %v2531, %v2619
    %v2622 = vtanh.pop %v2621
    %v2623 = vsub.f32 1.0, %v2610
    %2625 = vrot.lane.b32.xlu0 %v2622, 96
    %v2626 = vpop.permute.xlu0 %2625
    %v2628 = vmul.f32 %v2623, %v2626
    %v2629 = vmul.f32 %v2610, %v2525
    %v2630 = vadd.f32 %v2628, %v2629
    %2632 = vrot.lane.b32.xlu0 %v2630, 96
    %v2633 = vpop.permute.xlu0 %2632
    %2635 = vst.msk [vmem:[#allocation5 + $0x6] sm:$0x3] %vm416, %v2633
    %v2636 = vld [vmem:[#allocation2 + $0x8] sm:$0x3]
    %v2637 = vsel %vm213, %v2633, 0
    %2639 = vmatprep.subr.mxu0 0.0
    %2640 = vmatpush1.msra.mxu0 %v2205
    %2641 = vmatprep.subr.mxu0 0.0
    %2642 = vmatpush1.msra.mxu0 %v2206
    %2643 = vmatprep.subr.mxu0 0.0
    %2644 = vmatpush1.msra.mxu0 %v2207
    %2645 = vmatprep.subr.mxu0 0.0
    %2646 = vmatpush1.msra.mxu0 %v2208
    %2647 = vmatprep.subr.mxu0 0.0
    %2648 = vmatpush1.msra.mxu0 0.0
    %2649 = vmatprep.subr.mxu0 0.0
    %2650 = vmatpush1.msra.mxu0 0.0
    %2651 = vmatprep.subr.mxu0 0.0
    %2652 = vmatpush1.msra.mxu0 0.0
    %2653 = vmatprep.subr.mxu0 0.0
    %2654 = vmatpush1.msra.mxu0 0.0
    %2655 = vmatprep.subr.mxu0 0.0
    %2656 = vmatpush1.msra.mxu0 0.0
    %2657 = vmatprep.subr.mxu0 0.0
    %2658 = vmatpush1.msra.mxu0 0.0
    %2659 = vmatprep.subr.mxu0 0.0
    %2660 = vmatpush1.msra.mxu0 0.0
    %2661 = vmatprep.subr.mxu0 0.0
    %2662 = vmatpush1.msra.mxu0 0.0
    %2663 = vmatprep.subr.mxu0 0.0
    %2664 = vmatpush1.msra.mxu0 0.0
    %2665 = vmatprep.subr.mxu0 0.0
    %2666 = vmatpush1.msra.mxu0 0.0
    %2667 = vmatprep.subr.mxu0 0.0
    %2668 = vmatpush1.msra.mxu0 0.0
    %2669 = vmatprep.subr.mxu0 0.0
    %2670 = vmatpush1.msra.mxu0 0.0
    %2671 = vmatprep.subr.mxu0 0.0
    %2672 = vmatpush1.msra.mxu0 0.0
    %2673 = vmatprep.subr.mxu0 0.0
    %2674 = vmatpush1.msra.mxu0 0.0
    %2675 = vmatprep.subr.mxu0 0.0
    %2676 = vmatpush1.msra.mxu0 0.0
    %2677 = vmatprep.subr.mxu0 0.0
    %2678 = vmatpush1.msra.mxu0 0.0
    %2679 = vmatprep.subr.mxu0 0.0
    %2680 = vmatpush1.msra.mxu0 0.0
    %2681 = vmatprep.subr.mxu0 0.0
    %2682 = vmatpush1.msra.mxu0 0.0
    %2683 = vmatprep.subr.mxu0 0.0
    %2684 = vmatpush1.msra.mxu0 0.0
    %2685 = vmatprep.subr.mxu0 0.0
    %2686 = vmatpush1.msra.mxu0 0.0
    %2687 = vmatprep.subr.mxu0 0.0
    %2688 = vmatpush1.msra.mxu0 0.0
    %2689 = vmatprep.subr.mxu0 0.0
    %2690 = vmatpush1.msra.mxu0 0.0
    %2691 = vmatprep.subr.mxu0 0.0
    %2692 = vmatpush1.msra.mxu0 0.0
    %2693 = vmatprep.subr.mxu0 0.0
    %2694 = vmatpush1.msra.mxu0 0.0
    %2695 = vmatprep.subr.mxu0 0.0
    %2696 = vmatpush1.msra.mxu0 0.0
    %2697 = vmatprep.subr.mxu0 0.0
    %2698 = vmatpush1.msra.mxu0 0.0
    %2699 = vmatprep.subr.mxu0 0.0
    %2700 = vmatpush1.msra.mxu0 0.0
    %2701 = vmatprep.subr.mxu0 0.0
    %2702 = vmatpush1.msra.mxu0 0.0
    %2703 = vmatprep.mubr.f32.mxu0 0.0
    %2704 = vmatmul.mubr.f32.gmra.mrb[0].mxu0 %v2637
    %v2705 = vpop.f32.mrb[0].mxu0
    %v2706 = vadd.f32 0.0, %v2705
    %v2707 = vpop.f32.mrb[0].mxu0
    %2708 = vdwg.mxu0
    %v2709 = vadd.f32 %v2636, %v2706
    %v2710 = vxor.u32 %v2709, 2147483648
    %v2711 = vmul.f32 %v2710, 1.442695
    %v2712 = vpow.pop %v2711
    %v2713 = vadd.f32 %v2712, 1.0
    %v2714 = vrcp.pop %v2713
    %v2715 = vmul.f32 1.0, %v2714
    %v2716 = vadd.f32 %v2706, %v2294
    %2718 = vrot.lane.b32.xlu0 %v2716, 64
    %v2719 = vpop.permute.xlu0 %2718
    %v2721 = vmul.f32 %v2715, %v2719
    %2723 = vrot.lane.b32.xlu0 %v2721, 64
    %v2724 = vpop.permute.xlu0 %2723
    %v2726 = vadd.f32 %v2636, %v2724
    %v2727 = vtanh.pop %v2726
    %v2728 = vsub.f32 1.0, %v2715
    %2730 = vrot.lane.b32.xlu0 %v2727, 96
    %v2731 = vpop.permute.xlu0 %2730
    %v2733 = vmul.f32 %v2728, %v2731
    %v2734 = vmul.f32 %v2715, %v2630
    %v2735 = vadd.f32 %v2733, %v2734
    %2737 = vrot.lane.b32.xlu0 %v2735, 96
    %v2738 = vpop.permute.xlu0 %2737
    %2740 = vst.msk [vmem:[#allocation5 + $0x8] sm:$0x3] %vm416, %v2738
    %v2741 = vld [vmem:[#allocation2 + $0xa] sm:$0x3]
    %v2742 = vsel %vm213, %v2738, 0
    %2744 = vmatprep.subr.mxu0 0.0
    %2745 = vmatpush1.msra.mxu0 %v2205
    %2746 = vmatprep.subr.mxu0 0.0
    %2747 = vmatpush1.msra.mxu0 %v2206
    %2748 = vmatprep.subr.mxu0 0.0
    %2749 = vmatpush1.msra.mxu0 %v2207
    %2750 = vmatprep.subr.mxu0 0.0
    %2751 = vmatpush1.msra.mxu0 %v2208
    %2752 = vmatprep.subr.mxu0 0.0
    %2753 = vmatpush1.msra.mxu0 0.0
    %2754 = vmatprep.subr.mxu0 0.0
    %2755 = vmatpush1.msra.mxu0 0.0
    %2756 = vmatprep.subr.mxu0 0.0
    %2757 = vmatpush1.msra.mxu0 0.0
    %2758 = vmatprep.subr.mxu0 0.0
    %2759 = vmatpush1.msra.mxu0 0.0
    %2760 = vmatprep.subr.mxu0 0.0
    %2761 = vmatpush1.msra.mxu0 0.0
    %2762 = vmatprep.subr.mxu0 0.0
    %2763 = vmatpush1.msra.mxu0 0.0
    %2764 = vmatprep.subr.mxu0 0.0
    %2765 = vmatpush1.msra.mxu0 0.0
    %2766 = vmatprep.subr.mxu0 0.0
    %2767 = vmatpush1.msra.mxu0 0.0
    %2768 = vmatprep.subr.mxu0 0.0
    %2769 = vmatpush1.msra.mxu0 0.0
    %2770 = vmatprep.subr.mxu0 0.0
    %2771 = vmatpush1.msra.mxu0 0.0
    %2772 = vmatprep.subr.mxu0 0.0
    %2773 = vmatpush1.msra.mxu0 0.0
    %2774 = vmatprep.subr.mxu0 0.0
    %2775 = vmatpush1.msra.mxu0 0.0
    %2776 = vmatprep.subr.mxu0 0.0
    %2777 = vmatpush1.msra.mxu0 0.0
    %2778 = vmatprep.subr.mxu0 0.0
    %2779 = vmatpush1.msra.mxu0 0.0
    %2780 = vmatprep.subr.mxu0 0.0
    %2781 = vmatpush1.msra.mxu0 0.0
    %2782 = vmatprep.subr.mxu0 0.0
    %2783 = vmatpush1.msra.mxu0 0.0
    %2784 = vmatprep.subr.mxu0 0.0
    %2785 = vmatpush1.msra.mxu0 0.0
    %2786 = vmatprep.subr.mxu0 0.0
    %2787 = vmatpush1.msra.mxu0 0.0
    %2788 = vmatprep.subr.mxu0 0.0
    %2789 = vmatpush1.msra.mxu0 0.0
    %2790 = vmatprep.subr.mxu0 0.0
    %2791 = vmatpush1.msra.mxu0 0.0
    %2792 = vmatprep.subr.mxu0 0.0
    %2793 = vmatpush1.msra.mxu0 0.0
    %2794 = vmatprep.subr.mxu0 0.0
    %2795 = vmatpush1.msra.mxu0 0.0
    %2796 = vmatprep.subr.mxu0 0.0
    %2797 = vmatpush1.msra.mxu0 0.0
    %2798 = vmatprep.subr.mxu0 0.0
    %2799 = vmatpush1.msra.mxu0 0.0
    %2800 = vmatprep.subr.mxu0 0.0
    %2801 = vmatpush1.msra.mxu0 0.0
    %2802 = vmatprep.subr.mxu0 0.0
    %2803 = vmatpush1.msra.mxu0 0.0
    %2804 = vmatprep.subr.mxu0 0.0
    %2805 = vmatpush1.msra.mxu0 0.0
    %2806 = vmatprep.subr.mxu0 0.0
    %2807 = vmatpush1.msra.mxu0 0.0
    %2808 = vmatprep.mubr.f32.mxu0 0.0
    %2809 = vmatmul.mubr.f32.gmra.mrb[0].mxu0 %v2742
    %v2810 = vpop.f32.mrb[0].mxu0
    %v2811 = vadd.f32 0.0, %v2810
    %v2812 = vpop.f32.mrb[0].mxu0
    %2813 = vdwg.mxu0
    %v2814 = vadd.f32 %v2741, %v2811
    %v2815 = vxor.u32 %v2814, 2147483648
    %v2816 = vmul.f32 %v2815, 1.442695
    %v2817 = vpow.pop %v2816
    %v2818 = vadd.f32 %v2817, 1.0
    %v2819 = vrcp.pop %v2818
    %v2820 = vmul.f32 1.0, %v2819
    %v2821 = vadd.f32 %v2811, %v2294
    %2823 = vrot.lane.b32.xlu0 %v2821, 64
    %v2824 = vpop.permute.xlu0 %2823
    %v2826 = vmul.f32 %v2820, %v2824
    %2828 = vrot.lane.b32.xlu0 %v2826, 64
    %v2829 = vpop.permute.xlu0 %2828
    %v2831 = vadd.f32 %v2741, %v2829
    %v2832 = vtanh.pop %v2831
    %v2833 = vsub.f32 1.0, %v2820
    %2835 = vrot.lane.b32.xlu0 %v2832, 96
    %v2836 = vpop.permute.xlu0 %2835
    %v2838 = vmul.f32 %v2833, %v2836
    %v2839 = vmul.f32 %v2820, %v2735
    %v2840 = vadd.f32 %v2838, %v2839
    %2842 = vrot.lane.b32.xlu0 %v2840, 96
    %v2843 = vpop.permute.xlu0 %2842
    %2845 = vst.msk [vmem:[#allocation5 + $0xa] sm:$0x3] %vm416, %v2843
    %v2846 = vld [vmem:[#allocation2 + $0xc] sm:$0x3]
    %v2847 = vsel %vm213, %v2843, 0
    %2849 = vmatprep.subr.mxu0 0.0
    %2850 = vmatpush1.msra.mxu0 %v2205
    %2851 = vmatprep.subr.mxu0 0.0
    %2852 = vmatpush1.msra.mxu0 %v2206
    %2853 = vmatprep.subr.mxu0 0.0
    %2854 = vmatpush1.msra.mxu0 %v2207
    %2855 = vmatprep.subr.mxu0 0.0
    %2856 = vmatpush1.msra.mxu0 %v2208
    %2857 = vmatprep.subr.mxu0 0.0
    %2858 = vmatpush1.msra.mxu0 0.0
    %2859 = vmatprep.subr.mxu0 0.0
    %2860 = vmatpush1.msra.mxu0 0.0
    %2861 = vmatprep.subr.mxu0 0.0
    %2862 = vmatpush1.msra.mxu0 0.0
    %2863 = vmatprep.subr.mxu0 0.0
    %2864 = vmatpush1.msra.mxu0 0.0
    %2865 = vmatprep.subr.mxu0 0.0
    %2866 = vmatpush1.msra.mxu0 0.0
    %2867 = vmatprep.subr.mxu0 0.0
    %2868 = vmatpush1.msra.mxu0 0.0
    %2869 = vmatprep.subr.mxu0 0.0
    %2870 = vmatpush1.msra.mxu0 0.0
    %2871 = vmatprep.subr.mxu0 0.0
    %2872 = vmatpush1.msra.mxu0 0.0
    %2873 = vmatprep.subr.mxu0 0.0
    %2874 = vmatpush1.msra.mxu0 0.0
    %2875 = vmatprep.subr.mxu0 0.0
    %2876 = vmatpush1.msra.mxu0 0.0
    %2877 = vmatprep.subr.mxu0 0.0
    %2878 = vmatpush1.msra.mxu0 0.0
    %2879 = vmatprep.subr.mxu0 0.0
    %2880 = vmatpush1.msra.mxu0 0.0
    %2881 = vmatprep.subr.mxu0 0.0
    %2882 = vmatpush1.msra.mxu0 0.0
    %2883 = vmatprep.subr.mxu0 0.0
    %2884 = vmatpush1.msra.mxu0 0.0
    %2885 = vmatprep.subr.mxu0 0.0
    %2886 = vmatpush1.msra.mxu0 0.0
    %2887 = vmatprep.subr.mxu0 0.0
    %2888 = vmatpush1.msra.mxu0 0.0
    %2889 = vmatprep.subr.mxu0 0.0
    %2890 = vmatpush1.msra.mxu0 0.0
    %2891 = vmatprep.subr.mxu0 0.0
    %2892 = vmatpush1.msra.mxu0 0.0
    %2893 = vmatprep.subr.mxu0 0.0
    %2894 = vmatpush1.msra.mxu0 0.0
    %2895 = vmatprep.subr.mxu0 0.0
    %2896 = vmatpush1.msra.mxu0 0.0
    %2897 = vmatprep.subr.mxu0 0.0
    %2898 = vmatpush1.msra.mxu0 0.0
    %2899 = vmatprep.subr.mxu0 0.0
    %2900 = vmatpush1.msra.mxu0 0.0
    %2901 = vmatprep.subr.mxu0 0.0
    %2902 = vmatpush1.msra.mxu0 0.0
    %2903 = vmatprep.subr.mxu0 0.0
    %2904 = vmatpush1.msra.mxu0 0.0
    %2905 = vmatprep.subr.mxu0 0.0
    %2906 = vmatpush1.msra.mxu0 0.0
    %2907 = vmatprep.subr.mxu0 0.0
    %2908 = vmatpush1.msra.mxu0 0.0
    %2909 = vmatprep.subr.mxu0 0.0
    %2910 = vmatpush1.msra.mxu0 0.0
    %2911 = vmatprep.subr.mxu0 0.0
    %2912 = vmatpush1.msra.mxu0 0.0
    %2913 = vmatprep.mubr.f32.mxu0 0.0
    %2914 = vmatmul.mubr.f32.gmra.mrb[0].mxu0 %v2847
    %v2915 = vpop.f32.mrb[0].mxu0
    %v2916 = vadd.f32 0.0, %v2915
    %v2917 = vpop.f32.mrb[0].mxu0
    %2918 = vdwg.mxu0
    %v2919 = vadd.f32 %v2846, %v2916
    %v2920 = vxor.u32 %v2919, 2147483648
    %v2921 = vmul.f32 %v2920, 1.442695
    %v2922 = vpow.pop %v2921
    %v2923 = vadd.f32 %v2922, 1.0
    %v2924 = vrcp.pop %v2923
    %v2925 = vmul.f32 1.0, %v2924
    %v2926 = vadd.f32 %v2916, %v2294
    %2928 = vrot.lane.b32.xlu0 %v2926, 64
    %v2929 = vpop.permute.xlu0 %2928
    %v2931 = vmul.f32 %v2925, %v2929
    %2933 = vrot.lane.b32.xlu0 %v2931, 64
    %v2934 = vpop.permute.xlu0 %2933
    %v2936 = vadd.f32 %v2846, %v2934
    %v2937 = vtanh.pop %v2936
    %v2938 = vsub.f32 1.0, %v2925
    %2940 = vrot.lane.b32.xlu0 %v2937, 96
    %v2941 = vpop.permute.xlu0 %2940
    %v2943 = vmul.f32 %v2938, %v2941
    %v2944 = vmul.f32 %v2925, %v2840
    %v2945 = vadd.f32 %v2943, %v2944
    %2947 = vrot.lane.b32.xlu0 %v2945, 96
    %v2948 = vpop.permute.xlu0 %2947
    %2950 = vst.msk [vmem:[#allocation5 + $0xc] sm:$0x3] %vm416, %v2948
    %v2951 = vld [vmem:[#allocation2 + $0xe] sm:$0x3]
    %v2952 = vsel %vm213, %v2948, 0
    %2954 = vmatprep.subr.mxu0 0.0
    %2955 = vmatpush1.msra.mxu0 %v2205
    %2956 = vmatprep.subr.mxu0 0.0
    %2957 = vmatpush1.msra.mxu0 %v2206
    %2958 = vmatprep.subr.mxu0 0.0
    %2959 = vmatpush1.msra.mxu0 %v2207
    %2960 = vmatprep.subr.mxu0 0.0
    %2961 = vmatpush1.msra.mxu0 %v2208
    %2962 = vmatprep.subr.mxu0 0.0
    %2963 = vmatpush1.msra.mxu0 0.0
    %2964 = vmatprep.subr.mxu0 0.0
    %2965 = vmatpush1.msra.mxu0 0.0
    %2966 = vmatprep.subr.mxu0 0.0
    %2967 = vmatpush1.msra.mxu0 0.0
    %2968 = vmatprep.subr.mxu0 0.0
    %2969 = vmatpush1.msra.mxu0 0.0
    %2970 = vmatprep.subr.mxu0 0.0
    %2971 = vmatpush1.msra.mxu0 0.0
    %2972 = vmatprep.subr.mxu0 0.0
    %2973 = vmatpush1.msra.mxu0 0.0
    %2974 = vmatprep.subr.mxu0 0.0
    %2975 = vmatpush1.msra.mxu0 0.0
    %2976 = vmatprep.subr.mxu0 0.0
    %2977 = vmatpush1.msra.mxu0 0.0
    %2978 = vmatprep.subr.mxu0 0.0
    %2979 = vmatpush1.msra.mxu0 0.0
    %2980 = vmatprep.subr.mxu0 0.0
    %2981 = vmatpush1.msra.mxu0 0.0
    %2982 = vmatprep.subr.mxu0 0.0
    %2983 = vmatpush1.msra.mxu0 0.0
    %2984 = vmatprep.subr.mxu0 0.0
    %2985 = vmatpush1.msra.mxu0 0.0
    %2986 = vmatprep.subr.mxu0 0.0
    %2987 = vmatpush1.msra.mxu0 0.0
    %2988 = vmatprep.subr.mxu0 0.0
    %2989 = vmatpush1.msra.mxu0 0.0
    %2990 = vmatprep.subr.mxu0 0.0
    %2991 = vmatpush1.msra.mxu0 0.0
    %2992 = vmatprep.subr.mxu0 0.0
    %2993 = vmatpush1.msra.mxu0 0.0
    %2994 = vmatprep.subr.mxu0 0.0
    %2995 = vmatpush1.msra.mxu0 0.0
    %2996 = vmatprep.subr.mxu0 0.0
    %2997 = vmatpush1.msra.mxu0 0.0
    %2998 = vmatprep.subr.mxu0 0.0
    %2999 = vmatpush1.msra.mxu0 0.0
    %3000 = vmatprep.subr.mxu0 0.0
    %3001 = vmatpush1.msra.mxu0 0.0
    %3002 = vmatprep.subr.mxu0 0.0
    %3003 = vmatpush1.msra.mxu0 0.0
    %3004 = vmatprep.subr.mxu0 0.0
    %3005 = vmatpush1.msra.mxu0 0.0
    %3006 = vmatprep.subr.mxu0 0.0
    %3007 = vmatpush1.msra.mxu0 0.0
    %3008 = vmatprep.subr.mxu0 0.0
    %3009 = vmatpush1.msra.mxu0 0.0
    %3010 = vmatprep.subr.mxu0 0.0
    %3011 = vmatpush1.msra.mxu0 0.0
    %3012 = vmatprep.subr.mxu0 0.0
    %3013 = vmatpush1.msra.mxu0 0.0
    %3014 = vmatprep.subr.mxu0 0.0
    %3015 = vmatpush1.msra.mxu0 0.0
    %3016 = vmatprep.subr.mxu0 0.0
    %3017 = vmatpush1.msra.mxu0 0.0
    %3018 = vmatprep.mubr.f32.mxu0 0.0
    %3019 = vmatmul.mubr.f32.gmra.mrb[0].mxu0 %v2952
    %v3020 = vpop.f32.mrb[0].mxu0
    %v3021 = vadd.f32 0.0, %v3020
    %v3022 = vpop.f32.mrb[0].mxu0
    %3023 = vdwg.mxu0
    %v3024 = vadd.f32 %v2951, %v3021
    %v3025 = vxor.u32 %v3024, 2147483648
    %v3026 = vmul.f32 %v3025, 1.442695
    %v3027 = vpow.pop %v3026
    %v3028 = vadd.f32 %v3027, 1.0
    %v3029 = vrcp.pop %v3028
    %v3030 = vmul.f32 1.0, %v3029
    %v3031 = vadd.f32 %v3021, %v2294
    %3033 = vrot.lane.b32.xlu0 %v3031, 64
    %v3034 = vpop.permute.xlu0 %3033
    %v3036 = vmul.f32 %v3030, %v3034
    %3038 = vrot.lane.b32.xlu0 %v3036, 64
    %v3039 = vpop.permute.xlu0 %3038
    %v3041 = vadd.f32 %v2951, %v3039
    %v3042 = vtanh.pop %v3041
    %v3043 = vsub.f32 1.0, %v3030
    %3045 = vrot.lane.b32.xlu0 %v3042, 96
    %v3046 = vpop.permute.xlu0 %3045
    %v3048 = vmul.f32 %v3043, %v3046
    %v3049 = vmul.f32 %v3030, %v2945
    %v3050 = vadd.f32 %v3048, %v3049
    %3052 = vrot.lane.b32.xlu0 %v3050, 96
    %v3053 = vpop.permute.xlu0 %3052
    %3055 = vst.msk [vmem:[#allocation5 + $0xe] sm:$0x3] %vm416, %v3053
    %v3056 = vld [vmem:[%s13] sm:$0xff]
    %v3057 = vld [vmem:[%s13 + $0x8] sm:$0xff]
    %v3058 = vld [vmem:[%s13 + $0x10] sm:$0xff]
    %v3059 = vld [vmem:[%s13 + $0x18] sm:$0xff]
    %v3060 = vld [vmem:[%s13 + $0x20] sm:$0xff]
    %v3061 = vld [vmem:[%s13 + $0x28] sm:$0xff]
    %v3062 = vld [vmem:[%s13 + $0x30] sm:$0xff]
    %v3063 = vld [vmem:[%s13 + $0x38] sm:$0xff]
    %v3064 = vld [vmem:[#allocation21] sm:$0x1]
    %v3066 = vlaneseq
    %v3067 = vshrl.u32 %v3066, 7
    %v3068 = vsub.s32 0, %v3067
    %v3069 = vrot.slane %v3064, %v3068
    %3071 = vmatprep.subr.mxu0 0.0
    %3072 = vmatpush1.msra.mxu0 %v3056
    %3073 = vmatprep.subr.mxu0 0.0
    %3074 = vmatpush1.msra.mxu0 %v3057
    %3075 = vmatprep.subr.mxu0 0.0
    %3076 = vmatpush1.msra.mxu0 %v3058
    %3077 = vmatprep.subr.mxu0 0.0
    %3078 = vmatpush1.msra.mxu0 %v3059
    %3079 = vmatprep.subr.mxu0 0.0
    %3080 = vmatpush1.msra.mxu0 %v3060
    %3081 = vmatprep.subr.mxu0 0.0
    %3082 = vmatpush1.msra.mxu0 %v3061
    %3083 = vmatprep.subr.mxu0 0.0
    %3084 = vmatpush1.msra.mxu0 %v3062
    %3085 = vmatprep.subr.mxu0 0.0
    %3086 = vmatpush1.msra.mxu0 %v3063
    %3087 = vmatprep.subr.mxu0 0.0
    %3088 = vmatpush1.msra.mxu0 0.0
    %3089 = vmatprep.subr.mxu0 0.0
    %3090 = vmatpush1.msra.mxu0 0.0
    %3091 = vmatprep.subr.mxu0 0.0
    %3092 = vmatpush1.msra.mxu0 0.0
    %3093 = vmatprep.subr.mxu0 0.0
    %3094 = vmatpush1.msra.mxu0 0.0
    %3095 = vmatprep.subr.mxu0 0.0
    %3096 = vmatpush1.msra.mxu0 0.0
    %3097 = vmatprep.subr.mxu0 0.0
    %3098 = vmatpush1.msra.mxu0 0.0
    %3099 = vmatprep.subr.mxu0 0.0
    %3100 = vmatpush1.msra.mxu0 0.0
    %3101 = vmatprep.subr.mxu0 0.0
    %3102 = vmatpush1.msra.mxu0 0.0
    %3103 = vmatprep.subr.mxu0 0.0
    %3104 = vmatpush1.msra.mxu0 0.0
    %3105 = vmatprep.subr.mxu0 0.0
    %3106 = vmatpush1.msra.mxu0 0.0
    %3107 = vmatprep.subr.mxu0 0.0
    %3108 = vmatpush1.msra.mxu0 0.0
    %3109 = vmatprep.subr.mxu0 0.0
    %3110 = vmatpush1.msra.mxu0 0.0
    %3111 = vmatprep.subr.mxu0 0.0
    %3112 = vmatpush1.msra.mxu0 0.0
    %3113 = vmatprep.subr.mxu0 0.0
    %3114 = vmatpush1.msra.mxu0 0.0
    %3115 = vmatprep.subr.mxu0 0.0
    %3116 = vmatpush1.msra.mxu0 0.0
    %3117 = vmatprep.subr.mxu0 0.0
    %3118 = vmatpush1.msra.mxu0 0.0
    %3119 = vmatprep.subr.mxu0 0.0
    %3120 = vmatpush1.msra.mxu0 0.0
    %3121 = vmatprep.subr.mxu0 0.0
    %3122 = vmatpush1.msra.mxu0 0.0
    %3123 = vmatprep.subr.mxu0 0.0
    %3124 = vmatpush1.msra.mxu0 0.0
    %3125 = vmatprep.subr.mxu0 0.0
    %3126 = vmatpush1.msra.mxu0 0.0
    %3127 = vmatprep.subr.mxu0 0.0
    %3128 = vmatpush1.msra.mxu0 0.0
    %3129 = vmatprep.subr.mxu0 0.0
    %3130 = vmatpush1.msra.mxu0 0.0
    %3131 = vmatprep.subr.mxu0 0.0
    %3132 = vmatpush1.msra.mxu0 0.0
    %3133 = vmatprep.subr.mxu0 0.0
    %3134 = vmatpush1.msra.mxu0 0.0
    %3135 = vmatprep.mubr.f32.mxu0 0.0
    %3136 = vmatmul.mubr.f32.gmra.mrb[0].mxu0 %v2123
    %v3137 = vpop.f32.mrb[0].mxu0
    %v3138 = vadd.f32 %v3069, %v3137
    %v3139 = vpop.f32.mrb[0].mxu0
    %3140 = vmatprep.mubr.f32.mxu0 0.0
    %3141 = vmatmul.mubr.f32.gmra.mrb[0].mxu0 %v2126
    %v3142 = vpop.f32.mrb[0].mxu0
    %v3143 = vadd.f32 %v3069, %v3142
    %v3144 = vpop.f32.mrb[0].mxu0
    %3145 = vdwg.mxu0
    %3146 = vst.msk [vmem:[#allocation2] sm:$0xff] %vm295, %v3138
    %3147 = vst.msk [vmem:[#allocation2 + $0x8] sm:$0xff] %vm295, %v3143
    %v3148 = vld [vmem:[#allocation19] sm:$0xff]
    %v3149 = vld [vmem:[#allocation19 + $0x8] sm:$0xff]
    %v3150 = vld [vmem:[#allocation19 + $0x10] sm:$0xff]
    %v3151 = vld [vmem:[#allocation19 + $0x18] sm:$0xff]
    %v3152 = vld [vmem:[#allocation22] sm:$0x1]
    %v3153 = vld [vmem:[#allocation2 + $0xe] sm:$0x3]
    %3154 = vmatprep.subr.mxu0 0.0
    %3155 = vmatpush1.msra.mxu0 %v3148
    %3156 = vmatprep.subr.mxu0 0.0
    %3157 = vmatpush1.msra.mxu0 %v3149
    %3158 = vmatprep.subr.mxu0 0.0
    %3159 = vmatpush1.msra.mxu0 %v3150
    %3160 = vmatprep.subr.mxu0 0.0
    %3161 = vmatpush1.msra.mxu0 %v3151
    %3162 = vmatprep.subr.mxu0 0.0
    %3163 = vmatpush1.msra.mxu0 0.0
    %3164 = vmatprep.subr.mxu0 0.0
    %3165 = vmatpush1.msra.mxu0 0.0
    %3166 = vmatprep.subr.mxu0 0.0
    %3167 = vmatpush1.msra.mxu0 0.0
    %3168 = vmatprep.subr.mxu0 0.0
    %3169 = vmatpush1.msra.mxu0 0.0
    %3170 = vmatprep.subr.mxu0 0.0
    %3171 = vmatpush1.msra.mxu0 0.0
    %3172 = vmatprep.subr.mxu0 0.0
    %3173 = vmatpush1.msra.mxu0 0.0
    %3174 = vmatprep.subr.mxu0 0.0
    %3175 = vmatpush1.msra.mxu0 0.0
    %3176 = vmatprep.subr.mxu0 0.0
    %3177 = vmatpush1.msra.mxu0 0.0
    %3178 = vmatprep.subr.mxu0 0.0
    %3179 = vmatpush1.msra.mxu0 0.0
    %3180 = vmatprep.subr.mxu0 0.0
    %3181 = vmatpush1.msra.mxu0 0.0
    %3182 = vmatprep.subr.mxu0 0.0
    %3183 = vmatpush1.msra.mxu0 0.0
    %3184 = vmatprep.subr.mxu0 0.0
    %3185 = vmatpush1.msra.mxu0 0.0
    %3186 = vmatprep.subr.mxu0 0.0
    %3187 = vmatpush1.msra.mxu0 0.0
    %3188 = vmatprep.subr.mxu0 0.0
    %3189 = vmatpush1.msra.mxu0 0.0
    %3190 = vmatprep.subr.mxu0 0.0
    %3191 = vmatpush1.msra.mxu0 0.0
    %3192 = vmatprep.subr.mxu0 0.0
    %3193 = vmatpush1.msra.mxu0 0.0
    %3194 = vmatprep.subr.mxu0 0.0
    %3195 = vmatpush1.msra.mxu0 0.0
    %3196 = vmatprep.subr.mxu0 0.0
    %3197 = vmatpush1.msra.mxu0 0.0
    %3198 = vmatprep.subr.mxu0 0.0
    %3199 = vmatpush1.msra.mxu0 0.0
    %3200 = vmatprep.subr.mxu0 0.0
    %3201 = vmatpush1.msra.mxu0 0.0
    %3202 = vmatprep.subr.mxu0 0.0
    %3203 = vmatpush1.msra.mxu0 0.0
    %3204 = vmatprep.subr.mxu0 0.0
    %3205 = vmatpush1.msra.mxu0 0.0
    %3206 = vmatprep.subr.mxu0 0.0
    %3207 = vmatpush1.msra.mxu0 0.0
    %3208 = vmatprep.subr.mxu0 0.0
    %3209 = vmatpush1.msra.mxu0 0.0
    %3210 = vmatprep.subr.mxu0 0.0
    %3211 = vmatpush1.msra.mxu0 0.0
    %3212 = vmatprep.subr.mxu0 0.0
    %3213 = vmatpush1.msra.mxu0 0.0
    %3214 = vmatprep.subr.mxu0 0.0
    %3215 = vmatpush1.msra.mxu0 0.0
    %3216 = vmatprep.subr.mxu0 0.0
    %3217 = vmatpush1.msra.mxu0 0.0
    %3218 = vmatprep.mubr.f32.mxu0 0.0
    %3219 = vmatmul.mubr.f32.gmra.mrb[0].mxu0 %v305
    %v3220 = vpop.f32.mrb[0].mxu0
    %v3221 = vadd.f32 0.0, %v3220
    %v3222 = vpop.f32.mrb[0].mxu0
    %3223 = vdwg.mxu0
    %v3224 = vadd.f32 %v3153, %v3221
    %v3225 = vxor.u32 %v3224, 2147483648
    %v3226 = vmul.f32 %v3225, 1.442695
    %v3227 = vpow.pop %v3226
    %v3228 = vadd.f32 %v3227, 1.0
    %v3229 = vrcp.pop %v3228
    %v3230 = vmul.f32 1.0, %v3229
    %v3232 = vlaneseq
    %v3233 = vshrl.u32 %v3232, 7
    %v3234 = vsub.s32 0, %v3233
    %v3235 = vrot.slane %v3152, %v3234
    %3236 = vrot.lane.b32.xlu0 %v3235, 64
    %v3237 = vpop.permute.xlu0 %3236
    %v3239 = vadd.f32 %v3221, %v3237
    %3241 = vrot.lane.b32.xlu0 %v3239, 64
    %v3242 = vpop.permute.xlu0 %3241
    %v3244 = vmul.f32 %v3230, %v3242
    %3246 = vrot.lane.b32.xlu0 %v3244, 64
    %v3247 = vpop.permute.xlu0 %3246
    %v3249 = vadd.f32 %v3153, %v3247
    %v3250 = vtanh.pop %v3249
    %v3251 = vsub.f32 1.0, %v3230
    %3253 = vrot.lane.b32.xlu0 %v3250, 96
    %v3254 = vpop.permute.xlu0 %3253
    %v3256 = vmul.f32 %v3251, %v3254
    %v3257 = vmul.f32 %v3230, 0.0
    %v3258 = vadd.f32 %v3256, %v3257
    %3260 = vrot.lane.b32.xlu0 %v3258, 96
    %v3261 = vpop.permute.xlu0 %3260
    %3263 = vst.msk [vmem:[#allocation6 + $0xe] sm:$0x3] %vm416, %v3261
    %v3264 = vld [vmem:[#allocation2 + $0xc] sm:$0x3]
    %v3265 = vsel %vm213, %v3261, 0
    %3267 = vmatprep.subr.mxu0 0.0
    %3268 = vmatpush1.msra.mxu0 %v3148
    %3269 = vmatprep.subr.mxu0 0.0
    %3270 = vmatpush1.msra.mxu0 %v3149
    %3271 = vmatprep.subr.mxu0 0.0
    %3272 = vmatpush1.msra.mxu0 %v3150
    %3273 = vmatprep.subr.mxu0 0.0
    %3274 = vmatpush1.msra.mxu0 %v3151
    %3275 = vmatprep.subr.mxu0 0.0
    %3276 = vmatpush1.msra.mxu0 0.0
    %3277 = vmatprep.subr.mxu0 0.0
    %3278 = vmatpush1.msra.mxu0 0.0
    %3279 = vmatprep.subr.mxu0 0.0
    %3280 = vmatpush1.msra.mxu0 0.0
    %3281 = vmatprep.subr.mxu0 0.0
    %3282 = vmatpush1.msra.mxu0 0.0
    %3283 = vmatprep.subr.mxu0 0.0
    %3284 = vmatpush1.msra.mxu0 0.0
    %3285 = vmatprep.subr.mxu0 0.0
    %3286 = vmatpush1.msra.mxu0 0.0
    %3287 = vmatprep.subr.mxu0 0.0
    %3288 = vmatpush1.msra.mxu0 0.0
    %3289 = vmatprep.subr.mxu0 0.0
    %3290 = vmatpush1.msra.mxu0 0.0
    %3291 = vmatprep.subr.mxu0 0.0
    %3292 = vmatpush1.msra.mxu0 0.0
    %3293 = vmatprep.subr.mxu0 0.0
    %3294 = vmatpush1.msra.mxu0 0.0
    %3295 = vmatprep.subr.mxu0 0.0
    %3296 = vmatpush1.msra.mxu0 0.0
    %3297 = vmatprep.subr.mxu0 0.0
    %3298 = vmatpush1.msra.mxu0 0.0
    %3299 = vmatprep.subr.mxu0 0.0
    %3300 = vmatpush1.msra.mxu0 0.0
    %3301 = vmatprep.subr.mxu0 0.0
    %3302 = vmatpush1.msra.mxu0 0.0
    %3303 = vmatprep.subr.mxu0 0.0
    %3304 = vmatpush1.msra.mxu0 0.0
    %3305 = vmatprep.subr.mxu0 0.0
    %3306 = vmatpush1.msra.mxu0 0.0
    %3307 = vmatprep.subr.mxu0 0.0
    %3308 = vmatpush1.msra.mxu0 0.0
    %3309 = vmatprep.subr.mxu0 0.0
    %3310 = vmatpush1.msra.mxu0 0.0
    %3311 = vmatprep.subr.mxu0 0.0
    %3312 = vmatpush1.msra.mxu0 0.0
    %3313 = vmatprep.subr.mxu0 0.0
    %3314 = vmatpush1.msra.mxu0 0.0
    %3315 = vmatprep.subr.mxu0 0.0
    %3316 = vmatpush1.msra.mxu0 0.0
    %3317 = vmatprep.subr.mxu0 0.0
    %3318 = vmatpush1.msra.mxu0 0.0
    %3319 = vmatprep.subr.mxu0 0.0
    %3320 = vmatpush1.msra.mxu0 0.0
    %3321 = vmatprep.subr.mxu0 0.0
    %3322 = vmatpush1.msra.mxu0 0.0
    %3323 = vmatprep.subr.mxu0 0.0
    %3324 = vmatpush1.msra.mxu0 0.0
    %3325 = vmatprep.subr.mxu0 0.0
    %3326 = vmatpush1.msra.mxu0 0.0
    %3327 = vmatprep.subr.mxu0 0.0
    %3328 = vmatpush1.msra.mxu0 0.0
    %3329 = vmatprep.subr.mxu0 0.0
    %3330 = vmatpush1.msra.mxu0 0.0
    %3331 = vmatprep.mubr.f32.mxu0 0.0
    %3332 = vmatmul.mubr.f32.gmra.mrb[0].mxu0 %v3265
    %v3333 = vpop.f32.mrb[0].mxu0
    %v3334 = vadd.f32 0.0, %v3333
    %v3335 = vpop.f32.mrb[0].mxu0
    %3336 = vdwg.mxu0
    %v3337 = vadd.f32 %v3264, %v3334
    %v3338 = vxor.u32 %v3337, 2147483648
    %v3339 = vmul.f32 %v3338, 1.442695
    %v3340 = vpow.pop %v3339
    %v3341 = vadd.f32 %v3340, 1.0
    %v3342 = vrcp.pop %v3341
    %v3343 = vmul.f32 1.0, %v3342
    %v3344 = vadd.f32 %v3334, %v3237
    %3346 = vrot.lane.b32.xlu0 %v3344, 64
    %v3347 = vpop.permute.xlu0 %3346
    %v3349 = vmul.f32 %v3343, %v3347
    %3351 = vrot.lane.b32.xlu0 %v3349, 64
    %v3352 = vpop.permute.xlu0 %3351
    %v3354 = vadd.f32 %v3264, %v3352
    %v3355 = vtanh.pop %v3354
    %v3356 = vsub.f32 1.0, %v3343
    %3358 = vrot.lane.b32.xlu0 %v3355, 96
    %v3359 = vpop.permute.xlu0 %3358
    %v3361 = vmul.f32 %v3356, %v3359
    %v3362 = vmul.f32 %v3343, %v3258
    %v3363 = vadd.f32 %v3361, %v3362
    %3365 = vrot.lane.b32.xlu0 %v3363, 96
    %v3366 = vpop.permute.xlu0 %3365
    %3368 = vst.msk [vmem:[#allocation6 + $0xc] sm:$0x3] %vm416, %v3366
    %v3369 = vld [vmem:[#allocation2 + $0xa] sm:$0x3]
    %v3370 = vsel %vm213, %v3366, 0
    %3372 = vmatprep.subr.mxu0 0.0
    %3373 = vmatpush1.msra.mxu0 %v3148
    %3374 = vmatprep.subr.mxu0 0.0
    %3375 = vmatpush1.msra.mxu0 %v3149
    %3376 = vmatprep.subr.mxu0 0.0
    %3377 = vmatpush1.msra.mxu0 %v3150
    %3378 = vmatprep.subr.mxu0 0.0
    %3379 = vmatpush1.msra.mxu0 %v3151
    %3380 = vmatprep.subr.mxu0 0.0
    %3381 = vmatpush1.msra.mxu0 0.0
    %3382 = vmatprep.subr.mxu0 0.0
    %3383 = vmatpush1.msra.mxu0 0.0
    %3384 = vmatprep.subr.mxu0 0.0
    %3385 = vmatpush1.msra.mxu0 0.0
    %3386 = vmatprep.subr.mxu0 0.0
    %3387 = vmatpush1.msra.mxu0 0.0
    %3388 = vmatprep.subr.mxu0 0.0
    %3389 = vmatpush1.msra.mxu0 0.0
    %3390 = vmatprep.subr.mxu0 0.0
    %3391 = vmatpush1.msra.mxu0 0.0
    %3392 = vmatprep.subr.mxu0 0.0
    %3393 = vmatpush1.msra.mxu0 0.0
    %3394 = vmatprep.subr.mxu0 0.0
    %3395 = vmatpush1.msra.mxu0 0.0
    %3396 = vmatprep.subr.mxu0 0.0
    %3397 = vmatpush1.msra.mxu0 0.0
    %3398 = vmatprep.subr.mxu0 0.0
    %3399 = vmatpush1.msra.mxu0 0.0
    %3400 = vmatprep.subr.mxu0 0.0
    %3401 = vmatpush1.msra.mxu0 0.0
    %3402 = vmatprep.subr.mxu0 0.0
    %3403 = vmatpush1.msra.mxu0 0.0
    %3404 = vmatprep.subr.mxu0 0.0
    %3405 = vmatpush1.msra.mxu0 0.0
    %3406 = vmatprep.subr.mxu0 0.0
    %3407 = vmatpush1.msra.mxu0 0.0
    %3408 = vmatprep.subr.mxu0 0.0
    %3409 = vmatpush1.msra.mxu0 0.0
    %3410 = vmatprep.subr.mxu0 0.0
    %3411 = vmatpush1.msra.mxu0 0.0
    %3412 = vmatprep.subr.mxu0 0.0
    %3413 = vmatpush1.msra.mxu0 0.0
    %3414 = vmatprep.subr.mxu0 0.0
    %3415 = vmatpush1.msra.mxu0 0.0
    %3416 = vmatprep.subr.mxu0 0.0
    %3417 = vmatpush1.msra.mxu0 0.0
    %3418 = vmatprep.subr.mxu0 0.0
    %3419 = vmatpush1.msra.mxu0 0.0
    %3420 = vmatprep.subr.mxu0 0.0
    %3421 = vmatpush1.msra.mxu0 0.0
    %3422 = vmatprep.subr.mxu0 0.0
    %3423 = vmatpush1.msra.mxu0 0.0
    %3424 = vmatprep.subr.mxu0 0.0
    %3425 = vmatpush1.msra.mxu0 0.0
    %3426 = vmatprep.subr.mxu0 0.0
    %3427 = vmatpush1.msra.mxu0 0.0
    %3428 = vmatprep.subr.mxu0 0.0
    %3429 = vmatpush1.msra.mxu0 0.0
    %3430 = vmatprep.subr.mxu0 0.0
    %3431 = vmatpush1.msra.mxu0 0.0
    %3432 = vmatprep.subr.mxu0 0.0
    %3433 = vmatpush1.msra.mxu0 0.0
    %3434 = vmatprep.subr.mxu0 0.0
    %3435 = vmatpush1.msra.mxu0 0.0
    %3436 = vmatprep.mubr.f32.mxu0 0.0
    %3437 = vmatmul.mubr.f32.gmra.mrb[0].mxu0 %v3370
    %v3438 = vpop.f32.mrb[0].mxu0
    %v3439 = vadd.f32 0.0, %v3438
    %v3440 = vpop.f32.mrb[0].mxu0
    %3441 = vdwg.mxu0
    %v3442 = vadd.f32 %v3369, %v3439
    %v3443 = vxor.u32 %v3442, 2147483648
    %v3444 = vmul.f32 %v3443, 1.442695
    %v3445 = vpow.pop %v3444
    %v3446 = vadd.f32 %v3445, 1.0
    %v3447 = vrcp.pop %v3446
    %v3448 = vmul.f32 1.0, %v3447
    %v3449 = vadd.f32 %v3439, %v3237
    %3451 = vrot.lane.b32.xlu0 %v3449, 64
    %v3452 = vpop.permute.xlu0 %3451
    %v3454 = vmul.f32 %v3448, %v3452
    %3456 = vrot.lane.b32.xlu0 %v3454, 64
    %v3457 = vpop.permute.xlu0 %3456
    %v3459 = vadd.f32 %v3369, %v3457
    %v3460 = vtanh.pop %v3459
    %v3461 = vsub.f32 1.0, %v3448
    %3463 = vrot.lane.b32.xlu0 %v3460, 96
    %v3464 = vpop.permute.xlu0 %3463
    %v3466 = vmul.f32 %v3461, %v3464
    %v3467 = vmul.f32 %v3448, %v3363
    %v3468 = vadd.f32 %v3466, %v3467
    %3470 = vrot.lane.b32.xlu0 %v3468, 96
    %v3471 = vpop.permute.xlu0 %3470
    %3473 = vst.msk [vmem:[#allocation6 + $0xa] sm:$0x3] %vm416, %v3471
    %v3474 = vld [vmem:[#allocation2 + $0x8] sm:$0x3]
    %v3475 = vsel %vm213, %v3471, 0
    %3477 = vmatprep.subr.mxu0 0.0
    %3478 = vmatpush1.msra.mxu0 %v3148
    %3479 = vmatprep.subr.mxu0 0.0
    %3480 = vmatpush1.msra.mxu0 %v3149
    %3481 = vmatprep.subr.mxu0 0.0
    %3482 = vmatpush1.msra.mxu0 %v3150
    %3483 = vmatprep.subr.mxu0 0.0
    %3484 = vmatpush1.msra.mxu0 %v3151
    %3485 = vmatprep.subr.mxu0 0.0
    %3486 = vmatpush1.msra.mxu0 0.0
    %3487 = vmatprep.subr.mxu0 0.0
    %3488 = vmatpush1.msra.mxu0 0.0
    %3489 = vmatprep.subr.mxu0 0.0
    %3490 = vmatpush1.msra.mxu0 0.0
    %3491 = vmatprep.subr.mxu0 0.0
    %3492 = vmatpush1.msra.mxu0 0.0
    %3493 = vmatprep.subr.mxu0 0.0
    %3494 = vmatpush1.msra.mxu0 0.0
    %3495 = vmatprep.subr.mxu0 0.0
    %3496 = vmatpush1.msra.mxu0 0.0
    %3497 = vmatprep.subr.mxu0 0.0
    %3498 = vmatpush1.msra.mxu0 0.0
    %3499 = vmatprep.subr.mxu0 0.0
    %3500 = vmatpush1.msra.mxu0 0.0
    %3501 = vmatprep.subr.mxu0 0.0
    %3502 = vmatpush1.msra.mxu0 0.0
    %3503 = vmatprep.subr.mxu0 0.0
    %3504 = vmatpush1.msra.mxu0 0.0
    %3505 = vmatprep.subr.mxu0 0.0
    %3506 = vmatpush1.msra.mxu0 0.0
    %3507 = vmatprep.subr.mxu0 0.0
    %3508 = vmatpush1.msra.mxu0 0.0
    %3509 = vmatprep.subr.mxu0 0.0
    %3510 = vmatpush1.msra.mxu0 0.0
    %3511 = vmatprep.subr.mxu0 0.0
    %3512 = vmatpush1.msra.mxu0 0.0
    %3513 = vmatprep.subr.mxu0 0.0
    %3514 = vmatpush1.msra.mxu0 0.0
    %3515 = vmatprep.subr.mxu0 0.0
    %3516 = vmatpush1.msra.mxu0 0.0
    %3517 = vmatprep.subr.mxu0 0.0
    %3518 = vmatpush1.msra.mxu0 0.0
    %3519 = vmatprep.subr.mxu0 0.0
    %3520 = vmatpush1.msra.mxu0 0.0
    %3521 = vmatprep.subr.mxu0 0.0
    %3522 = vmatpush1.msra.mxu0 0.0
    %3523 = vmatprep.subr.mxu0 0.0
    %3524 = vmatpush1.msra.mxu0 0.0
    %3525 = vmatprep.subr.mxu0 0.0
    %3526 = vmatpush1.msra.mxu0 0.0
    %3527 = vmatprep.subr.mxu0 0.0
    %3528 = vmatpush1.msra.mxu0 0.0
    %3529 = vmatprep.subr.mxu0 0.0
    %3530 = vmatpush1.msra.mxu0 0.0
    %3531 = vmatprep.subr.mxu0 0.0
    %3532 = vmatpush1.msra.mxu0 0.0
    %3533 = vmatprep.subr.mxu0 0.0
    %3534 = vmatpush1.msra.mxu0 0.0
    %3535 = vmatprep.subr.mxu0 0.0
    %3536 = vmatpush1.msra.mxu0 0.0
    %3537 = vmatprep.subr.mxu0 0.0
    %3538 = vmatpush1.msra.mxu0 0.0
    %3539 = vmatprep.subr.mxu0 0.0
    %3540 = vmatpush1.msra.mxu0 0.0
    %3541 = vmatprep.mubr.f32.mxu0 0.0
    %3542 = vmatmul.mubr.f32.gmra.mrb[0].mxu0 %v3475
    %v3543 = vpop.f32.mrb[0].mxu0
    %v3544 = vadd.f32 0.0, %v3543
    %v3545 = vpop.f32.mrb[0].mxu0
    %3546 = vdwg.mxu0
    %v3547 = vadd.f32 %v3474, %v3544
    %v3548 = vxor.u32 %v3547, 2147483648
    %v3549 = vmul.f32 %v3548, 1.442695
    %v3550 = vpow.pop %v3549
    %v3551 = vadd.f32 %v3550, 1.0
    %v3552 = vrcp.pop %v3551
    %v3553 = vmul.f32 1.0, %v3552
    %v3554 = vadd.f32 %v3544, %v3237
    %3556 = vrot.lane.b32.xlu0 %v3554, 64
    %v3557 = vpop.permute.xlu0 %3556
    %v3559 = vmul.f32 %v3553, %v3557
    %3561 = vrot.lane.b32.xlu0 %v3559, 64
    %v3562 = vpop.permute.xlu0 %3561
    %v3564 = vadd.f32 %v3474, %v3562
    %v3565 = vtanh.pop %v3564
    %v3566 = vsub.f32 1.0, %v3553
    %3568 = vrot.lane.b32.xlu0 %v3565, 96
    %v3569 = vpop.permute.xlu0 %3568
    %v3571 = vmul.f32 %v3566, %v3569
    %v3572 = vmul.f32 %v3553, %v3468
    %v3573 = vadd.f32 %v3571, %v3572
    %3575 = vrot.lane.b32.xlu0 %v3573, 96
    %v3576 = vpop.permute.xlu0 %3575
    %3578 = vst.msk [vmem:[#allocation6 + $0x8] sm:$0x3] %vm416, %v3576
    %v3579 = vld [vmem:[#allocation2 + $0x6] sm:$0x3]
    %v3580 = vsel %vm213, %v3576, 0
    %3582 = vmatprep.subr.mxu0 0.0
    %3583 = vmatpush1.msra.mxu0 %v3148
    %3584 = vmatprep.subr.mxu0 0.0
    %3585 = vmatpush1.msra.mxu0 %v3149
    %3586 = vmatprep.subr.mxu0 0.0
    %3587 = vmatpush1.msra.mxu0 %v3150
    %3588 = vmatprep.subr.mxu0 0.0
    %3589 = vmatpush1.msra.mxu0 %v3151
    %3590 = vmatprep.subr.mxu0 0.0
    %3591 = vmatpush1.msra.mxu0 0.0
    %3592 = vmatprep.subr.mxu0 0.0
    %3593 = vmatpush1.msra.mxu0 0.0
    %3594 = vmatprep.subr.mxu0 0.0
    %3595 = vmatpush1.msra.mxu0 0.0
    %3596 = vmatprep.subr.mxu0 0.0
    %3597 = vmatpush1.msra.mxu0 0.0
    %3598 = vmatprep.subr.mxu0 0.0
    %3599 = vmatpush1.msra.mxu0 0.0
    %3600 = vmatprep.subr.mxu0 0.0
    %3601 = vmatpush1.msra.mxu0 0.0
    %3602 = vmatprep.subr.mxu0 0.0
    %3603 = vmatpush1.msra.mxu0 0.0
    %3604 = vmatprep.subr.mxu0 0.0
    %3605 = vmatpush1.msra.mxu0 0.0
    %3606 = vmatprep.subr.mxu0 0.0
    %3607 = vmatpush1.msra.mxu0 0.0
    %3608 = vmatprep.subr.mxu0 0.0
    %3609 = vmatpush1.msra.mxu0 0.0
    %3610 = vmatprep.subr.mxu0 0.0
    %3611 = vmatpush1.msra.mxu0 0.0
    %3612 = vmatprep.subr.mxu0 0.0
    %3613 = vmatpush1.msra.mxu0 0.0
    %3614 = vmatprep.subr.mxu0 0.0
    %3615 = vmatpush1.msra.mxu0 0.0
    %3616 = vmatprep.subr.mxu0 0.0
    %3617 = vmatpush1.msra.mxu0 0.0
    %3618 = vmatprep.subr.mxu0 0.0
    %3619 = vmatpush1.msra.mxu0 0.0
    %3620 = vmatprep.subr.mxu0 0.0
    %3621 = vmatpush1.msra.mxu0 0.0
    %3622 = vmatprep.subr.mxu0 0.0
    %3623 = vmatpush1.msra.mxu0 0.0
    %3624 = vmatprep.subr.mxu0 0.0
    %3625 = vmatpush1.msra.mxu0 0.0
    %3626 = vmatprep.subr.mxu0 0.0
    %3627 = vmatpush1.msra.mxu0 0.0
    %3628 = vmatprep.subr.mxu0 0.0
    %3629 = vmatpush1.msra.mxu0 0.0
    %3630 = vmatprep.subr.mxu0 0.0
    %3631 = vmatpush1.msra.mxu0 0.0
    %3632 = vmatprep.subr.mxu0 0.0
    %3633 = vmatpush1.msra.mxu0 0.0
    %3634 = vmatprep.subr.mxu0 0.0
    %3635 = vmatpush1.msra.mxu0 0.0
    %3636 = vmatprep.subr.mxu0 0.0
    %3637 = vmatpush1.msra.mxu0 0.0
    %3638 = vmatprep.subr.mxu0 0.0
    %3639 = vmatpush1.msra.mxu0 0.0
    %3640 = vmatprep.subr.mxu0 0.0
    %3641 = vmatpush1.msra.mxu0 0.0
    %3642 = vmatprep.subr.mxu0 0.0
    %3643 = vmatpush1.msra.mxu0 0.0
    %3644 = vmatprep.subr.mxu0 0.0
    %3645 = vmatpush1.msra.mxu0 0.0
    %3646 = vmatprep.mubr.f32.mxu0 0.0
    %3647 = vmatmul.mubr.f32.gmra.mrb[0].mxu0 %v3580
    %v3648 = vpop.f32.mrb[0].mxu0
    %v3649 = vadd.f32 0.0, %v3648
    %v3650 = vpop.f32.mrb[0].mxu0
    %3651 = vdwg.mxu0
    %v3652 = vadd.f32 %v3579, %v3649
    %v3653 = vxor.u32 %v3652, 2147483648
    %v3654 = vmul.f32 %v3653, 1.442695
    %v3655 = vpow.pop %v3654
    %v3656 = vadd.f32 %v3655, 1.0
    %v3657 = vrcp.pop %v3656
    %v3658 = vmul.f32 1.0, %v3657
    %v3659 = vadd.f32 %v3649, %v3237
    %3661 = vrot.lane.b32.xlu0 %v3659, 64
    %v3662 = vpop.permute.xlu0 %3661
    %v3664 = vmul.f32 %v3658, %v3662
    %3666 = vrot.lane.b32.xlu0 %v3664, 64
    %v3667 = vpop.permute.xlu0 %3666
    %v3669 = vadd.f32 %v3579, %v3667
    %v3670 = vtanh.pop %v3669
    %v3671 = vsub.f32 1.0, %v3658
    %3673 = vrot.lane.b32.xlu0 %v3670, 96
    %v3674 = vpop.permute.xlu0 %3673
    %v3676 = vmul.f32 %v3671, %v3674
    %v3677 = vmul.f32 %v3658, %v3573
    %v3678 = vadd.f32 %v3676, %v3677
    %3680 = vrot.lane.b32.xlu0 %v3678, 96
    %v3681 = vpop.permute.xlu0 %3680
    %3683 = vst.msk [vmem:[#allocation6 + $0x6] sm:$0x3] %vm416, %v3681
    %v3684 = vld [vmem:[#allocation2 + $0x4] sm:$0x3]
    %v3685 = vsel %vm213, %v3681, 0
    %3687 = vmatprep.subr.mxu0 0.0
    %3688 = vmatpush1.msra.mxu0 %v3148
    %3689 = vmatprep.subr.mxu0 0.0
    %3690 = vmatpush1.msra.mxu0 %v3149
    %3691 = vmatprep.subr.mxu0 0.0
    %3692 = vmatpush1.msra.mxu0 %v3150
    %3693 = vmatprep.subr.mxu0 0.0
    %3694 = vmatpush1.msra.mxu0 %v3151
    %3695 = vmatprep.subr.mxu0 0.0
    %3696 = vmatpush1.msra.mxu0 0.0
    %3697 = vmatprep.subr.mxu0 0.0
    %3698 = vmatpush1.msra.mxu0 0.0
    %3699 = vmatprep.subr.mxu0 0.0
    %3700 = vmatpush1.msra.mxu0 0.0
    %3701 = vmatprep.subr.mxu0 0.0
    %3702 = vmatpush1.msra.mxu0 0.0
    %3703 = vmatprep.subr.mxu0 0.0
    %3704 = vmatpush1.msra.mxu0 0.0
    %3705 = vmatprep.subr.mxu0 0.0
    %3706 = vmatpush1.msra.mxu0 0.0
    %3707 = vmatprep.subr.mxu0 0.0
    %3708 = vmatpush1.msra.mxu0 0.0
    %3709 = vmatprep.subr.mxu0 0.0
    %3710 = vmatpush1.msra.mxu0 0.0
    %3711 = vmatprep.subr.mxu0 0.0
    %3712 = vmatpush1.msra.mxu0 0.0
    %3713 = vmatprep.subr.mxu0 0.0
    %3714 = vmatpush1.msra.mxu0 0.0
    %3715 = vmatprep.subr.mxu0 0.0
    %3716 = vmatpush1.msra.mxu0 0.0
    %3717 = vmatprep.subr.mxu0 0.0
    %3718 = vmatpush1.msra.mxu0 0.0
    %3719 = vmatprep.subr.mxu0 0.0
    %3720 = vmatpush1.msra.mxu0 0.0
    %3721 = vmatprep.subr.mxu0 0.0
    %3722 = vmatpush1.msra.mxu0 0.0
    %3723 = vmatprep.subr.mxu0 0.0
    %3724 = vmatpush1.msra.mxu0 0.0
    %3725 = vmatprep.subr.mxu0 0.0
    %3726 = vmatpush1.msra.mxu0 0.0
    %3727 = vmatprep.subr.mxu0 0.0
    %3728 = vmatpush1.msra.mxu0 0.0
    %3729 = vmatprep.subr.mxu0 0.0
    %3730 = vmatpush1.msra.mxu0 0.0
    %3731 = vmatprep.subr.mxu0 0.0
    %3732 = vmatpush1.msra.mxu0 0.0
    %3733 = vmatprep.subr.mxu0 0.0
    %3734 = vmatpush1.msra.mxu0 0.0
    %3735 = vmatprep.subr.mxu0 0.0
    %3736 = vmatpush1.msra.mxu0 0.0
    %3737 = vmatprep.subr.mxu0 0.0
    %3738 = vmatpush1.msra.mxu0 0.0
    %3739 = vmatprep.subr.mxu0 0.0
    %3740 = vmatpush1.msra.mxu0 0.0
    %3741 = vmatprep.subr.mxu0 0.0
    %3742 = vmatpush1.msra.mxu0 0.0
    %3743 = vmatprep.subr.mxu0 0.0
    %3744 = vmatpush1.msra.mxu0 0.0
    %3745 = vmatprep.subr.mxu0 0.0
    %3746 = vmatpush1.msra.mxu0 0.0
    %3747 = vmatprep.subr.mxu0 0.0
    %3748 = vmatpush1.msra.mxu0 0.0
    %3749 = vmatprep.subr.mxu0 0.0
    %3750 = vmatpush1.msra.mxu0 0.0
    %3751 = vmatprep.mubr.f32.mxu0 0.0
    %3752 = vmatmul.mubr.f32.gmra.mrb[0].mxu0 %v3685
    %v3753 = vpop.f32.mrb[0].mxu0
    %v3754 = vadd.f32 0.0, %v3753
    %v3755 = vpop.f32.mrb[0].mxu0
    %3756 = vdwg.mxu0
    %v3757 = vadd.f32 %v3684, %v3754
    %v3758 = vxor.u32 %v3757, 2147483648
    %v3759 = vmul.f32 %v3758, 1.442695
    %v3760 = vpow.pop %v3759
    %v3761 = vadd.f32 %v3760, 1.0
    %v3762 = vrcp.pop %v3761
    %v3763 = vmul.f32 1.0, %v3762
    %v3764 = vadd.f32 %v3754, %v3237
    %3766 = vrot.lane.b32.xlu0 %v3764, 64
    %v3767 = vpop.permute.xlu0 %3766
    %v3769 = vmul.f32 %v3763, %v3767
    %3771 = vrot.lane.b32.xlu0 %v3769, 64
    %v3772 = vpop.permute.xlu0 %3771
    %v3774 = vadd.f32 %v3684, %v3772
    %v3775 = vtanh.pop %v3774
    %v3776 = vsub.f32 1.0, %v3763
    %3778 = vrot.lane.b32.xlu0 %v3775, 96
    %v3779 = vpop.permute.xlu0 %3778
    %v3781 = vmul.f32 %v3776, %v3779
    %v3782 = vmul.f32 %v3763, %v3678
    %v3783 = vadd.f32 %v3781, %v3782
    %3785 = vrot.lane.b32.xlu0 %v3783, 96
    %v3786 = vpop.permute.xlu0 %3785
    %3788 = vst.msk [vmem:[#allocation6 + $0x4] sm:$0x3] %vm416, %v3786
    %v3789 = vld [vmem:[#allocation2 + $0x2] sm:$0x3]
    %v3790 = vsel %vm213, %v3786, 0
    %3792 = vmatprep.subr.mxu0 0.0
    %3793 = vmatpush1.msra.mxu0 %v3148
    %3794 = vmatprep.subr.mxu0 0.0
    %3795 = vmatpush1.msra.mxu0 %v3149
    %3796 = vmatprep.subr.mxu0 0.0
    %3797 = vmatpush1.msra.mxu0 %v3150
    %3798 = vmatprep.subr.mxu0 0.0
    %3799 = vmatpush1.msra.mxu0 %v3151
    %3800 = vmatprep.subr.mxu0 0.0
    %3801 = vmatpush1.msra.mxu0 0.0
    %3802 = vmatprep.subr.mxu0 0.0
    %3803 = vmatpush1.msra.mxu0 0.0
    %3804 = vmatprep.subr.mxu0 0.0
    %3805 = vmatpush1.msra.mxu0 0.0
    %3806 = vmatprep.subr.mxu0 0.0
    %3807 = vmatpush1.msra.mxu0 0.0
    %3808 = vmatprep.subr.mxu0 0.0
    %3809 = vmatpush1.msra.mxu0 0.0
    %3810 = vmatprep.subr.mxu0 0.0
    %3811 = vmatpush1.msra.mxu0 0.0
    %3812 = vmatprep.subr.mxu0 0.0
    %3813 = vmatpush1.msra.mxu0 0.0
    %3814 = vmatprep.subr.mxu0 0.0
    %3815 = vmatpush1.msra.mxu0 0.0
    %3816 = vmatprep.subr.mxu0 0.0
    %3817 = vmatpush1.msra.mxu0 0.0
    %3818 = vmatprep.subr.mxu0 0.0
    %3819 = vmatpush1.msra.mxu0 0.0
    %3820 = vmatprep.subr.mxu0 0.0
    %3821 = vmatpush1.msra.mxu0 0.0
    %3822 = vmatprep.subr.mxu0 0.0
    %3823 = vmatpush1.msra.mxu0 0.0
    %3824 = vmatprep.subr.mxu0 0.0
    %3825 = vmatpush1.msra.mxu0 0.0
    %3826 = vmatprep.subr.mxu0 0.0
    %3827 = vmatpush1.msra.mxu0 0.0
    %3828 = vmatprep.subr.mxu0 0.0
    %3829 = vmatpush1.msra.mxu0 0.0
    %3830 = vmatprep.subr.mxu0 0.0
    %3831 = vmatpush1.msra.mxu0 0.0
    %3832 = vmatprep.subr.mxu0 0.0
    %3833 = vmatpush1.msra.mxu0 0.0
    %3834 = vmatprep.subr.mxu0 0.0
    %3835 = vmatpush1.msra.mxu0 0.0
    %3836 = vmatprep.subr.mxu0 0.0
    %3837 = vmatpush1.msra.mxu0 0.0
    %3838 = vmatprep.subr.mxu0 0.0
    %3839 = vmatpush1.msra.mxu0 0.0
    %3840 = vmatprep.subr.mxu0 0.0
    %3841 = vmatpush1.msra.mxu0 0.0
    %3842 = vmatprep.subr.mxu0 0.0
    %3843 = vmatpush1.msra.mxu0 0.0
    %3844 = vmatprep.subr.mxu0 0.0
    %3845 = vmatpush1.msra.mxu0 0.0
    %3846 = vmatprep.subr.mxu0 0.0
    %3847 = vmatpush1.msra.mxu0 0.0
    %3848 = vmatprep.subr.mxu0 0.0
    %3849 = vmatpush1.msra.mxu0 0.0
    %3850 = vmatprep.subr.mxu0 0.0
    %3851 = vmatpush1.msra.mxu0 0.0
    %3852 = vmatprep.subr.mxu0 0.0
    %3853 = vmatpush1.msra.mxu0 0.0
    %3854 = vmatprep.subr.mxu0 0.0
    %3855 = vmatpush1.msra.mxu0 0.0
    %3856 = vmatprep.mubr.f32.mxu0 0.0
    %3857 = vmatmul.mubr.f32.gmra.mrb[0].mxu0 %v3790
    %v3858 = vpop.f32.mrb[0].mxu0
    %v3859 = vadd.f32 0.0, %v3858
    %v3860 = vpop.f32.mrb[0].mxu0
    %3861 = vdwg.mxu0
    %v3862 = vadd.f32 %v3789, %v3859
    %v3863 = vxor.u32 %v3862, 2147483648
    %v3864 = vmul.f32 %v3863, 1.442695
    %v3865 = vpow.pop %v3864
    %v3866 = vadd.f32 %v3865, 1.0
    %v3867 = vrcp.pop %v3866
    %v3868 = vmul.f32 1.0, %v3867
    %v3869 = vadd.f32 %v3859, %v3237
    %3871 = vrot.lane.b32.xlu0 %v3869, 64
    %v3872 = vpop.permute.xlu0 %3871
    %v3874 = vmul.f32 %v3868, %v3872
    %3876 = vrot.lane.b32.xlu0 %v3874, 64
    %v3877 = vpop.permute.xlu0 %3876
    %v3879 = vadd.f32 %v3789, %v3877
    %v3880 = vtanh.pop %v3879
    %v3881 = vsub.f32 1.0, %v3868
    %3883 = vrot.lane.b32.xlu0 %v3880, 96
    %v3884 = vpop.permute.xlu0 %3883
    %v3886 = vmul.f32 %v3881, %v3884
    %v3887 = vmul.f32 %v3868, %v3783
    %v3888 = vadd.f32 %v3886, %v3887
    %3890 = vrot.lane.b32.xlu0 %v3888, 96
    %v3891 = vpop.permute.xlu0 %3890
    %3893 = vst.msk [vmem:[#allocation6 + $0x2] sm:$0x3] %vm416, %v3891
    %v3894 = vld [vmem:[#allocation2] sm:$0x3]
    %v3895 = vsel %vm213, %v3891, 0
    %3897 = vmatprep.subr.mxu0 0.0
    %3898 = vmatpush1.msra.mxu0 %v3148
    %3899 = vmatprep.subr.mxu0 0.0
    %3900 = vmatpush1.msra.mxu0 %v3149
    %3901 = vmatprep.subr.mxu0 0.0
    %3902 = vmatpush1.msra.mxu0 %v3150
    %3903 = vmatprep.subr.mxu0 0.0
    %3904 = vmatpush1.msra.mxu0 %v3151
    %3905 = vmatprep.subr.mxu0 0.0
    %3906 = vmatpush1.msra.mxu0 0.0
    %3907 = vmatprep.subr.mxu0 0.0
    %3908 = vmatpush1.msra.mxu0 0.0
    %3909 = vmatprep.subr.mxu0 0.0
    %3910 = vmatpush1.msra.mxu0 0.0
    %3911 = vmatprep.subr.mxu0 0.0
    %3912 = vmatpush1.msra.mxu0 0.0
    %3913 = vmatprep.subr.mxu0 0.0
    %3914 = vmatpush1.msra.mxu0 0.0
    %3915 = vmatprep.subr.mxu0 0.0
    %3916 = vmatpush1.msra.mxu0 0.0
    %3917 = vmatprep.subr.mxu0 0.0
    %3918 = vmatpush1.msra.mxu0 0.0
    %3919 = vmatprep.subr.mxu0 0.0
    %3920 = vmatpush1.msra.mxu0 0.0
    %3921 = vmatprep.subr.mxu0 0.0
    %3922 = vmatpush1.msra.mxu0 0.0
    %3923 = vmatprep.subr.mxu0 0.0
    %3924 = vmatpush1.msra.mxu0 0.0
    %3925 = vmatprep.subr.mxu0 0.0
    %3926 = vmatpush1.msra.mxu0 0.0
    %3927 = vmatprep.subr.mxu0 0.0
    %3928 = vmatpush1.msra.mxu0 0.0
    %3929 = vmatprep.subr.mxu0 0.0
    %3930 = vmatpush1.msra.mxu0 0.0
    %3931 = vmatprep.subr.mxu0 0.0
    %3932 = vmatpush1.msra.mxu0 0.0
    %3933 = vmatprep.subr.mxu0 0.0
    %3934 = vmatpush1.msra.mxu0 0.0
    %3935 = vmatprep.subr.mxu0 0.0
    %3936 = vmatpush1.msra.mxu0 0.0
    %3937 = vmatprep.subr.mxu0 0.0
    %3938 = vmatpush1.msra.mxu0 0.0
    %3939 = vmatprep.subr.mxu0 0.0
    %3940 = vmatpush1.msra.mxu0 0.0
    %3941 = vmatprep.subr.mxu0 0.0
    %3942 = vmatpush1.msra.mxu0 0.0
    %3943 = vmatprep.subr.mxu0 0.0
    %3944 = vmatpush1.msra.mxu0 0.0
    %3945 = vmatprep.subr.mxu0 0.0
    %3946 = vmatpush1.msra.mxu0 0.0
    %3947 = vmatprep.subr.mxu0 0.0
    %3948 = vmatpush1.msra.mxu0 0.0
    %3949 = vmatprep.subr.mxu0 0.0
    %3950 = vmatpush1.msra.mxu0 0.0
    %3951 = vmatprep.subr.mxu0 0.0
    %3952 = vmatpush1.msra.mxu0 0.0
    %3953 = vmatprep.subr.mxu0 0.0
    %3954 = vmatpush1.msra.mxu0 0.0
    %3955 = vmatprep.subr.mxu0 0.0
    %3956 = vmatpush1.msra.mxu0 0.0
    %3957 = vmatprep.subr.mxu0 0.0
    %3958 = vmatpush1.msra.mxu0 0.0
    %3959 = vmatprep.subr.mxu0 0.0
    %3960 = vmatpush1.msra.mxu0 0.0
    %3961 = vmatprep.mubr.f32.mxu0 0.0
    %3962 = vmatmul.mubr.f32.gmra.mrb[0].mxu0 %v3895
    %v3963 = vpop.f32.mrb[0].mxu0
    %v3964 = vadd.f32 0.0, %v3963
    %v3965 = vpop.f32.mrb[0].mxu0
    %3966 = vdwg.mxu0
    %v3967 = vadd.f32 %v3894, %v3964
    %v3968 = vxor.u32 %v3967, 2147483648
    %v3969 = vmul.f32 %v3968, 1.442695
    %v3970 = vpow.pop %v3969
    %v3971 = vadd.f32 %v3970, 1.0
    %v3972 = vrcp.pop %v3971
    %v3973 = vmul.f32 1.0, %v3972
    %v3974 = vadd.f32 %v3964, %v3237
    %3976 = vrot.lane.b32.xlu0 %v3974, 64
    %v3977 = vpop.permute.xlu0 %3976
    %v3979 = vmul.f32 %v3973, %v3977
    %3981 = vrot.lane.b32.xlu0 %v3979, 64
    %v3982 = vpop.permute.xlu0 %3981
    %v3984 = vadd.f32 %v3894, %v3982
    %v3985 = vtanh.pop %v3984
    %v3986 = vsub.f32 1.0, %v3973
    %3988 = vrot.lane.b32.xlu0 %v3985, 96
    %v3989 = vpop.permute.xlu0 %3988
    %v3991 = vmul.f32 %v3986, %v3989
    %v3992 = vmul.f32 %v3973, %v3888
    %v3993 = vadd.f32 %v3991, %v3992
    %3995 = vrot.lane.b32.xlu0 %v3993, 96
    %v3996 = vpop.permute.xlu0 %3995
    %3998 = vst.msk [vmem:[#allocation6] sm:$0x3] %vm416, %v3996
    %v3999 = vld [vmem:[#allocation5] sm:$0xff]
    %v4000 = vld [vmem:[#allocation5 + $0x8] sm:$0xff]
    %v4001 = vld [vmem:[#allocation6] sm:$0xff]
    %v4002 = vld [vmem:[#allocation6 + $0x8] sm:$0xff]
    %4005 = vrot.lane.b32.xlu0 %v4001, 32
    %v4006 = vpop.permute.xlu0 %4005
    %4007 = vrot.lane.b32.xlu0 %v4002, 32
    %v4008 = vpop.permute.xlu0 %4007
    %v4011 = vsel %vm213, %v3999, %v4006
    %v4012 = vsel %vm213, %v4000, %v4008
    %4013 = vst.msk [vmem:[%s19] sm:$0xff] %vm2121, %v4011
    %4014 = vst.msk [vmem:[%s19 + $0x8] sm:$0xff] %vm2121, %v4012
    %v4015 = vsel %vm213, %v1150, %v2086
    %v4016 = vsel %vm213, %v3053, %v3993
    %v4018 = vrot.slane %v4016, 6
    %vm4020 = vcmask 1041408
    %v4021 = vsel %vm4020, %v4015, %v4018
    %v4022 = vld [vmem:[%s17] sm:$0xff]
    %v4023 = vld [vmem:[%s17 + $0x8] sm:$0xff]
    %v4024 = vld [vmem:[%s17 + $0x10] sm:$0xff]
    %v4025 = vld [vmem:[%s17 + $0x18] sm:$0xff]
    %v4026 = vld [vmem:[%s17 + $0x20] sm:$0xff]
    %v4027 = vld [vmem:[%s17 + $0x28] sm:$0xff]
    %v4028 = vld [vmem:[%s17 + $0x30] sm:$0xff]
    %v4029 = vld [vmem:[%s17 + $0x38] sm:$0xff]
    %v4030 = vld [vmem:[#allocation24] sm:$0x1]
    %v4032 = vlaneseq
    %v4033 = vshrl.u32 %v4032, 7
    %v4034 = vsub.s32 0, %v4033
    %v4035 = vrot.slane %v4030, %v4034
    %v4038 = vsel %vm2121, %v4021, 0
    %4040 = vmatprep.subr.mxu0 0.0
    %4041 = vmatpush1.msra.mxu0 %v4022
    %4042 = vmatprep.subr.mxu0 0.0
    %4043 = vmatpush1.msra.mxu0 %v4023
    %4044 = vmatprep.subr.mxu0 0.0
    %4045 = vmatpush1.msra.mxu0 %v4024
    %4046 = vmatprep.subr.mxu0 0.0
    %4047 = vmatpush1.msra.mxu0 %v4025
    %4048 = vmatprep.subr.mxu0 0.0
    %4049 = vmatpush1.msra.mxu0 %v4026
    %4050 = vmatprep.subr.mxu0 0.0
    %4051 = vmatpush1.msra.mxu0 %v4027
    %4052 = vmatprep.subr.mxu0 0.0
    %4053 = vmatpush1.msra.mxu0 %v4028
    %4054 = vmatprep.subr.mxu0 0.0
    %4055 = vmatpush1.msra.mxu0 %v4029
    %4056 = vmatprep.subr.mxu0 0.0
    %4057 = vmatpush1.msra.mxu0 0.0
    %4058 = vmatprep.subr.mxu0 0.0
    %4059 = vmatpush1.msra.mxu0 0.0
    %4060 = vmatprep.subr.mxu0 0.0
    %4061 = vmatpush1.msra.mxu0 0.0
    %4062 = vmatprep.subr.mxu0 0.0
    %4063 = vmatpush1.msra.mxu0 0.0
    %4064 = vmatprep.subr.mxu0 0.0
    %4065 = vmatpush1.msra.mxu0 0.0
    %4066 = vmatprep.subr.mxu0 0.0
    %4067 = vmatpush1.msra.mxu0 0.0
    %4068 = vmatprep.subr.mxu0 0.0
    %4069 = vmatpush1.msra.mxu0 0.0
    %4070 = vmatprep.subr.mxu0 0.0
    %4071 = vmatpush1.msra.mxu0 0.0
    %4072 = vmatprep.subr.mxu0 0.0
    %4073 = vmatpush1.msra.mxu0 0.0
    %4074 = vmatprep.subr.mxu0 0.0
    %4075 = vmatpush1.msra.mxu0 0.0
    %4076 = vmatprep.subr.mxu0 0.0
    %4077 = vmatpush1.msra.mxu0 0.0
    %4078 = vmatprep.subr.mxu0 0.0
    %4079 = vmatpush1.msra.mxu0 0.0
    %4080 = vmatprep.subr.mxu0 0.0
    %4081 = vmatpush1.msra.mxu0 0.0
    %4082 = vmatprep.subr.mxu0 0.0
    %4083 = vmatpush1.msra.mxu0 0.0
    %4084 = vmatprep.subr.mxu0 0.0
    %4085 = vmatpush1.msra.mxu0 0.0
    %4086 = vmatprep.subr.mxu0 0.0
    %4087 = vmatpush1.msra.mxu0 0.0
    %4088 = vmatprep.subr.mxu0 0.0
    %4089 = vmatpush1.msra.mxu0 0.0
    %4090 = vmatprep.subr.mxu0 0.0
    %4091 = vmatpush1.msra.mxu0 0.0
    %4092 = vmatprep.subr.mxu0 0.0
    %4093 = vmatpush1.msra.mxu0 0.0
    %4094 = vmatprep.subr.mxu0 0.0
    %4095 = vmatpush1.msra.mxu0 0.0
    %4096 = vmatprep.subr.mxu0 0.0
    %4097 = vmatpush1.msra.mxu0 0.0
    %4098 = vmatprep.subr.mxu0 0.0
    %4099 = vmatpush1.msra.mxu0 0.0
    %4100 = vmatprep.subr.mxu0 0.0
    %4101 = vmatpush1.msra.mxu0 0.0
    %4102 = vmatprep.subr.mxu0 0.0
    %4103 = vmatpush1.msra.mxu0 0.0
    %4104 = vmatprep.mubr.f32.mxu0 0.0
    %4105 = vmatmul.mubr.f32.gmra.mrb[0].mxu0 %v4038
    %v4106 = vpop.f32.mrb[0].mxu0
    %v4107 = vadd.f32 %v4035, %v4106
    %v4108 = vpop.f32.mrb[0].mxu0
    %4109 = vdwg.mxu0
    %v4110 = vtanh.pop %v4107
    %v4112 = vrot.slane %v4110, 2
    %4113 = vrot.lane.b32.xlu0 %v4112, 32
    %v4114 = vpop.permute.xlu0 %4113
    %v4116 = vsel %vm213, %v4110, %v4114
    %vm4117 = vcmask 517120
    %4118 = vst.msk [vmem:[#allocation25] sm:$0x3] %vm4117, %v4116
    // Predicated region
    $region122: #{encoder_forward.1} parent=1 // pred_check
      _
    $region123: #{encoder_forward.1} parent=1 // pred_check_branch
      %4120 = sbr.rel (0) target = $region125
    $region124: #{encoder_forward.1} parent=1 // pred_region
      _
    $region125: #{encoder_forward.1} parent=1 // pred_fallthru
      _
    // Predicated region
    $region126: #{encoder_forward.1} parent=1 // pred_check
      _
    $region127: #{encoder_forward.1} parent=1 // pred_check_branch
      %4122 = sbr.rel (0) target = $region129
    $region128: #{encoder_forward.1} parent=1 // pred_region
      %s4124 = ssub.s32 32, 32
      %4125 = vsyncadd [#allocation9], %s4124
      %s4127 = sshll.u32 [#allocation25], 4
      %s4128 = int_to_ptr.vmem [resolvable:$true] %s4127
      %4130 = dma.vmem_to_hbm [thread:$0]  %s4128, 32, %s20, [#allocation9]
    $region129: #{encoder_forward.1} parent=1 // pred_fallthru
      _
    // Predicated region
    $region130: #{encoder_forward.1} parent=1 // pred_check
      _
    $region131: #{encoder_forward.1} parent=1 // pred_check_branch
      %4132 = sbr.rel (0) target = $region133
    $region132: #{encoder_forward.1} parent=1 // pred_region
      _
    $region133: #{encoder_forward.1} parent=1 // pred_fallthru
      _
    // Predicated region
    $region134: #{encoder_forward.1} parent=1 // pred_check
      _
    $region135: #{encoder_forward.1} parent=1 // pred_check_branch
      %4134 = sbr.rel (0) target = $region137
    $region136: #{encoder_forward.1} parent=1 // pred_region
      %4135 = dma.done [#allocation9], 32
    $region137: #{encoder_forward.1} parent=1 // pred_fallthru
      _
    %4136 = vsyncpa [#allocation8], 1
    %4137 = vsyncpa [#allocation11], 1
    %4138 = vsyncpa [#allocation14], 1
    %4139 = vsyncpa [#allocation17], 1
    %4140 = vsyncpa [#allocation20], 1
    %4141 = vsyncpa [#allocation23], 1
    %4142 = vsyncpa [#allocation9], 1

</llo_original>
